<compile_context>
chip_gen: v6e
topology: v6e:2x2x1
jax: 0.10.0
libtpu: 0.0.40
codegen_flags: <defaults>
</compile_context>

<pallas_src>
import functools
import math

import jax
import jax.numpy as jnp
from jax import lax
from jax.experimental import pallas as pl
from jax.experimental.pallas import tpu as pltpu

EPS = 1e-5
LANE = 128


def _round_up(x, m):
    return ((x + m - 1) // m) * m


def _col_sums(x2d):
    """[sum ; sum of squares] over rows of a (pixels, channels) matrix -> (2, C)."""
    return jnp.concatenate(
        [jnp.sum(x2d, axis=0, keepdims=True),
         jnp.sum(x2d * x2d, axis=0, keepdims=True)], axis=0)


# --------------------- pass 1: conv1 (1x1) + residual conv (1x1, stride) ---------------------
def _pass1_kernel(x_ref, w1_ref, wr_ref, h1_ref, r_ref, s1_ref, sr_ref, *, stride):
    H, W, Ci = x_ref.shape
    Ho, Wo, Co = r_ref.shape
    Cw = w1_ref.shape[1]

    x = x_ref[...]

    # conv1: 1x1, no bias -> plain MXU matmul over (pixels, Cin).
    h1 = jnp.dot(x.reshape(H * W, Ci), w1_ref[...], preferred_element_type=jnp.float32)
    h1_ref[...] = h1.reshape(H, W, Cw)
    s1_ref[...] = _col_sums(h1)

    # residual branch: 1x1 strided conv, no bias (only the strided pixels are used).
    xs = x[::stride, ::stride, :].reshape(Ho * Wo, Ci)
    r = jnp.dot(xs, wr_ref[...], preferred_element_type=jnp.float32)
    r_ref[...] = r.reshape(Ho, Wo, Co)
    sr_ref[...] = _col_sums(r)


# --------------------- pass 2: bn1 + relu + conv2 (3x3, stride, pad=1) ---------------------
def _pass2_kernel(h1_ref, sc1_ref, sh1_ref, w2_ref, h2_ref, s2_ref, *, stride):
    H, W, C = h1_ref.shape
    Ho, Wo, _ = h2_ref.shape

    # bn1 folded into a per-channel affine, then relu.
    a1 = jnp.maximum(h1_ref[...] * sc1_ref[...] + sh1_ref[...], 0.0)

    # 1-pixel halo via value-level concatenation (no scratch zero-fill + overwrite).
    zrow = jnp.zeros((1, W + 2, C), jnp.float32)
    zcol = jnp.zeros((H, 1, C), jnp.float32)
    ap = jnp.concatenate(
        [zrow, jnp.concatenate([zcol, a1, zcol], axis=1), zrow], axis=0)  # (H+2, W+2, C)

    # 3x3 conv: one row window per dy, the three dx taps K-fused into a single matmul.
    acc = jnp.zeros((Ho * Wo, C), jnp.float32)
    for dy in range(3):
        rows = ap[dy:dy + (Ho - 1) * stride + 1:stride]                  # (Ho, W+2, C)
        taps = jnp.concatenate(
            [rows[:, dx:dx + (Wo - 1) * stride + 1:stride, :] for dx in range(3)],
            axis=-1).reshape(Ho * Wo, 3 * C)                             # (Ho*Wo, 3C)
        acc = acc + jnp.dot(taps, w2_ref[dy], preferred_element_type=jnp.float32)
    # NOTE: conv2's bias is intentionally NOT added -- a per-channel constant is
    # cancelled exactly by bn2's mean subtraction (training-mode BatchNorm).

    h2_ref[...] = acc.reshape(Ho, Wo, C)
    s2_ref[...] = _col_sums(acc)


# --------------------------- pass 3: bn2 + relu + conv3 (1x1) ---------------------------
def _pass3_kernel(h2_ref, sc2_ref, sh2_ref, w3_ref, h3_ref, s3_ref):
    Ho, Wo, C = h2_ref.shape
    Co = w3_ref.shape[1]

    a2 = jnp.maximum(h2_ref[...] * sc2_ref[...] + sh2_ref[...], 0.0)
    h3 = jnp.dot(a2.reshape(Ho * Wo, C), w3_ref[...], preferred_element_type=jnp.float32)
    h3_ref[...] = h3.reshape(Ho, Wo, Co)
    s3_ref[...] = _col_sums(h3)


# --------------------------- pass 4: bn3 + bn_res + add + relu ---------------------------
def _pass4_kernel(h3_ref, r_ref, sc3_ref, sh3_ref, scr_ref, shr_ref, o_ref):
    y = (h3_ref[...] * sc3_ref[...] + sh3_ref[...]) \
        + (r_ref[...] * scr_ref[...] + shr_ref[...])
    o_ref[...] = jnp.maximum(y, 0.0).astype(o_ref.dtype)


# ------------------------------------ wrapper helpers ------------------------------------
def _f32_bytes(*shapes):
    return sum(math.prod(s) * 4 for s in shapes)


def _compiler_params(block_bytes, temp_bytes):
    # double-buffered blocks + in-kernel temporaries + headroom, kept under v7x's 64 MiB.
    need = 2 * block_bytes + temp_bytes + (4 << 20)
    return pltpu.CompilerParams(
        dimension_semantics=("parallel",),
        vmem_limit_bytes=int(min(max(need, 16 << 20), 64 << 20)),
    )


def _bn_affine(partials, gamma, beta, count, c_pad):
    """Reduce per-image (sum, sumsq) partials and fold BN into per-channel scale/shift."""
    tot = jnp.sum(partials.astype(jnp.float32), axis=0)        # (2, Cp)
    mean = tot[0] / count
    var = jnp.maximum(tot[1] / count - mean * mean, 0.0)        # biased variance
    rstd = lax.rsqrt(var + EPS)
    g = jnp.pad(gamma.astype(jnp.float32), (0, c_pad - gamma.shape[0]))
    b = jnp.pad(beta.astype(jnp.float32), (0, c_pad - beta.shape[0]))
    scale = g * rstd
    shift = b - mean * scale
    return scale.reshape(1, c_pad), shift.reshape(1, c_pad)


@functools.partial(jax.jit, static_argnames=("stride",))
def bottleneck_resblock(x_nchw, p, *, stride=1):
    """Pallas implementation of BottleNeckResBlock.forward (input/output NCHW)."""
    N, Cin, H, W = x_nchw.shape
    width = p["w1"].shape[0]
    Cout = p["w3"].shape[0]
    Ho = (H + 2 - 3) // stride + 1
    Wo = (W + 2 - 3) // stride + 1

    f32 = jnp.float32
    Ci_p = _round_up(Cin, LANE)
    Wd_p = _round_up(width, LANE)
    Co_p = _round_up(Cout, LANE)

    # NCHW -> NHWC, zero-pad channels to a lane multiple (lane-dense stores / MXU fill).
    x = jnp.transpose(x_nchw.astype(f32), (0, 2, 3, 1))
    x = jnp.pad(x, ((0, 0), (0, 0), (0, 0), (0, Ci_p - Cin)))

    # torch OIHW conv weights -> matmul layouts (zero-padded to lane multiples).
    w1 = jnp.pad(jnp.transpose(p["w1"][:, :, 0, 0]).astype(f32),
                 ((0, Ci_p - Cin), (0, Wd_p - width)))                    # (Ci_p, Wd_p)
    w3 = jnp.pad(jnp.transpose(p["w3"][:, :, 0, 0]).astype(f32),
                 ((0, Wd_p - width), (0, Co_p - Cout)))                   # (Wd_p, Co_p)
    wr = jnp.pad(jnp.transpose(p["wr"][:, :, 0, 0]).astype(f32),
                 ((0, Ci_p - Cin), (0, Co_p - Cout)))                     # (Ci_p, Co_p)
    # conv2: (out,in,kh,kw) -> per-dy K-fused layout (3, 3*Wd_p, Wd_p), rows grouped by dx.
    w2 = jnp.transpose(p["w2"].astype(f32), (2, 3, 1, 0))                 # (3, 3, in, out)
    w2 = jnp.pad(w2, ((0, 0), (0, 0), (0, Wd_p - width), (0, Wd_p - width)))
    w2 = w2.reshape(3, 3 * Wd_p, Wd_p)

    # BlockSpec factories.
    def img(h, w, c):
        return pl.BlockSpec((None, h, w, c), lambda n: (n, 0, 0, 0))

    def vec(c):
        return pl.BlockSpec((1, c), lambda n: (0, 0))

    def stats(c):
        return pl.BlockSpec((None, 2, c), lambda n: (n, 0, 0))

    def fixed(shape):
        nd = len(shape)
        return pl.BlockSpec(shape, lambda n: (0,) * nd)

    # ---- pass 1: conv1 + residual conv + partial BN stats ----
    h1, r, s1, sr = pl.pallas_call(
        functools.partial(_pass1_kernel, stride=stride),
        grid=(N,),
        in_specs=[img(H, W, Ci_p), fixed((Ci_p, Wd_p)), fixed((Ci_p, Co_p))],
        out_specs=[img(H, W, Wd_p), img(Ho, Wo, Co_p), stats(Wd_p), stats(Co_p)],
        out_shape=[
            jax.ShapeDtypeStruct((N, H, W, Wd_p), f32),
            jax.ShapeDtypeStruct((N, Ho, Wo, Co_p), f32),
            jax.ShapeDtypeStruct((N, 2, Wd_p), f32),
            jax.ShapeDtypeStruct((N, 2, Co_p), f32),
        ],
        compiler_params=_compiler_params(
            _f32_bytes((H, W, Ci_p), (Ci_p, Wd_p), (Ci_p, Co_p),
                       (H, W, Wd_p), (Ho, Wo, Co_p)),
            _f32_bytes((H * W, Ci_p), (H * W, Wd_p), (Ho * Wo, Co_p))),
    )(x, w1, wr)

    sc1, sh1 = _bn_affine(s1, p["g1"], p["b1"], N * H * W, Wd_p)
    scr, shr = _bn_affine(sr, p["gr"], p["br"], N * Ho * Wo, Co_p)

    # ---- pass 2: bn1 + relu + conv2 + partial BN stats ----
    h2, s2 = pl.pallas_call(
        functools.partial(_pass2_kernel, stride=stride),
        grid=(N,),
        in_specs=[img(H, W, Wd_p), vec(Wd_p), vec(Wd_p), fixed((3, 3 * Wd_p, Wd_p))],
        out_specs=[img(Ho, Wo, Wd_p), stats(Wd_p)],
        out_shape=[
            jax.ShapeDtypeStruct((N, Ho, Wo, Wd_p), f32),
            jax.ShapeDtypeStruct((N, 2, Wd_p), f32),
        ],
        compiler_params=_compiler_params(
            _f32_bytes((H, W, Wd_p), (3, 3 * Wd_p, Wd_p), (Ho, Wo, Wd_p)),
            _f32_bytes((H + 2, W + 2, Wd_p), (Ho * Wo, 3 * Wd_p), (Ho * Wo, Wd_p))),
    )(h1, sc1, sh1, w2)

    sc2, sh2 = _bn_affine(s2, p["g2"], p["b2"], N * Ho * Wo, Wd_p)

    # ---- pass 3: bn2 + relu + conv3 + partial BN stats ----
    h3, s3 = pl.pallas_call(
        _pass3_kernel,
        grid=(N,),
        in_specs=[img(Ho, Wo, Wd_p), vec(Wd_p), vec(Wd_p), fixed((Wd_p, Co_p))],
        out_specs=[img(Ho, Wo, Co_p), stats(Co_p)],
        out_shape=[
            jax.ShapeDtypeStruct((N, Ho, Wo, Co_p), f32),
            jax.ShapeDtypeStruct((N, 2, Co_p), f32),
        ],
        compiler_params=_compiler_params(
            _f32_bytes((Ho, Wo, Wd_p), (Wd_p, Co_p), (Ho, Wo, Co_p)),
            _f32_bytes((Ho * Wo, Wd_p), (Ho * Wo, Co_p))),
    )(h2, sc2, sh2, w3)

    sc3, sh3 = _bn_affine(s3, p["g3"], p["b3"], N * Ho * Wo, Co_p)

    # ---- pass 4: bn3 + bn_res + add + relu ----
    out = pl.pallas_call(
        _pass4_kernel,
        grid=(N,),
        in_specs=[img(Ho, Wo, Co_p), img(Ho, Wo, Co_p),
                  vec(Co_p), vec(Co_p), vec(Co_p), vec(Co_p)],
        out_specs=img(Ho, Wo, Co_p),
        out_shape=jax.ShapeDtypeStruct((N, Ho, Wo, Co_p), x_nchw.dtype),
        compiler_params=_compiler_params(
            _f32_bytes((Ho, Wo, Co_p), (Ho, Wo, Co_p), (Ho, Wo, Co_p)),
            _f32_bytes((Ho, Wo, Co_p))),
    )(h3, r, sc3, sh3, scr, shr)

    # Drop channel padding, NHWC -> NCHW (PyTorch convention).
    return jnp.transpose(out[..., :Cout], (0, 3, 1, 2))


# ---------------- pure-JAX reference (for verification only) ----------------
def reference_forward(x_nchw, p, *, stride=1):
    def conv(x, w, b=None, stride=1, padding=0):
        out = lax.conv_general_dilated(
            x, w, (stride, stride), [(padding, padding), (padding, padding)],
            dimension_numbers=("NCHW", "OIHW", "NCHW"))
        if b is not None:
            out = out + b[None, :, None, None]
        return out

    def bn(x, g, b):
        mean = jnp.mean(x, axis=(0, 2, 3), keepdims=True)
        var = jnp.mean((x - mean) ** 2, axis=(0, 2, 3), keepdims=True)
        return ((x - mean) * lax.rsqrt(var + EPS)
                * g[None, :, None, None] + b[None, :, None, None])

    relu = lambda t: jnp.maximum(t, 0.0)
    out = relu(bn(conv(x_nchw, p["w1"]), p["g1"], p["b1"]))
    out = relu(bn(conv(out, p["w2"], p["c2b"], stride=stride, padding=1),
                  p["g2"], p["b2"]))
    out = bn(conv(out, p["w3"]), p["g3"], p["b3"])
    res = bn(conv(x_nchw, p["wr"], stride=stride), p["gr"], p["br"])
    return relu(out + res)


def init_params(key, in_channels, out_channels, width_factor=1, base_width=64):
    """Deterministic synthetic parameters with the same shapes as the torch module."""
    expansion = 4
    width = int(out_channels * base_width / 64.0) * width_factor
    cout = out_channels * expansion
    k1, k2, k3, k4, k5 = jax.random.split(key, 5)
    f32 = jnp.float32
    return {
        # conv weights in torch OIHW layout
        "w1": 0.2 * jax.random.normal(k1, (width, in_channels, 1, 1), f32),
        "w2": 0.2 * jax.random.normal(k2, (width, width, 3, 3), f32),
        "c2b": 0.1 * jax.random.normal(k3, (width,), f32),   # conv2 bias (bias=True)
        "w3": 0.2 * jax.random.normal(k4, (cout, width, 1, 1), f32),
        "wr": 0.2 * jax.random.normal(k5, (cout, in_channels, 1, 1), f32),
        # BatchNorm affine params (PyTorch default init: weight=1, bias=0)
        "g1": jnp.ones((width,), f32), "b1": jnp.zeros((width,), f32),
        "g2": jnp.ones((width,), f32), "b2": jnp.zeros((width,), f32),
        "g3": jnp.ones((cout,), f32), "b3": jnp.zeros((cout,), f32),
        "gr": jnp.ones((cout,), f32), "br": jnp.zeros((cout,), f32),
    }


if __name__ == "__main__":
    key = jax.random.PRNGKey(0)
    kx, kp = jax.random.split(key)

    N, Cin, H, W = 2, 4, 16, 16
    out_channels = 4   # -> width = 4, output channels = out_channels * 4 = 16
    stride = 1

    x = jax.random.normal(kx, (N, Cin, H, W), jnp.float32)
    params = init_params(kp, Cin, out_channels)

    out = jax.block_until_ready(bottleneck_resblock(x, params, stride=stride))
    ref = jax.block_until_ready(reference_forward(x, params, stride=stride))

    assert out.shape == ref.shape == (N, out_channels * 4, H, W)
    assert jnp.allclose(out, ref, atol=2e-3, rtol=2e-3), (
        f"max abs diff {jnp.max(jnp.abs(out - ref))}")

    print("KERNEL_OK")
</pallas_src>

<mosaic_0001>
module attributes {stable_mosaic.version = 11 : i64} {
  func.func @_pass2_kernel(%arg0: i32, %arg1: memref<1x16x16x128xf32, #tpu.memory_space<vmem>>, %arg2: memref<1x128xf32, #tpu.memory_space<vmem>>, %arg3: memref<1x128xf32, #tpu.memory_space<vmem>>, %arg4: memref<3x384x128xf32, #tpu.memory_space<vmem>>, %arg5: memref<1x16x16x128xf32, #tpu.memory_space<vmem>>, %arg6: memref<1x2x128xf32, #tpu.memory_space<vmem>>) attributes {dimension_semantics = [#tpu.dimension_semantics<parallel>], iteration_bounds = array<i64: 2>, scalar_prefetch = 0 : i64, scratch_operands = 0 : i64, tpu.core_type = #tpu.core_type<tc>, window_params = [{transform_indices = @transform_0, window_bounds = array<i64: 1, 16, 16, 128>}, {pipeline_mode = #tpu.pipeline_mode<synchronous>, transform_indices = @transform_1, window_bounds = array<i64: 1, 128>}, {pipeline_mode = #tpu.pipeline_mode<synchronous>, transform_indices = @transform_2, window_bounds = array<i64: 1, 128>}, {pipeline_mode = #tpu.pipeline_mode<synchronous>, transform_indices = @transform_3, window_bounds = array<i64: 3, 384, 128>}, {transform_indices = @transform_4, window_bounds = array<i64: 1, 16, 16, 128>}, {transform_indices = @transform_5, window_bounds = array<i64: 1, 2, 128>}]} {
    %c0 = arith.constant 0 : index
    %c0_0 = arith.constant 0 : index
    %c0_1 = arith.constant 0 : index
    %c0_2 = arith.constant 0 : index
    %0 = vector.load %arg1[%c0, %c0_0, %c0_1, %c0_2] : memref<1x16x16x128xf32, #tpu.memory_space<vmem>>, vector<1x16x16x128xf32>
    %1 = vector.shape_cast %0 : vector<1x16x16x128xf32> to vector<16x16x128xf32>
    %c0_3 = arith.constant 0 : index
    %c0_4 = arith.constant 0 : index
    %2 = vector.load %arg2[%c0_3, %c0_4] : memref<1x128xf32, #tpu.memory_space<vmem>>, vector<1x128xf32>
    %3 = vector.shape_cast %2 : vector<1x128xf32> to vector<1x1x128xf32>
    %4 = vector.broadcast %3 : vector<1x1x128xf32> to vector<16x16x128xf32>
    %5 = arith.mulf %1, %4 : vector<16x16x128xf32>
    %c0_5 = arith.constant 0 : index
    %c0_6 = arith.constant 0 : index
    %6 = vector.load %arg3[%c0_5, %c0_6] : memref<1x128xf32, #tpu.memory_space<vmem>>, vector<1x128xf32>
    %7 = vector.shape_cast %6 : vector<1x128xf32> to vector<1x1x128xf32>
    %8 = vector.broadcast %7 : vector<1x1x128xf32> to vector<16x16x128xf32>
    %9 = arith.addf %5, %8 : vector<16x16x128xf32>
    %cst = arith.constant 0.000000e+00 : f32
    %10 = vector.broadcast %cst : f32 to vector<16x16x128xf32>
    %11 = arith.maximumf %9, %10 : vector<16x16x128xf32>
    %cst_7 = arith.constant 0.000000e+00 : f32
    %12 = vector.broadcast %cst_7 : f32 to vector<1x18x128xf32>
    %cst_8 = arith.constant 0.000000e+00 : f32
    %13 = vector.broadcast %cst_8 : f32 to vector<16x1x128xf32>
    %14 = tpu.concatenate %13, %11, %13 in 1 : vector<16x1x128xf32>, vector<16x16x128xf32>, vector<16x1x128xf32> -> vector<16x18x128xf32>
    %15 = tpu.concatenate %12, %14, %12 in 0 : vector<1x18x128xf32>, vector<16x18x128xf32>, vector<1x18x128xf32> -> vector<18x18x128xf32>
    %cst_9 = arith.constant 0.000000e+00 : f32
    %16 = vector.broadcast %cst_9 : f32 to vector<256x128xf32>
    %17 = vector.extract_strided_slice %15 {offsets = [0, 0, 0], sizes = [16, 18, 128], strides = [1, 1, 1]} : vector<18x18x128xf32> to vector<16x18x128xf32>
    %18 = vector.extract_strided_slice %17 {offsets = [0, 0, 0], sizes = [16, 16, 128], strides = [1, 1, 1]} : vector<16x18x128xf32> to vector<16x16x128xf32>
    %19 = vector.extract_strided_slice %17 {offsets = [0, 1, 0], sizes = [16, 16, 128], strides = [1, 1, 1]} : vector<16x18x128xf32> to vector<16x16x128xf32>
    %20 = vector.extract_strided_slice %17 {offsets = [0, 2, 0], sizes = [16, 16, 128], strides = [1, 1, 1]} : vector<16x18x128xf32> to vector<16x16x128xf32>
    %21 = tpu.concatenate %18, %19, %20 in 2 : vector<16x16x128xf32>, vector<16x16x128xf32>, vector<16x16x128xf32> -> vector<16x16x384xf32>
    %22 = vector.shape_cast %21 : vector<16x16x384xf32> to vector<256x384xf32>
    %c0_10 = arith.constant 0 : index
    %c0_11 = arith.constant 0 : index
    %c0_12 = arith.constant 0 : index
    %23 = vector.load %arg4[%c0_10, %c0_11, %c0_12] : memref<3x384x128xf32, #tpu.memory_space<vmem>>, vector<1x384x128xf32>
    %24 = vector.shape_cast %23 : vector<1x384x128xf32> to vector<384x128xf32>
    %cst_13 = arith.constant dense<0.000000e+00> : vector<256x128xf32>
    %25 = tpu.matmul %22, %24, %cst_13 {dimension_numbers = #tpu.dot_dimension_numbers<[1], [0], [0], [1], [0, 0, 1, 1], [], []>} : vector<256x384xf32>, vector<384x128xf32>, vector<256x128xf32> -> vector<256x128xf32>
    %26 = arith.addf %16, %25 : vector<256x128xf32>
    %27 = vector.extract_strided_slice %15 {offsets = [1, 0, 0], sizes = [16, 18, 128], strides = [1, 1, 1]} : vector<18x18x128xf32> to vector<16x18x128xf32>
    %28 = vector.extract_strided_slice %27 {offsets = [0, 0, 0], sizes = [16, 16, 128], strides = [1, 1, 1]} : vector<16x18x128xf32> to vector<16x16x128xf32>
    %29 = vector.extract_strided_slice %27 {offsets = [0, 1, 0], sizes = [16, 16, 128], strides = [1, 1, 1]} : vector<16x18x128xf32> to vector<16x16x128xf32>
    %30 = vector.extract_strided_slice %27 {offsets = [0, 2, 0], sizes = [16, 16, 128], strides = [1, 1, 1]} : vector<16x18x128xf32> to vector<16x16x128xf32>
    %31 = tpu.concatenate %28, %29, %30 in 2 : vector<16x16x128xf32>, vector<16x16x128xf32>, vector<16x16x128xf32> -> vector<16x16x384xf32>
    %32 = vector.shape_cast %31 : vector<16x16x384xf32> to vector<256x384xf32>
    %c1 = arith.constant 1 : index
    %c0_14 = arith.constant 0 : index
    %c0_15 = arith.constant 0 : index
    %33 = vector.load %arg4[%c1, %c0_14, %c0_15] : memref<3x384x128xf32, #tpu.memory_space<vmem>>, vector<1x384x128xf32>
    %34 = vector.shape_cast %33 : vector<1x384x128xf32> to vector<384x128xf32>
    %cst_16 = arith.constant dense<0.000000e+00> : vector<256x128xf32>
    %35 = tpu.matmul %32, %34, %cst_16 {dimension_numbers = #tpu.dot_dimension_numbers<[1], [0], [0], [1], [0, 0, 1, 1], [], []>} : vector<256x384xf32>, vector<384x128xf32>, vector<256x128xf32> -> vector<256x128xf32>
    %36 = arith.addf %26, %35 : vector<256x128xf32>
    %37 = vector.extract_strided_slice %15 {offsets = [2, 0, 0], sizes = [16, 18, 128], strides = [1, 1, 1]} : vector<18x18x128xf32> to vector<16x18x128xf32>
    %38 = vector.extract_strided_slice %37 {offsets = [0, 0, 0], sizes = [16, 16, 128], strides = [1, 1, 1]} : vector<16x18x128xf32> to vector<16x16x128xf32>
    %39 = vector.extract_strided_slice %37 {offsets = [0, 1, 0], sizes = [16, 16, 128], strides = [1, 1, 1]} : vector<16x18x128xf32> to vector<16x16x128xf32>
    %40 = vector.extract_strided_slice %37 {offsets = [0, 2, 0], sizes = [16, 16, 128], strides = [1, 1, 1]} : vector<16x18x128xf32> to vector<16x16x128xf32>
    %41 = tpu.concatenate %38, %39, %40 in 2 : vector<16x16x128xf32>, vector<16x16x128xf32>, vector<16x16x128xf32> -> vector<16x16x384xf32>
    %42 = vector.shape_cast %41 : vector<16x16x384xf32> to vector<256x384xf32>
    %c2 = arith.constant 2 : index
    %c0_17 = arith.constant 0 : index
    %c0_18 = arith.constant 0 : index
    %43 = vector.load %arg4[%c2, %c0_17, %c0_18] : memref<3x384x128xf32, #tpu.memory_space<vmem>>, vector<1x384x128xf32>
    %44 = vector.shape_cast %43 : vector<1x384x128xf32> to vector<384x128xf32>
    %cst_19 = arith.constant dense<0.000000e+00> : vector<256x128xf32>
    %45 = tpu.matmul %42, %44, %cst_19 {dimension_numbers = #tpu.dot_dimension_numbers<[1], [0], [0], [1], [0, 0, 1, 1], [], []>} : vector<256x384xf32>, vector<384x128xf32>, vector<256x128xf32> -> vector<256x128xf32>
    %46 = arith.addf %36, %45 : vector<256x128xf32>
    %47 = vector.shape_cast %46 : vector<256x128xf32> to vector<16x16x128xf32>
    %c0_20 = arith.constant 0 : index
    %c0_21 = arith.constant 0 : index
    %c0_22 = arith.constant 0 : index
    %c0_23 = arith.constant 0 : index
    %48 = vector.load %arg5[%c0_20, %c0_21, %c0_22, %c0_23] : memref<1x16x16x128xf32, #tpu.memory_space<vmem>>, vector<1x16x16x128xf32>
    %49 = vector.shape_cast %48 : vector<1x16x16x128xf32> to vector<16x16x128xf32>
    %50 = vector.shape_cast %47 : vector<16x16x128xf32> to vector<1x16x16x128xf32>
    tpu.vector_store %arg5[%c0_20, %c0_21, %c0_22, %c0_23], %50 {strides = array<i32>} : memref<1x16x16x128xf32, #tpu.memory_space<vmem>>, vector<1x16x16x128xf32>,
    %cst_24 = arith.constant dense<0.000000e+00> : vector<128xf32>
    %51 = vector.multi_reduction <add>, %46, %cst_24 [0] : vector<256x128xf32> to vector<128xf32>
    %52 = vector.shape_cast %51 : vector<128xf32> to vector<1x128xf32>
    %53 = arith.mulf %46, %46 : vector<256x128xf32>
    %cst_25 = arith.constant dense<0.000000e+00> : vector<128xf32>
    %54 = vector.multi_reduction <add>, %53, %cst_25 [0] : vector<256x128xf32> to vector<128xf32>
    %55 = vector.shape_cast %54 : vector<128xf32> to vector<1x128xf32>
    %56 = tpu.concatenate %52, %55 in 0 : vector<1x128xf32>, vector<1x128xf32> -> vector<2x128xf32>
    %c0_26 = arith.constant 0 : index
    %c0_27 = arith.constant 0 : index
    %c0_28 = arith.constant 0 : index
    %57 = vector.load %arg6[%c0_26, %c0_27, %c0_28] : memref<1x2x128xf32, #tpu.memory_space<vmem>>, vector<1x2x128xf32>
    %58 = vector.shape_cast %57 : vector<1x2x128xf32> to vector<2x128xf32>
    %59 = vector.shape_cast %56 : vector<2x128xf32> to vector<1x2x128xf32>
    tpu.vector_store %arg6[%c0_26, %c0_27, %c0_28], %59 {strides = array<i32>} : memref<1x2x128xf32, #tpu.memory_space<vmem>>, vector<1x2x128xf32>,
    return
  }
  func.func @transform_0(%arg0: i32) -> (i32, i32, i32, i32) {
    %c0_i32 = arith.constant 0 : i32
    %c0_i32_0 = arith.constant 0 : i32
    %c0_i32_1 = arith.constant 0 : i32
    %c0_i32_2 = arith.constant 0 : i32
    return %arg0, %c0_i32, %c0_i32_0, %c0_i32_1 : i32, i32, i32, i32
  }
  func.func @transform_1(%arg0: i32) -> (i32, i32) {
    %c0_i32 = arith.constant 0 : i32
    %c0_i32_0 = arith.constant 0 : i32
    %c0_i32_1 = arith.constant 0 : i32
    return %c0_i32, %c0_i32_0 : i32, i32
  }
  func.func @transform_2(%arg0: i32) -> (i32, i32) {
    %c0_i32 = arith.constant 0 : i32
    %c0_i32_0 = arith.constant 0 : i32
    %c0_i32_1 = arith.constant 0 : i32
    return %c0_i32, %c0_i32_0 : i32, i32
  }
  func.func @transform_3(%arg0: i32) -> (i32, i32, i32) {
    %c0_i32 = arith.constant 0 : i32
    %c0_i32_0 = arith.constant 0 : i32
    %c0_i32_1 = arith.constant 0 : i32
    %c0_i32_2 = arith.constant 0 : i32
    return %c0_i32, %c0_i32_0, %c0_i32_1 : i32, i32, i32
  }
  func.func @transform_4(%arg0: i32) -> (i32, i32, i32, i32) {
    %c0_i32 = arith.constant 0 : i32
    %c0_i32_0 = arith.constant 0 : i32
    %c0_i32_1 = arith.constant 0 : i32
    %c0_i32_2 = arith.constant 0 : i32
    return %arg0, %c0_i32, %c0_i32_0, %c0_i32_1 : i32, i32, i32, i32
  }
  func.func @transform_5(%arg0: i32) -> (i32, i32, i32) {
    %c0_i32 = arith.constant 0 : i32
    %c0_i32_0 = arith.constant 0 : i32
    %c0_i32_1 = arith.constant 0 : i32
    return %arg0, %c0_i32, %c0_i32_0 : i32, i32, i32
  }
}

module attributes {stable_mosaic.version = 11 : i64} {
  func.func @_pass1_kernel(%arg0: i32, %arg1: memref<1x16x16x128xf32, #tpu.memory_space<vmem>>, %arg2: memref<128x128xf32, #tpu.memory_space<vmem>>, %arg3: memref<128x128xf32, #tpu.memory_space<vmem>>, %arg4: memref<1x16x16x128xf32, #tpu.memory_space<vmem>>, %arg5: memref<1x16x16x128xf32, #tpu.memory_space<vmem>>, %arg6: memref<1x2x128xf32, #tpu.memory_space<vmem>>, %arg7: memref<1x2x128xf32, #tpu.memory_space<vmem>>) attributes {dimension_semantics = [#tpu.dimension_semantics<parallel>], iteration_bounds = array<i64: 2>, scalar_prefetch = 0 : i64, scratch_operands = 0 : i64, tpu.core_type = #tpu.core_type<tc>, window_params = [{transform_indices = @transform_0, window_bounds = array<i64: 1, 16, 16, 128>}, {pipeline_mode = #tpu.pipeline_mode<synchronous>, transform_indices = @transform_1, window_bounds = array<i64: 128, 128>}, {pipeline_mode = #tpu.pipeline_mode<synchronous>, transform_indices = @transform_2, window_bounds = array<i64: 128, 128>}, {transform_indices = @transform_3, window_bounds = array<i64: 1, 16, 16, 128>}, {transform_indices = @transform_4, window_bounds = array<i64: 1, 16, 16, 128>}, {transform_indices = @transform_5, window_bounds = array<i64: 1, 2, 128>}, {transform_indices = @transform_6, window_bounds = array<i64: 1, 2, 128>}]} {
    %c0 = arith.constant 0 : index
    %c0_0 = arith.constant 0 : index
    %c0_1 = arith.constant 0 : index
    %c0_2 = arith.constant 0 : index
    %0 = vector.load %arg1[%c0, %c0_0, %c0_1, %c0_2] : memref<1x16x16x128xf32, #tpu.memory_space<vmem>>, vector<1x16x16x128xf32>
    %1 = vector.shape_cast %0 : vector<1x16x16x128xf32> to vector<16x16x128xf32>
    %2 = vector.shape_cast %1 : vector<16x16x128xf32> to vector<256x128xf32>
    %c0_3 = arith.constant 0 : index
    %c0_4 = arith.constant 0 : index
    %3 = vector.load %arg2[%c0_3, %c0_4] : memref<128x128xf32, #tpu.memory_space<vmem>>, vector<128x128xf32>
    %cst = arith.constant dense<0.000000e+00> : vector<256x128xf32>
    %4 = tpu.matmul %2, %3, %cst {dimension_numbers = #tpu.dot_dimension_numbers<[1], [0], [0], [1], [0, 0, 1, 1], [], []>} : vector<256x128xf32>, vector<128x128xf32>, vector<256x128xf32> -> vector<256x128xf32>
    %5 = vector.shape_cast %4 : vector<256x128xf32> to vector<16x16x128xf32>
    %c0_5 = arith.constant 0 : index
    %c0_6 = arith.constant 0 : index
    %c0_7 = arith.constant 0 : index
    %c0_8 = arith.constant 0 : index
    %6 = vector.load %arg4[%c0_5, %c0_6, %c0_7, %c0_8] : memref<1x16x16x128xf32, #tpu.memory_space<vmem>>, vector<1x16x16x128xf32>
    %7 = vector.shape_cast %6 : vector<1x16x16x128xf32> to vector<16x16x128xf32>
    %8 = vector.shape_cast %5 : vector<16x16x128xf32> to vector<1x16x16x128xf32>
    tpu.vector_store %arg4[%c0_5, %c0_6, %c0_7, %c0_8], %8 {strides = array<i32>} : memref<1x16x16x128xf32, #tpu.memory_space<vmem>>, vector<1x16x16x128xf32>,
    %cst_9 = arith.constant dense<0.000000e+00> : vector<128xf32>
    %9 = vector.multi_reduction <add>, %4, %cst_9 [0] : vector<256x128xf32> to vector<128xf32>
    %10 = vector.shape_cast %9 : vector<128xf32> to vector<1x128xf32>
    %11 = arith.mulf %4, %4 : vector<256x128xf32>
    %cst_10 = arith.constant dense<0.000000e+00> : vector<128xf32>
    %12 = vector.multi_reduction <add>, %11, %cst_10 [0] : vector<256x128xf32> to vector<128xf32>
    %13 = vector.shape_cast %12 : vector<128xf32> to vector<1x128xf32>
    %14 = tpu.concatenate %10, %13 in 0 : vector<1x128xf32>, vector<1x128xf32> -> vector<2x128xf32>
    %c0_11 = arith.constant 0 : index
    %c0_12 = arith.constant 0 : index
    %c0_13 = arith.constant 0 : index
    %15 = vector.load %arg6[%c0_11, %c0_12, %c0_13] : memref<1x2x128xf32, #tpu.memory_space<vmem>>, vector<1x2x128xf32>
    %16 = vector.shape_cast %15 : vector<1x2x128xf32> to vector<2x128xf32>
    %17 = vector.shape_cast %14 : vector<2x128xf32> to vector<1x2x128xf32>
    tpu.vector_store %arg6[%c0_11, %c0_12, %c0_13], %17 {strides = array<i32>} : memref<1x2x128xf32, #tpu.memory_space<vmem>>, vector<1x2x128xf32>,
    %18 = vector.shape_cast %1 : vector<16x16x128xf32> to vector<256x128xf32>
    %c0_14 = arith.constant 0 : index
    %c0_15 = arith.constant 0 : index
    %19 = vector.load %arg3[%c0_14, %c0_15] : memref<128x128xf32, #tpu.memory_space<vmem>>, vector<128x128xf32>
    %cst_16 = arith.constant dense<0.000000e+00> : vector<256x128xf32>
    %20 = tpu.matmul %18, %19, %cst_16 {dimension_numbers = #tpu.dot_dimension_numbers<[1], [0], [0], [1], [0, 0, 1, 1], [], []>} : vector<256x128xf32>, vector<128x128xf32>, vector<256x128xf32> -> vector<256x128xf32>
    %21 = vector.shape_cast %20 : vector<256x128xf32> to vector<16x16x128xf32>
    %c0_17 = arith.constant 0 : index
    %c0_18 = arith.constant 0 : index
    %c0_19 = arith.constant 0 : index
    %c0_20 = arith.constant 0 : index
    %22 = vector.load %arg5[%c0_17, %c0_18, %c0_19, %c0_20] : memref<1x16x16x128xf32, #tpu.memory_space<vmem>>, vector<1x16x16x128xf32>
    %23 = vector.shape_cast %22 : vector<1x16x16x128xf32> to vector<16x16x128xf32>
    %24 = vector.shape_cast %21 : vector<16x16x128xf32> to vector<1x16x16x128xf32>
    tpu.vector_store %arg5[%c0_17, %c0_18, %c0_19, %c0_20], %24 {strides = array<i32>} : memref<1x16x16x128xf32, #tpu.memory_space<vmem>>, vector<1x16x16x128xf32>,
    %cst_21 = arith.constant dense<0.000000e+00> : vector<128xf32>
    %25 = vector.multi_reduction <add>, %20, %cst_21 [0] : vector<256x128xf32> to vector<128xf32>
    %26 = vector.shape_cast %25 : vector<128xf32> to vector<1x128xf32>
    %27 = arith.mulf %20, %20 : vector<256x128xf32>
    %cst_22 = arith.constant dense<0.000000e+00> : vector<128xf32>
    %28 = vector.multi_reduction <add>, %27, %cst_22 [0] : vector<256x128xf32> to vector<128xf32>
    %29 = vector.shape_cast %28 : vector<128xf32> to vector<1x128xf32>
    %30 = tpu.concatenate %26, %29 in 0 : vector<1x128xf32>, vector<1x128xf32> -> vector<2x128xf32>
    %c0_23 = arith.constant 0 : index
    %c0_24 = arith.constant 0 : index
    %c0_25 = arith.constant 0 : index
    %31 = vector.load %arg7[%c0_23, %c0_24, %c0_25] : memref<1x2x128xf32, #tpu.memory_space<vmem>>, vector<1x2x128xf32>
    %32 = vector.shape_cast %31 : vector<1x2x128xf32> to vector<2x128xf32>
    %33 = vector.shape_cast %30 : vector<2x128xf32> to vector<1x2x128xf32>
    tpu.vector_store %arg7[%c0_23, %c0_24, %c0_25], %33 {strides = array<i32>} : memref<1x2x128xf32, #tpu.memory_space<vmem>>, vector<1x2x128xf32>,
    return
  }
  func.func @transform_0(%arg0: i32) -> (i32, i32, i32, i32) {
    %c0_i32 = arith.constant 0 : i32
    %c0_i32_0 = arith.constant 0 : i32
    %c0_i32_1 = arith.constant 0 : i32
    %c0_i32_2 = arith.constant 0 : i32
    return %arg0, %c0_i32, %c0_i32_0, %c0_i32_1 : i32, i32, i32, i32
  }
  func.func @transform_1(%arg0: i32) -> (i32, i32) {
    %c0_i32 = arith.constant 0 : i32
    %c0_i32_0 = arith.constant 0 : i32
    %c0_i32_1 = arith.constant 0 : i32
    return %c0_i32, %c0_i32_0 : i32, i32
  }
  func.func @transform_2(%arg0: i32) -> (i32, i32) {
    %c0_i32 = arith.constant 0 : i32
    %c0_i32_0 = arith.constant 0 : i32
    %c0_i32_1 = arith.constant 0 : i32
    return %c0_i32, %c0_i32_0 : i32, i32
  }
  func.func @transform_3(%arg0: i32) -> (i32, i32, i32, i32) {
    %c0_i32 = arith.constant 0 : i32
    %c0_i32_0 = arith.constant 0 : i32
    %c0_i32_1 = arith.constant 0 : i32
    %c0_i32_2 = arith.constant 0 : i32
    return %arg0, %c0_i32, %c0_i32_0, %c0_i32_1 : i32, i32, i32, i32
  }
  func.func @transform_4(%arg0: i32) -> (i32, i32, i32, i32) {
    %c0_i32 = arith.constant 0 : i32
    %c0_i32_0 = arith.constant 0 : i32
    %c0_i32_1 = arith.constant 0 : i32
    %c0_i32_2 = arith.constant 0 : i32
    return %arg0, %c0_i32, %c0_i32_0, %c0_i32_1 : i32, i32, i32, i32
  }
  func.func @transform_5(%arg0: i32) -> (i32, i32, i32) {
    %c0_i32 = arith.constant 0 : i32
    %c0_i32_0 = arith.constant 0 : i32
    %c0_i32_1 = arith.constant 0 : i32
    return %arg0, %c0_i32, %c0_i32_0 : i32, i32, i32
  }
  func.func @transform_6(%arg0: i32) -> (i32, i32, i32) {
    %c0_i32 = arith.constant 0 : i32
    %c0_i32_0 = arith.constant 0 : i32
    %c0_i32_1 = arith.constant 0 : i32
    return %arg0, %c0_i32, %c0_i32_0 : i32, i32, i32
  }
}

module attributes {stable_mosaic.version = 11 : i64} {
  func.func @_pass3_kernel(%arg0: i32, %arg1: memref<1x16x16x128xf32, #tpu.memory_space<vmem>>, %arg2: memref<1x128xf32, #tpu.memory_space<vmem>>, %arg3: memref<1x128xf32, #tpu.memory_space<vmem>>, %arg4: memref<128x128xf32, #tpu.memory_space<vmem>>, %arg5: memref<1x16x16x128xf32, #tpu.memory_space<vmem>>, %arg6: memref<1x2x128xf32, #tpu.memory_space<vmem>>) attributes {dimension_semantics = [#tpu.dimension_semantics<parallel>], iteration_bounds = array<i64: 2>, scalar_prefetch = 0 : i64, scratch_operands = 0 : i64, tpu.core_type = #tpu.core_type<tc>, window_params = [{transform_indices = @transform_0, window_bounds = array<i64: 1, 16, 16, 128>}, {pipeline_mode = #tpu.pipeline_mode<synchronous>, transform_indices = @transform_1, window_bounds = array<i64: 1, 128>}, {pipeline_mode = #tpu.pipeline_mode<synchronous>, transform_indices = @transform_2, window_bounds = array<i64: 1, 128>}, {pipeline_mode = #tpu.pipeline_mode<synchronous>, transform_indices = @transform_3, window_bounds = array<i64: 128, 128>}, {transform_indices = @transform_4, window_bounds = array<i64: 1, 16, 16, 128>}, {transform_indices = @transform_5, window_bounds = array<i64: 1, 2, 128>}]} {
    %c0 = arith.constant 0 : index
    %c0_0 = arith.constant 0 : index
    %c0_1 = arith.constant 0 : index
    %c0_2 = arith.constant 0 : index
    %0 = vector.load %arg1[%c0, %c0_0, %c0_1, %c0_2] : memref<1x16x16x128xf32, #tpu.memory_space<vmem>>, vector<1x16x16x128xf32>
    %1 = vector.shape_cast %0 : vector<1x16x16x128xf32> to vector<16x16x128xf32>
    %c0_3 = arith.constant 0 : index
    %c0_4 = arith.constant 0 : index
    %2 = vector.load %arg2[%c0_3, %c0_4] : memref<1x128xf32, #tpu.memory_space<vmem>>, vector<1x128xf32>
    %3 = vector.shape_cast %2 : vector<1x128xf32> to vector<1x1x128xf32>
    %4 = vector.broadcast %3 : vector<1x1x128xf32> to vector<16x16x128xf32>
    %5 = arith.mulf %1, %4 : vector<16x16x128xf32>
    %c0_5 = arith.constant 0 : index
    %c0_6 = arith.constant 0 : index
    %6 = vector.load %arg3[%c0_5, %c0_6] : memref<1x128xf32, #tpu.memory_space<vmem>>, vector<1x128xf32>
    %7 = vector.shape_cast %6 : vector<1x128xf32> to vector<1x1x128xf32>
    %8 = vector.broadcast %7 : vector<1x1x128xf32> to vector<16x16x128xf32>
    %9 = arith.addf %5, %8 : vector<16x16x128xf32>
    %cst = arith.constant 0.000000e+00 : f32
    %10 = vector.broadcast %cst : f32 to vector<16x16x128xf32>
    %11 = arith.maximumf %9, %10 : vector<16x16x128xf32>
    %12 = vector.shape_cast %11 : vector<16x16x128xf32> to vector<256x128xf32>
    %c0_7 = arith.constant 0 : index
    %c0_8 = arith.constant 0 : index
    %13 = vector.load %arg4[%c0_7, %c0_8] : memref<128x128xf32, #tpu.memory_space<vmem>>, vector<128x128xf32>
    %cst_9 = arith.constant dense<0.000000e+00> : vector<256x128xf32>
    %14 = tpu.matmul %12, %13, %cst_9 {dimension_numbers = #tpu.dot_dimension_numbers<[1], [0], [0], [1], [0, 0, 1, 1], [], []>} : vector<256x128xf32>, vector<128x128xf32>, vector<256x128xf32> -> vector<256x128xf32>
    %15 = vector.shape_cast %14 : vector<256x128xf32> to vector<16x16x128xf32>
    %c0_10 = arith.constant 0 : index
    %c0_11 = arith.constant 0 : index
    %c0_12 = arith.constant 0 : index
    %c0_13 = arith.constant 0 : index
    %16 = vector.load %arg5[%c0_10, %c0_11, %c0_12, %c0_13] : memref<1x16x16x128xf32, #tpu.memory_space<vmem>>, vector<1x16x16x128xf32>
    %17 = vector.shape_cast %16 : vector<1x16x16x128xf32> to vector<16x16x128xf32>
    %18 = vector.shape_cast %15 : vector<16x16x128xf32> to vector<1x16x16x128xf32>
    tpu.vector_store %arg5[%c0_10, %c0_11, %c0_12, %c0_13], %18 {strides = array<i32>} : memref<1x16x16x128xf32, #tpu.memory_space<vmem>>, vector<1x16x16x128xf32>,
    %cst_14 = arith.constant dense<0.000000e+00> : vector<128xf32>
    %19 = vector.multi_reduction <add>, %14, %cst_14 [0] : vector<256x128xf32> to vector<128xf32>
    %20 = vector.shape_cast %19 : vector<128xf32> to vector<1x128xf32>
    %21 = arith.mulf %14, %14 : vector<256x128xf32>
    %cst_15 = arith.constant dense<0.000000e+00> : vector<128xf32>
    %22 = vector.multi_reduction <add>, %21, %cst_15 [0] : vector<256x128xf32> to vector<128xf32>
    %23 = vector.shape_cast %22 : vector<128xf32> to vector<1x128xf32>
    %24 = tpu.concatenate %20, %23 in 0 : vector<1x128xf32>, vector<1x128xf32> -> vector<2x128xf32>
    %c0_16 = arith.constant 0 : index
    %c0_17 = arith.constant 0 : index
    %c0_18 = arith.constant 0 : index
    %25 = vector.load %arg6[%c0_16, %c0_17, %c0_18] : memref<1x2x128xf32, #tpu.memory_space<vmem>>, vector<1x2x128xf32>
    %26 = vector.shape_cast %25 : vector<1x2x128xf32> to vector<2x128xf32>
    %27 = vector.shape_cast %24 : vector<2x128xf32> to vector<1x2x128xf32>
    tpu.vector_store %arg6[%c0_16, %c0_17, %c0_18], %27 {strides = array<i32>} : memref<1x2x128xf32, #tpu.memory_space<vmem>>, vector<1x2x128xf32>,
    return
  }
  func.func @transform_0(%arg0: i32) -> (i32, i32, i32, i32) {
    %c0_i32 = arith.constant 0 : i32
    %c0_i32_0 = arith.constant 0 : i32
    %c0_i32_1 = arith.constant 0 : i32
    %c0_i32_2 = arith.constant 0 : i32
    return %arg0, %c0_i32, %c0_i32_0, %c0_i32_1 : i32, i32, i32, i32
  }
  func.func @transform_1(%arg0: i32) -> (i32, i32) {
    %c0_i32 = arith.constant 0 : i32
    %c0_i32_0 = arith.constant 0 : i32
    %c0_i32_1 = arith.constant 0 : i32
    return %c0_i32, %c0_i32_0 : i32, i32
  }
  func.func @transform_2(%arg0: i32) -> (i32, i32) {
    %c0_i32 = arith.constant 0 : i32
    %c0_i32_0 = arith.constant 0 : i32
    %c0_i32_1 = arith.constant 0 : i32
    return %c0_i32, %c0_i32_0 : i32, i32
  }
  func.func @transform_3(%arg0: i32) -> (i32, i32) {
    %c0_i32 = arith.constant 0 : i32
    %c0_i32_0 = arith.constant 0 : i32
    %c0_i32_1 = arith.constant 0 : i32
    return %c0_i32, %c0_i32_0 : i32, i32
  }
  func.func @transform_4(%arg0: i32) -> (i32, i32, i32, i32) {
    %c0_i32 = arith.constant 0 : i32
    %c0_i32_0 = arith.constant 0 : i32
    %c0_i32_1 = arith.constant 0 : i32
    %c0_i32_2 = arith.constant 0 : i32
    return %arg0, %c0_i32, %c0_i32_0, %c0_i32_1 : i32, i32, i32, i32
  }
  func.func @transform_5(%arg0: i32) -> (i32, i32, i32) {
    %c0_i32 = arith.constant 0 : i32
    %c0_i32_0 = arith.constant 0 : i32
    %c0_i32_1 = arith.constant 0 : i32
    return %arg0, %c0_i32, %c0_i32_0 : i32, i32, i32
  }
}

module attributes {stable_mosaic.version = 11 : i64} {
  func.func @_pass4_kernel(%arg0: i32, %arg1: memref<1x16x16x128xf32, #tpu.memory_space<vmem>>, %arg2: memref<1x16x16x128xf32, #tpu.memory_space<vmem>>, %arg3: memref<1x128xf32, #tpu.memory_space<vmem>>, %arg4: memref<1x128xf32, #tpu.memory_space<vmem>>, %arg5: memref<1x128xf32, #tpu.memory_space<vmem>>, %arg6: memref<1x128xf32, #tpu.memory_space<vmem>>, %arg7: memref<1x16x16x128xf32, #tpu.memory_space<vmem>>) attributes {dimension_semantics = [#tpu.dimension_semantics<parallel>], iteration_bounds = array<i64: 2>, scalar_prefetch = 0 : i64, scratch_operands = 0 : i64, tpu.core_type = #tpu.core_type<tc>, window_params = [{transform_indices = @transform_0, window_bounds = array<i64: 1, 16, 16, 128>}, {transform_indices = @transform_1, window_bounds = array<i64: 1, 16, 16, 128>}, {pipeline_mode = #tpu.pipeline_mode<synchronous>, transform_indices = @transform_2, window_bounds = array<i64: 1, 128>}, {pipeline_mode = #tpu.pipeline_mode<synchronous>, transform_indices = @transform_3, window_bounds = array<i64: 1, 128>}, {pipeline_mode = #tpu.pipeline_mode<synchronous>, transform_indices = @transform_4, window_bounds = array<i64: 1, 128>}, {pipeline_mode = #tpu.pipeline_mode<synchronous>, transform_indices = @transform_5, window_bounds = array<i64: 1, 128>}, {transform_indices = @transform_6, window_bounds = array<i64: 1, 16, 16, 128>}]} {
    %c0 = arith.constant 0 : index
    %c0_0 = arith.constant 0 : index
    %c0_1 = arith.constant 0 : index
    %c0_2 = arith.constant 0 : index
    %0 = vector.load %arg1[%c0, %c0_0, %c0_1, %c0_2] : memref<1x16x16x128xf32, #tpu.memory_space<vmem>>, vector<1x16x16x128xf32>
    %1 = vector.shape_cast %0 : vector<1x16x16x128xf32> to vector<16x16x128xf32>
    %c0_3 = arith.constant 0 : index
    %c0_4 = arith.constant 0 : index
    %2 = vector.load %arg3[%c0_3, %c0_4] : memref<1x128xf32, #tpu.memory_space<vmem>>, vector<1x128xf32>
    %3 = vector.shape_cast %2 : vector<1x128xf32> to vector<1x1x128xf32>
    %4 = vector.broadcast %3 : vector<1x1x128xf32> to vector<16x16x128xf32>
    %5 = arith.mulf %1, %4 : vector<16x16x128xf32>
    %c0_5 = arith.constant 0 : index
    %c0_6 = arith.constant 0 : index
    %6 = vector.load %arg4[%c0_5, %c0_6] : memref<1x128xf32, #tpu.memory_space<vmem>>, vector<1x128xf32>
    %7 = vector.shape_cast %6 : vector<1x128xf32> to vector<1x1x128xf32>
    %8 = vector.broadcast %7 : vector<1x1x128xf32> to vector<16x16x128xf32>
    %9 = arith.addf %5, %8 : vector<16x16x128xf32>
    %c0_7 = arith.constant 0 : index
    %c0_8 = arith.constant 0 : index
    %c0_9 = arith.constant 0 : index
    %c0_10 = arith.constant 0 : index
    %10 = vector.load %arg2[%c0_7, %c0_8, %c0_9, %c0_10] : memref<1x16x16x128xf32, #tpu.memory_space<vmem>>, vector<1x16x16x128xf32>
    %11 = vector.shape_cast %10 : vector<1x16x16x128xf32> to vector<16x16x128xf32>
    %c0_11 = arith.constant 0 : index
    %c0_12 = arith.constant 0 : index
    %12 = vector.load %arg5[%c0_11, %c0_12] : memref<1x128xf32, #tpu.memory_space<vmem>>, vector<1x128xf32>
    %13 = vector.shape_cast %12 : vector<1x128xf32> to vector<1x1x128xf32>
    %14 = vector.broadcast %13 : vector<1x1x128xf32> to vector<16x16x128xf32>
    %15 = arith.mulf %11, %14 : vector<16x16x128xf32>
    %c0_13 = arith.constant 0 : index
    %c0_14 = arith.constant 0 : index
    %16 = vector.load %arg6[%c0_13, %c0_14] : memref<1x128xf32, #tpu.memory_space<vmem>>, vector<1x128xf32>
    %17 = vector.shape_cast %16 : vector<1x128xf32> to vector<1x1x128xf32>
    %18 = vector.broadcast %17 : vector<1x1x128xf32> to vector<16x16x128xf32>
    %19 = arith.addf %15, %18 : vector<16x16x128xf32>
    %20 = arith.addf %9, %19 : vector<16x16x128xf32>
    %cst = arith.constant 0.000000e+00 : f32
    %21 = vector.broadcast %cst : f32 to vector<16x16x128xf32>
    %22 = arith.maximumf %20, %21 : vector<16x16x128xf32>
    %c0_15 = arith.constant 0 : index
    %c0_16 = arith.constant 0 : index
    %c0_17 = arith.constant 0 : index
    %c0_18 = arith.constant 0 : index
    %23 = vector.load %arg7[%c0_15, %c0_16, %c0_17, %c0_18] : memref<1x16x16x128xf32, #tpu.memory_space<vmem>>, vector<1x16x16x128xf32>
    %24 = vector.shape_cast %23 : vector<1x16x16x128xf32> to vector<16x16x128xf32>
    %25 = vector.shape_cast %22 : vector<16x16x128xf32> to vector<1x16x16x128xf32>
    tpu.vector_store %arg7[%c0_15, %c0_16, %c0_17, %c0_18], %25 {strides = array<i32>} : memref<1x16x16x128xf32, #tpu.memory_space<vmem>>, vector<1x16x16x128xf32>,
    return
  }
  func.func @transform_0(%arg0: i32) -> (i32, i32, i32, i32) {
    %c0_i32 = arith.constant 0 : i32
    %c0_i32_0 = arith.constant 0 : i32
    %c0_i32_1 = arith.constant 0 : i32
    %c0_i32_2 = arith.constant 0 : i32
    return %arg0, %c0_i32, %c0_i32_0, %c0_i32_1 : i32, i32, i32, i32
  }
  func.func @transform_1(%arg0: i32) -> (i32, i32, i32, i32) {
    %c0_i32 = arith.constant 0 : i32
    %c0_i32_0 = arith.constant 0 : i32
    %c0_i32_1 = arith.constant 0 : i32
    %c0_i32_2 = arith.constant 0 : i32
    return %arg0, %c0_i32, %c0_i32_0, %c0_i32_1 : i32, i32, i32, i32
  }
  func.func @transform_2(%arg0: i32) -> (i32, i32) {
    %c0_i32 = arith.constant 0 : i32
    %c0_i32_0 = arith.constant 0 : i32
    %c0_i32_1 = arith.constant 0 : i32
    return %c0_i32, %c0_i32_0 : i32, i32
  }
  func.func @transform_3(%arg0: i32) -> (i32, i32) {
    %c0_i32 = arith.constant 0 : i32
    %c0_i32_0 = arith.constant 0 : i32
    %c0_i32_1 = arith.constant 0 : i32
    return %c0_i32, %c0_i32_0 : i32, i32
  }
  func.func @transform_4(%arg0: i32) -> (i32, i32) {
    %c0_i32 = arith.constant 0 : i32
    %c0_i32_0 = arith.constant 0 : i32
    %c0_i32_1 = arith.constant 0 : i32
    return %c0_i32, %c0_i32_0 : i32, i32
  }
  func.func @transform_5(%arg0: i32) -> (i32, i32) {
    %c0_i32 = arith.constant 0 : i32
    %c0_i32_0 = arith.constant 0 : i32
    %c0_i32_1 = arith.constant 0 : i32
    return %c0_i32, %c0_i32_0 : i32, i32
  }
  func.func @transform_6(%arg0: i32) -> (i32, i32, i32, i32) {
    %c0_i32 = arith.constant 0 : i32
    %c0_i32_0 = arith.constant 0 : i32
    %c0_i32_1 = arith.constant 0 : i32
    %c0_i32_2 = arith.constant 0 : i32
    return %arg0, %c0_i32, %c0_i32_0, %c0_i32_1 : i32, i32, i32, i32
  }
}

</mosaic_0001>

<llo_original>
// kernel: bottleneck_resblock.7
$region0: #{bottleneck_resblock.7}
  #allocation0 [shape = 'u32[]', space=smem, size = 0x4, offset = 0x4, fixed_abs, tag = 'smem constant byte address 0x4 - core index']
  #allocation1 [shape = 'u32[144,128]{1,0:T(1,128)}', space=vmem, size = 0x12000, scoped, tag = 'internal scratch']
  %s0 = inlined_call_operand.vmem [shape: f32[2,16,16,128], index: 0, kind: input, shape index: {}]
  %s1 = inlined_call_operand.vmem [shape: f32[2,16,16,128], index: 1, kind: input, shape index: {}]
  %s2 = inlined_call_operand.vmem [shape: f32[1,128], index: 2, kind: input, shape index: {}]
  %s3 = inlined_call_operand.vmem [shape: f32[1,128], index: 3, kind: input, shape index: {}]
  %s4 = inlined_call_operand.vmem [shape: f32[1,128], index: 4, kind: input, shape index: {}]
  %s5 = inlined_call_operand.vmem [shape: f32[1,128], index: 5, kind: input, shape index: {}]
  %s6 = inlined_call_operand.vmem [shape: f32[2,16,16,128], index: 6, kind: output, shape index: {}]
  %s7 = sld [smem:[#allocation0]]
  $region57: #{bottleneck_resblock.7} parent=0
    _
  %s9 = ssub.s32 1, %s7
  %s10 = scalar_select 0, %s9, %s7
  loop: start=0, step=1, limit=4
  $region2: #{bottleneck_resblock.7} parent=0 // loop_pre_header
    _
  $region3: #{bottleneck_resblock.7} parent=0 // loop_header
    %s12 = sphi 0, %s16
    %p13 = scmp.ge.s32.totalorder %s12, 4
    %s22 = sphi 0, %s24
    %s25 = sphi 0, %s22
    %s26 = sphi 0, %s25
    %s42 = sphi 0, %s26
    %s48 = sphi 0, %s50
    %s51 = sphi 0, %s48
    %s52 = sphi 0, %s51
    %s68 = sphi 0, %s52
    %s72 = sphi 0, %s72
    %s74 = sphi 0, %s72
    %s75 = sphi 0, %s74
    %s89 = sphi 0, %s75
    %s93 = sphi 0, %s93
    %s95 = sphi 0, %s93
    %s96 = sphi 0, %s95
    %s110 = sphi 0, %s96
    %s114 = sphi 0, %s114
    %s116 = sphi 0, %s114
    %s117 = sphi 0, %s116
    %s131 = sphi 0, %s117
    %s135 = sphi 0, %s135
    %s137 = sphi 0, %s135
    %s138 = sphi 0, %s137
    %s152 = sphi 0, %s138
    %s158 = sphi 0, %s160
    %s161 = sphi 0, %s158
    %s162 = sphi 0, %s161
    %s178 = sphi 0, %s162
  $region4: #{bottleneck_resblock.7} parent=0 // loop_header_branch
    %15 = sbr.rel (%p13) target = $region8
  $region5: #{bottleneck_resblock.7} parent=0 // loop_body
    %s17 = ssub.s32 %s12, 1
    %s18 = ssub.s32 %s12, 2
    %s19 = sadd.s32 %s12, 1
    %s20 = ssub.s32 %s12, %s19
    %p21 = scmp.eq.s32.totalorder %s20, 0
    %s23 = sadd.s32 %s22, 1
    %s24 = scalar_select %p21, %s22, %s23
    %p27 = pneg %p21
    %p28 = scmp.eq.s32.totalorder %s12, 1
    %p29 = por %p27, %p28
    %p30 = scmp.ne.s32.totalorder %s22, %s25
    %p31 = scmp.eq.s32.totalorder %s12, 0
    %p32 = por %p30, %p31
    %p33 = scmp.ne.s32.totalorder %s22, %s25
    %p34 = scmp.eq.s32.totalorder %s17, 1
    %p35 = por %p33, %p34
    %p36 = scmp.ne.s32.totalorder %s25, %s26
    %p37 = scmp.eq.s32.totalorder %s17, 0
    %p38 = por %p36, %p37
    %p39 = scmp.ne.s32.totalorder %s25, %s26
    %p40 = scmp.eq.s32.totalorder %s18, 1
    %p41 = por %p39, %p40
    %p43 = scmp.ne.s32.totalorder %s26, %s42
    %p44 = scmp.eq.s32.totalorder %s18, 0
    %p45 = por %p43, %p44
    %s46 = ssub.s32 %s12, %s19
    %p47 = scmp.eq.s32.totalorder %s46, 0
    %s49 = sadd.s32 %s48, 1
    %s50 = scalar_select %p47, %s48, %s49
    %p53 = pneg %p47
    %p54 = scmp.eq.s32.totalorder %s12, 1
    %p55 = por %p53, %p54
    %p56 = scmp.ne.s32.totalorder %s48, %s51
    %p57 = scmp.eq.s32.totalorder %s12, 0
    %p58 = por %p56, %p57
    %p59 = scmp.ne.s32.totalorder %s48, %s51
    %p60 = scmp.eq.s32.totalorder %s17, 1
    %p61 = por %p59, %p60
    %p62 = scmp.ne.s32.totalorder %s51, %s52
    %p63 = scmp.eq.s32.totalorder %s17, 0
    %p64 = por %p62, %p63
    %p65 = scmp.ne.s32.totalorder %s51, %s52
    %p66 = scmp.eq.s32.totalorder %s18, 1
    %p67 = por %p65, %p66
    %p69 = scmp.ne.s32.totalorder %s52, %s68
    %p70 = scmp.eq.s32.totalorder %s18, 0
    %p71 = por %p69, %p70
    %s73 = sadd.s32 %s72, 1
    %p76 = scmp.eq.s32.totalorder %s12, 1
    %p77 = scmp.ne.s32.totalorder %s72, %s74
    %p78 = scmp.eq.s32.totalorder %s12, 0
    %p79 = por %p77, %p78
    %p80 = scmp.ne.s32.totalorder %s72, %s74
    %p81 = scmp.eq.s32.totalorder %s17, 1
    %p82 = por %p80, %p81
    %p83 = scmp.ne.s32.totalorder %s74, %s75
    %p84 = scmp.eq.s32.totalorder %s17, 0
    %p85 = por %p83, %p84
    %p86 = scmp.ne.s32.totalorder %s74, %s75
    %p87 = scmp.eq.s32.totalorder %s18, 1
    %p88 = por %p86, %p87
    %p90 = scmp.ne.s32.totalorder %s75, %s89
    %p91 = scmp.eq.s32.totalorder %s18, 0
    %p92 = por %p90, %p91
    %s94 = sadd.s32 %s93, 1
    %p97 = scmp.eq.s32.totalorder %s12, 1
    %p98 = scmp.ne.s32.totalorder %s93, %s95
    %p99 = scmp.eq.s32.totalorder %s12, 0
    %p100 = por %p98, %p99
    %p101 = scmp.ne.s32.totalorder %s93, %s95
    %p102 = scmp.eq.s32.totalorder %s17, 1
    %p103 = por %p101, %p102
    %p104 = scmp.ne.s32.totalorder %s95, %s96
    %p105 = scmp.eq.s32.totalorder %s17, 0
    %p106 = por %p104, %p105
    %p107 = scmp.ne.s32.totalorder %s95, %s96
    %p108 = scmp.eq.s32.totalorder %s18, 1
    %p109 = por %p107, %p108
    %p111 = scmp.ne.s32.totalorder %s96, %s110
    %p112 = scmp.eq.s32.totalorder %s18, 0
    %p113 = por %p111, %p112
    %s115 = sadd.s32 %s114, 1
    %p118 = scmp.eq.s32.totalorder %s12, 1
    %p119 = scmp.ne.s32.totalorder %s114, %s116
    %p120 = scmp.eq.s32.totalorder %s12, 0
    %p121 = por %p119, %p120
    %p122 = scmp.ne.s32.totalorder %s114, %s116
    %p123 = scmp.eq.s32.totalorder %s17, 1
    %p124 = por %p122, %p123
    %p125 = scmp.ne.s32.totalorder %s116, %s117
    %p126 = scmp.eq.s32.totalorder %s17, 0
    %p127 = por %p125, %p126
    %p128 = scmp.ne.s32.totalorder %s116, %s117
    %p129 = scmp.eq.s32.totalorder %s18, 1
    %p130 = por %p128, %p129
    %p132 = scmp.ne.s32.totalorder %s117, %s131
    %p133 = scmp.eq.s32.totalorder %s18, 0
    %p134 = por %p132, %p133
    %s136 = sadd.s32 %s135, 1
    %p139 = scmp.eq.s32.totalorder %s12, 1
    %p140 = scmp.ne.s32.totalorder %s135, %s137
    %p141 = scmp.eq.s32.totalorder %s12, 0
    %p142 = por %p140, %p141
    %p143 = scmp.ne.s32.totalorder %s135, %s137
    %p144 = scmp.eq.s32.totalorder %s17, 1
    %p145 = por %p143, %p144
    %p146 = scmp.ne.s32.totalorder %s137, %s138
    %p147 = scmp.eq.s32.totalorder %s17, 0
    %p148 = por %p146, %p147
    %p149 = scmp.ne.s32.totalorder %s137, %s138
    %p150 = scmp.eq.s32.totalorder %s18, 1
    %p151 = por %p149, %p150
    %p153 = scmp.ne.s32.totalorder %s138, %s152
    %p154 = scmp.eq.s32.totalorder %s18, 0
    %p155 = por %p153, %p154
    %s156 = ssub.s32 %s12, %s19
    %p157 = scmp.eq.s32.totalorder %s156, 0
    %s159 = sadd.s32 %s158, 1
    %s160 = scalar_select %p157, %s158, %s159
    %p163 = pneg %p157
    %p164 = scmp.eq.s32.totalorder %s12, 1
    %p165 = por %p163, %p164
    %p166 = scmp.ne.s32.totalorder %s158, %s161
    %p167 = scmp.eq.s32.totalorder %s12, 0
    %p168 = por %p166, %p167
    %p169 = scmp.ne.s32.totalorder %s158, %s161
    %p170 = scmp.eq.s32.totalorder %s17, 1
    %p171 = por %p169, %p170
    %p172 = scmp.ne.s32.totalorder %s161, %s162
    %p173 = scmp.eq.s32.totalorder %s17, 0
    %p174 = por %p172, %p173
    %p175 = scmp.ne.s32.totalorder %s161, %s162
    %p176 = scmp.eq.s32.totalorder %s18, 1
    %p177 = por %p175, %p176
    %p179 = scmp.ne.s32.totalorder %s162, %s178
    %p180 = scmp.eq.s32.totalorder %s18, 0
    %p181 = por %p179, %p180
    %p182 = scmp.le.s32.totalorder 1, %s12
    %p183 = scmp.lt.s32.totalorder %s12, 3
    %p184 = pnand %p182, %p183
    %p185 = pneg %p184
    // Predicated region
    $region9: #{bottleneck_resblock.7} parent=5 // pred_check
      _
    $region10: #{bottleneck_resblock.7} parent=5 // pred_check_branch
      %187 = sbr.rel (%p184) target = $region12
    $region11: #{bottleneck_resblock.7} parent=5 // pred_region
      %s188 = ssub.s32 %s12, 1
      // Predicated region
      $region13: #{bottleneck_resblock.7} parent=11 // pred_check
        %p189 = pneg %p85
      $region14: #{bottleneck_resblock.7} parent=11 // pred_check_branch
        %191 = sbr.rel (%p189) target = $region16
      $region15: #{bottleneck_resblock.7} parent=11 // pred_region
        _
      $region16: #{bottleneck_resblock.7} parent=11 // pred_fallthru
        _
      // Predicated region
      $region17: #{bottleneck_resblock.7} parent=11 // pred_check
        %p192 = pneg %p106
      $region18: #{bottleneck_resblock.7} parent=11 // pred_check_branch
        %194 = sbr.rel (%p192) target = $region20
      $region19: #{bottleneck_resblock.7} parent=11 // pred_region
        _
      $region20: #{bottleneck_resblock.7} parent=11 // pred_fallthru
        _
      // Predicated region
      $region21: #{bottleneck_resblock.7} parent=11 // pred_check
        %p195 = pneg %p127
      $region22: #{bottleneck_resblock.7} parent=11 // pred_check_branch
        %197 = sbr.rel (%p195) target = $region24
      $region23: #{bottleneck_resblock.7} parent=11 // pred_region
        _
      $region24: #{bottleneck_resblock.7} parent=11 // pred_fallthru
        _
      // Predicated region
      $region25: #{bottleneck_resblock.7} parent=11 // pred_check
        %p198 = pneg %p148
      $region26: #{bottleneck_resblock.7} parent=11 // pred_check_branch
        %200 = sbr.rel (%p198) target = $region28
      $region27: #{bottleneck_resblock.7} parent=11 // pred_region
        _
      $region28: #{bottleneck_resblock.7} parent=11 // pred_fallthru
        _
    $region12: #{bottleneck_resblock.7} parent=5 // pred_fallthru
      _
    %p201 = scmp.lt.s32.totalorder %s12, 2
    // Predicated region
    $region29: #{bottleneck_resblock.7} parent=5 // pred_check
      %p202 = pneg %p201
    $region30: #{bottleneck_resblock.7} parent=5 // pred_check_branch
      %204 = sbr.rel (%p202) target = $region32
    $region31: #{bottleneck_resblock.7} parent=5 // pred_region
      // Predicated region
      $region33: #{bottleneck_resblock.7} parent=31 // pred_check
        %p205 = pneg %p32
      $region34: #{bottleneck_resblock.7} parent=31 // pred_check_branch
        %207 = sbr.rel (%p205) target = $region36
      $region35: #{bottleneck_resblock.7} parent=31 // pred_region
        %p208 = scmp.lt.s32.totalorder %s12, 1
        %s209 = scalar_select %p208, %s12, 1
        %s210 = smul.addr %s209, 32
        %s211 = smul.addr %s210, 8
        %s212 = scalar_lea.vmem %s0, %s211
      $region36: #{bottleneck_resblock.7} parent=31 // pred_fallthru
        _
      // Predicated region
      $region37: #{bottleneck_resblock.7} parent=31 // pred_check
        %p213 = pneg %p58
      $region38: #{bottleneck_resblock.7} parent=31 // pred_check_branch
        %215 = sbr.rel (%p213) target = $region40
      $region39: #{bottleneck_resblock.7} parent=31 // pred_region
        %p216 = scmp.lt.s32.totalorder %s12, 1
        %s217 = scalar_select %p216, %s12, 1
        %s218 = smul.addr %s217, 32
        %s219 = smul.addr %s218, 8
        %s220 = scalar_lea.vmem %s1, %s219
      $region40: #{bottleneck_resblock.7} parent=31 // pred_fallthru
        _
    $region32: #{bottleneck_resblock.7} parent=5 // pred_fallthru
      _
    %p221 = scmp.le.s32.totalorder 1, %s12
    %p222 = scmp.lt.s32.totalorder %s12, 3
    %p223 = pnand %p221, %p222
    %p224 = pneg %p223
    // Predicated region
    $region41: #{bottleneck_resblock.7} parent=5 // pred_check
      _
    $region42: #{bottleneck_resblock.7} parent=5 // pred_check_branch
      %226 = sbr.rel (%p223) target = $region44
    $region43: #{bottleneck_resblock.7} parent=5 // pred_region
      %s227 = ssub.s32 %s12, 1
      %p228 = scmp.lt.s32.totalorder %s17, 1
      %s229 = scalar_select %p228, %s17, 1
      %s230 = smul.addr %s229, 32
      %s231 = smul.addr %s230, 8
      %s232 = scalar_lea.vmem %s0, %s231
      %p233 = pneg %p38
      %p234 = pneg %p35
      %p235 = scmp.lt.s32.totalorder %s17, 1
      %s236 = scalar_select %p235, %s17, 1
      %s237 = smul.addr %s236, 32
      %s238 = smul.addr %s237, 8
      %s239 = scalar_lea.vmem %s1, %s238
      %p240 = pneg %p64
      %p241 = pneg %p61
      %p242 = pneg %p85
      %p243 = pneg %p82
      %p244 = pneg %p106
      %p245 = pneg %p103
      %p246 = pneg %p127
      %p247 = pneg %p124
      %p248 = pneg %p148
      %p249 = pneg %p145
      %p250 = pneg %p174
      %p251 = pneg %p171
      %p252 = scmp.lt.s32.totalorder %s17, 1
      %s253 = scalar_select %p252, %s17, 1
      %s254 = smul.addr %s253, 32
      %s255 = smul.addr %s254, 8
      %s256 = scalar_lea.vmem %s6, %s255
      %p257 = scmp.lt.s32.totalorder %s17, 1
      %s258 = scalar_select %p257, %s17, 1
      %s259 = smul.addr %s258, 32
      %s260 = smul.addr %s259, 8
      %s261 = scalar_lea.vmem %s0, %s260
      %p262 = scmp.lt.s32.totalorder %s17, 1
      %s263 = scalar_select %p262, %s17, 1
      %s264 = smul.addr %s263, 32
      %s265 = smul.addr %s264, 8
      %s266 = scalar_lea.vmem %s1, %s265
      %p267 = scmp.lt.s32.totalorder %s17, 1
      %s268 = scalar_select %p267, %s17, 1
      %s269 = smul.addr %s268, 32
      %s270 = smul.addr %s269, 8
      %s271 = scalar_lea.vmem %s6, %s270
      %v272 = vld [vmem:[%s261] sm:$0xff]
      %v273 = vld [vmem:[%s261 + $0x8] sm:$0xff]
      %v274 = vld [vmem:[%s261 + $0x10] sm:$0xff]
      %v275 = vld [vmem:[%s261 + $0x18] sm:$0xff]
      %v276 = vld [vmem:[%s261 + $0x20] sm:$0xff]
      %v277 = vld [vmem:[%s261 + $0x28] sm:$0xff]
      %v278 = vld [vmem:[%s261 + $0x30] sm:$0xff]
      %v279 = vld [vmem:[%s261 + $0x38] sm:$0xff]
      %v280 = vld [vmem:[%s261 + $0x40] sm:$0xff]
      %v281 = vld [vmem:[%s261 + $0x48] sm:$0xff]
      %v282 = vld [vmem:[%s261 + $0x50] sm:$0xff]
      %v283 = vld [vmem:[%s261 + $0x58] sm:$0xff]
      %v284 = vld [vmem:[%s261 + $0x60] sm:$0xff]
      %v285 = vld [vmem:[%s261 + $0x68] sm:$0xff]
      %v286 = vld [vmem:[%s261 + $0x70] sm:$0xff]
      %v287 = vld [vmem:[%s261 + $0x78] sm:$0xff]
      %v288 = vld [vmem:[%s261 + $0x80] sm:$0xff]
      %v289 = vld [vmem:[%s261 + $0x88] sm:$0xff]
      %v290 = vld [vmem:[%s261 + $0x90] sm:$0xff]
      %v291 = vld [vmem:[%s261 + $0x98] sm:$0xff]
      %v292 = vld [vmem:[%s261 + $0xa0] sm:$0xff]
      %v293 = vld [vmem:[%s261 + $0xa8] sm:$0xff]
      %v294 = vld [vmem:[%s261 + $0xb0] sm:$0xff]
      %v295 = vld [vmem:[%s261 + $0xb8] sm:$0xff]
      %v296 = vld [vmem:[%s261 + $0xc0] sm:$0xff]
      %v297 = vld [vmem:[%s261 + $0xc8] sm:$0xff]
      %v298 = vld [vmem:[%s261 + $0xd0] sm:$0xff]
      %v299 = vld [vmem:[%s261 + $0xd8] sm:$0xff]
      %v300 = vld [vmem:[%s261 + $0xe0] sm:$0xff]
      %v301 = vld [vmem:[%s261 + $0xe8] sm:$0xff]
      %v302 = vld [vmem:[%s261 + $0xf0] sm:$0xff]
      %v303 = vld [vmem:[%s261 + $0xf8] sm:$0xff]
      %v304 = vld [vmem:[%s2] sm:$0x1]
      %v306 = vlaneseq
      %v307 = vshrl.u32 %v306, 7
      %v308 = vsub.s32 0, %v307
      %v309 = vrot.slane %v304, %v308
      %v311 = vmul.f32 %v272, %v309
      %v312 = vmul.f32 %v273, %v309
      %v313 = vmul.f32 %v274, %v309
      %v314 = vmul.f32 %v275, %v309
      %v315 = vmul.f32 %v276, %v309
      %v316 = vmul.f32 %v277, %v309
      %v317 = vmul.f32 %v278, %v309
      %v318 = vmul.f32 %v279, %v309
      %v319 = vmul.f32 %v280, %v309
      %v320 = vmul.f32 %v281, %v309
      %v321 = vmul.f32 %v282, %v309
      %v322 = vmul.f32 %v283, %v309
      %v323 = vmul.f32 %v284, %v309
      %v324 = vmul.f32 %v285, %v309
      %v325 = vmul.f32 %v286, %v309
      %v326 = vmul.f32 %v287, %v309
      %v327 = vmul.f32 %v288, %v309
      %v328 = vmul.f32 %v289, %v309
      %v329 = vmul.f32 %v290, %v309
      %v330 = vmul.f32 %v291, %v309
      %v331 = vmul.f32 %v292, %v309
      %v332 = vmul.f32 %v293, %v309
      %v333 = vmul.f32 %v294, %v309
      %v334 = vmul.f32 %v295, %v309
      %v335 = vmul.f32 %v296, %v309
      %v336 = vmul.f32 %v297, %v309
      %v337 = vmul.f32 %v298, %v309
      %v338 = vmul.f32 %v299, %v309
      %v339 = vmul.f32 %v300, %v309
      %v340 = vmul.f32 %v301, %v309
      %v341 = vmul.f32 %v302, %v309
      %v342 = vmul.f32 %v303, %v309
      %v343 = vld [vmem:[%s3] sm:$0x1]
      %v345 = vlaneseq
      %v346 = vshrl.u32 %v345, 7
      %v347 = vsub.s32 0, %v346
      %v348 = vrot.slane %v343, %v347
      %v350 = vadd.f32 %v311, %v348
      %v351 = vadd.f32 %v312, %v348
      %v352 = vadd.f32 %v313, %v348
      %v353 = vadd.f32 %v314, %v348
      %v354 = vadd.f32 %v315, %v348
      %v355 = vadd.f32 %v316, %v348
      %v356 = vadd.f32 %v317, %v348
      %v357 = vadd.f32 %v318, %v348
      %v358 = vadd.f32 %v319, %v348
      %v359 = vadd.f32 %v320, %v348
      %v360 = vadd.f32 %v321, %v348
      %v361 = vadd.f32 %v322, %v348
      %v362 = vadd.f32 %v323, %v348
      %v363 = vadd.f32 %v324, %v348
      %v364 = vadd.f32 %v325, %v348
      %v365 = vadd.f32 %v326, %v348
      %v366 = vadd.f32 %v327, %v348
      %v367 = vadd.f32 %v328, %v348
      %v368 = vadd.f32 %v329, %v348
      %v369 = vadd.f32 %v330, %v348
      %v370 = vadd.f32 %v331, %v348
      %v371 = vadd.f32 %v332, %v348
      %v372 = vadd.f32 %v333, %v348
      %v373 = vadd.f32 %v334, %v348
      %v374 = vadd.f32 %v335, %v348
      %v375 = vadd.f32 %v336, %v348
      %v376 = vadd.f32 %v337, %v348
      %v377 = vadd.f32 %v338, %v348
      %v378 = vadd.f32 %v339, %v348
      %v379 = vadd.f32 %v340, %v348
      %v380 = vadd.f32 %v341, %v348
      %v381 = vadd.f32 %v342, %v348
      %v382 = vld [vmem:[%s266] sm:$0xff]
      %v383 = vld [vmem:[%s266 + $0x8] sm:$0xff]
      %v384 = vld [vmem:[%s266 + $0x10] sm:$0xff]
      %v385 = vld [vmem:[%s266 + $0x18] sm:$0xff]
      %v386 = vld [vmem:[%s266 + $0x20] sm:$0xff]
      %v387 = vld [vmem:[%s266 + $0x28] sm:$0xff]
      %v388 = vld [vmem:[%s266 + $0x30] sm:$0xff]
      %v389 = vld [vmem:[%s266 + $0x38] sm:$0xff]
      %v390 = vld [vmem:[%s266 + $0x40] sm:$0xff]
      %v391 = vld [vmem:[%s266 + $0x48] sm:$0xff]
      %v392 = vld [vmem:[%s266 + $0x50] sm:$0xff]
      %v393 = vld [vmem:[%s266 + $0x58] sm:$0xff]
      %v394 = vld [vmem:[%s266 + $0x60] sm:$0xff]
      %v395 = vld [vmem:[%s266 + $0x68] sm:$0xff]
      %v396 = vld [vmem:[%s266 + $0x70] sm:$0xff]
      %v397 = vld [vmem:[%s266 + $0x78] sm:$0xff]
      %v398 = vld [vmem:[%s266 + $0x80] sm:$0xff]
      %v399 = vld [vmem:[%s266 + $0x88] sm:$0xff]
      %v400 = vld [vmem:[%s266 + $0x90] sm:$0xff]
      %v401 = vld [vmem:[%s266 + $0x98] sm:$0xff]
      %v402 = vld [vmem:[%s266 + $0xa0] sm:$0xff]
      %v403 = vld [vmem:[%s266 + $0xa8] sm:$0xff]
      %v404 = vld [vmem:[%s266 + $0xb0] sm:$0xff]
      %v405 = vld [vmem:[%s266 + $0xb8] sm:$0xff]
      %v406 = vld [vmem:[%s266 + $0xc0] sm:$0xff]
      %v407 = vld [vmem:[%s266 + $0xc8] sm:$0xff]
      %v408 = vld [vmem:[%s266 + $0xd0] sm:$0xff]
      %v409 = vld [vmem:[%s266 + $0xd8] sm:$0xff]
      %v410 = vld [vmem:[%s266 + $0xe0] sm:$0xff]
      %v411 = vld [vmem:[%s266 + $0xe8] sm:$0xff]
      %v412 = vld [vmem:[%s266 + $0xf0] sm:$0xff]
      %v413 = vld [vmem:[%s266 + $0xf8] sm:$0xff]
      %v414 = vld [vmem:[%s4] sm:$0x1]
      %v416 = vlaneseq
      %v417 = vshrl.u32 %v416, 7
      %v418 = vsub.s32 0, %v417
      %v419 = vrot.slane %v414, %v418
      %v421 = vmul.f32 %v382, %v419
      %v422 = vmul.f32 %v383, %v419
      %v423 = vmul.f32 %v384, %v419
      %v424 = vmul.f32 %v385, %v419
      %v425 = vmul.f32 %v386, %v419
      %v426 = vmul.f32 %v387, %v419
      %v427 = vmul.f32 %v388, %v419
      %v428 = vmul.f32 %v389, %v419
      %v429 = vmul.f32 %v390, %v419
      %v430 = vmul.f32 %v391, %v419
      %v431 = vmul.f32 %v392, %v419
      %v432 = vmul.f32 %v393, %v419
      %v433 = vmul.f32 %v394, %v419
      %v434 = vmul.f32 %v395, %v419
      %v435 = vmul.f32 %v396, %v419
      %v436 = vmul.f32 %v397, %v419
      %v437 = vmul.f32 %v398, %v419
      %v438 = vmul.f32 %v399, %v419
      %v439 = vmul.f32 %v400, %v419
      %v440 = vmul.f32 %v401, %v419
      %v441 = vmul.f32 %v402, %v419
      %v442 = vmul.f32 %v403, %v419
      %v443 = vmul.f32 %v404, %v419
      %v444 = vmul.f32 %v405, %v419
      %v445 = vmul.f32 %v406, %v419
      %v446 = vmul.f32 %v407, %v419
      %v447 = vmul.f32 %v408, %v419
      %v448 = vmul.f32 %v409, %v419
      %v449 = vmul.f32 %v410, %v419
      %v450 = vmul.f32 %v411, %v419
      %v451 = vmul.f32 %v412, %v419
      %v452 = vmul.f32 %v413, %v419
      %v453 = vld [vmem:[%s5] sm:$0x1]
      %v455 = vlaneseq
      %v456 = vshrl.u32 %v455, 7
      %v457 = vsub.s32 0, %v456
      %v458 = vrot.slane %v453, %v457
      %v460 = vadd.f32 %v421, %v458
      %v461 = vadd.f32 %v422, %v458
      %v462 = vadd.f32 %v423, %v458
      %v463 = vadd.f32 %v424, %v458
      %v464 = vadd.f32 %v425, %v458
      %v465 = vadd.f32 %v426, %v458
      %v466 = vadd.f32 %v427, %v458
      %v467 = vadd.f32 %v428, %v458
      %v468 = vadd.f32 %v429, %v458
      %v469 = vadd.f32 %v430, %v458
      %v470 = vadd.f32 %v431, %v458
      %v471 = vadd.f32 %v432, %v458
      %v472 = vadd.f32 %v433, %v458
      %v473 = vadd.f32 %v434, %v458
      %v474 = vadd.f32 %v435, %v458
      %v475 = vadd.f32 %v436, %v458
      %v476 = vadd.f32 %v437, %v458
      %v477 = vadd.f32 %v438, %v458
      %v478 = vadd.f32 %v439, %v458
      %v479 = vadd.f32 %v440, %v458
      %v480 = vadd.f32 %v441, %v458
      %v481 = vadd.f32 %v442, %v458
      %v482 = vadd.f32 %v443, %v458
      %v483 = vadd.f32 %v444, %v458
      %v484 = vadd.f32 %v445, %v458
      %v485 = vadd.f32 %v446, %v458
      %v486 = vadd.f32 %v447, %v458
      %v487 = vadd.f32 %v448, %v458
      %v488 = vadd.f32 %v449, %v458
      %v489 = vadd.f32 %v450, %v458
      %v490 = vadd.f32 %v451, %v458
      %v491 = vadd.f32 %v452, %v458
      %v492 = vadd.f32 %v350, %v460
      %v493 = vadd.f32 %v351, %v461
      %v494 = vadd.f32 %v352, %v462
      %v495 = vadd.f32 %v353, %v463
      %v496 = vadd.f32 %v354, %v464
      %v497 = vadd.f32 %v355, %v465
      %v498 = vadd.f32 %v356, %v466
      %v499 = vadd.f32 %v357, %v467
      %v500 = vadd.f32 %v358, %v468
      %v501 = vadd.f32 %v359, %v469
      %v502 = vadd.f32 %v360, %v470
      %v503 = vadd.f32 %v361, %v471
      %v504 = vadd.f32 %v362, %v472
      %v505 = vadd.f32 %v363, %v473
      %v506 = vadd.f32 %v364, %v474
      %v507 = vadd.f32 %v365, %v475
      %v508 = vadd.f32 %v366, %v476
      %v509 = vadd.f32 %v367, %v477
      %v510 = vadd.f32 %v368, %v478
      %v511 = vadd.f32 %v369, %v479
      %v512 = vadd.f32 %v370, %v480
      %v513 = vadd.f32 %v371, %v481
      %v514 = vadd.f32 %v372, %v482
      %v515 = vadd.f32 %v373, %v483
      %v516 = vadd.f32 %v374, %v484
      %v517 = vadd.f32 %v375, %v485
      %v518 = vadd.f32 %v376, %v486
      %v519 = vadd.f32 %v377, %v487
      %v520 = vadd.f32 %v378, %v488
      %v521 = vadd.f32 %v379, %v489
      %v522 = vadd.f32 %v380, %v490
      %v523 = vadd.f32 %v381, %v491
      %v524 = vmax.f32 %v492, 0.0
      %v525 = vmax.f32 %v493, 0.0
      %v526 = vmax.f32 %v494, 0.0
      %v527 = vmax.f32 %v495, 0.0
      %v528 = vmax.f32 %v496, 0.0
      %v529 = vmax.f32 %v497, 0.0
      %v530 = vmax.f32 %v498, 0.0
      %v531 = vmax.f32 %v499, 0.0
      %v532 = vmax.f32 %v500, 0.0
      %v533 = vmax.f32 %v501, 0.0
      %v534 = vmax.f32 %v502, 0.0
      %v535 = vmax.f32 %v503, 0.0
      %v536 = vmax.f32 %v504, 0.0
      %v537 = vmax.f32 %v505, 0.0
      %v538 = vmax.f32 %v506, 0.0
      %v539 = vmax.f32 %v507, 0.0
      %v540 = vmax.f32 %v508, 0.0
      %v541 = vmax.f32 %v509, 0.0
      %v542 = vmax.f32 %v510, 0.0
      %v543 = vmax.f32 %v511, 0.0
      %v544 = vmax.f32 %v512, 0.0
      %v545 = vmax.f32 %v513, 0.0
      %v546 = vmax.f32 %v514, 0.0
      %v547 = vmax.f32 %v515, 0.0
      %v548 = vmax.f32 %v516, 0.0
      %v549 = vmax.f32 %v517, 0.0
      %v550 = vmax.f32 %v518, 0.0
      %v551 = vmax.f32 %v519, 0.0
      %v552 = vmax.f32 %v520, 0.0
      %v553 = vmax.f32 %v521, 0.0
      %v554 = vmax.f32 %v522, 0.0
      %v555 = vmax.f32 %v523, 0.0
      %556 = vst [vmem:[%s271] sm:$0xff] %v524
      %557 = vst [vmem:[%s271 + $0x8] sm:$0xff] %v525
      %558 = vst [vmem:[%s271 + $0x10] sm:$0xff] %v526
      %559 = vst [vmem:[%s271 + $0x18] sm:$0xff] %v527
      %560 = vst [vmem:[%s271 + $0x20] sm:$0xff] %v528
      %561 = vst [vmem:[%s271 + $0x28] sm:$0xff] %v529
      %562 = vst [vmem:[%s271 + $0x30] sm:$0xff] %v530
      %563 = vst [vmem:[%s271 + $0x38] sm:$0xff] %v531
      %564 = vst [vmem:[%s271 + $0x40] sm:$0xff] %v532
      %565 = vst [vmem:[%s271 + $0x48] sm:$0xff] %v533
      %566 = vst [vmem:[%s271 + $0x50] sm:$0xff] %v534
      %567 = vst [vmem:[%s271 + $0x58] sm:$0xff] %v535
      %568 = vst [vmem:[%s271 + $0x60] sm:$0xff] %v536
      %569 = vst [vmem:[%s271 + $0x68] sm:$0xff] %v537
      %570 = vst [vmem:[%s271 + $0x70] sm:$0xff] %v538
      %571 = vst [vmem:[%s271 + $0x78] sm:$0xff] %v539
      %572 = vst [vmem:[%s271 + $0x80] sm:$0xff] %v540
      %573 = vst [vmem:[%s271 + $0x88] sm:$0xff] %v541
      %574 = vst [vmem:[%s271 + $0x90] sm:$0xff] %v542
      %575 = vst [vmem:[%s271 + $0x98] sm:$0xff] %v543
      %576 = vst [vmem:[%s271 + $0xa0] sm:$0xff] %v544
      %577 = vst [vmem:[%s271 + $0xa8] sm:$0xff] %v545
      %578 = vst [vmem:[%s271 + $0xb0] sm:$0xff] %v546
      %579 = vst [vmem:[%s271 + $0xb8] sm:$0xff] %v547
      %580 = vst [vmem:[%s271 + $0xc0] sm:$0xff] %v548
      %581 = vst [vmem:[%s271 + $0xc8] sm:$0xff] %v549
      %582 = vst [vmem:[%s271 + $0xd0] sm:$0xff] %v550
      %583 = vst [vmem:[%s271 + $0xd8] sm:$0xff] %v551
      %584 = vst [vmem:[%s271 + $0xe0] sm:$0xff] %v552
      %585 = vst [vmem:[%s271 + $0xe8] sm:$0xff] %v553
      %586 = vst [vmem:[%s271 + $0xf0] sm:$0xff] %v554
      %587 = vst [vmem:[%s271 + $0xf8] sm:$0xff] %v555
      %p588 = scmp.lt.s32.totalorder %s17, 1
      %s589 = scalar_select %p588, %s17, 1
      %s590 = smul.addr %s589, 32
      %s591 = smul.addr %s590, 8
      %s592 = scalar_lea.vmem %s6, %s591
      // Predicated region
      $region45: #{bottleneck_resblock.7} parent=43 // pred_check
        %p593 = pneg %p171
      $region46: #{bottleneck_resblock.7} parent=43 // pred_check_branch
        %595 = sbr.rel (%p593) target = $region48
      $region47: #{bottleneck_resblock.7} parent=43 // pred_region
        _
      $region48: #{bottleneck_resblock.7} parent=43 // pred_fallthru
        _
    $region44: #{bottleneck_resblock.7} parent=5 // pred_fallthru
      _
    %p596 = scmp.le.s32.totalorder 2, %s12
    // Predicated region
    $region49: #{bottleneck_resblock.7} parent=5 // pred_check
      %p597 = pneg %p596
    $region50: #{bottleneck_resblock.7} parent=5 // pred_check_branch
      %599 = sbr.rel (%p597) target = $region52
    $region51: #{bottleneck_resblock.7} parent=5 // pred_region
      %s600 = ssub.s32 %s12, 2
      // Predicated region
      $region53: #{bottleneck_resblock.7} parent=51 // pred_check
        %p601 = pneg %p177
      $region54: #{bottleneck_resblock.7} parent=51 // pred_check_branch
        %603 = sbr.rel (%p601) target = $region56
      $region55: #{bottleneck_resblock.7} parent=51 // pred_region
        %p604 = scmp.lt.s32.totalorder %s18, 1
        %s605 = scalar_select %p604, %s18, 1
        %s606 = smul.addr %s605, 32
        %s607 = smul.addr %s606, 8
        %s608 = scalar_lea.vmem %s6, %s607
      $region56: #{bottleneck_resblock.7} parent=51 // pred_fallthru
        _
    $region52: #{bottleneck_resblock.7} parent=5 // pred_fallthru
      _
  $region6: #{bottleneck_resblock.7} parent=0 // loop_footer
    %s16 = sadd.s32 1, %s12
  $region7: #{bottleneck_resblock.7} parent=0 // loop_footer_branch
    %11 = sbr.rel target = $region3
  $region8: #{bottleneck_resblock.7} parent=0 // loop_exit
    _

// kernel: bottleneck_resblock.6
$region0: #{bottleneck_resblock.6}
  #allocation0 [shape = 'u32[]', space=smem, size = 0x4, offset = 0x4, fixed_abs, tag = 'smem constant byte address 0x4 - core index']
  #allocation1 [shape = 'u32[144,128]{1,0:T(1,128)}', space=vmem, size = 0x12000, scoped, tag = 'internal scratch']
  %s0 = inlined_call_operand.vmem [shape: f32[2,16,16,128], index: 0, kind: input, shape index: {}]
  %s1 = inlined_call_operand.vmem [shape: f32[1,128], index: 1, kind: input, shape index: {}]
  %s2 = inlined_call_operand.vmem [shape: f32[1,128], index: 2, kind: input, shape index: {}]
  %s3 = inlined_call_operand.vmem [shape: f32[128,128], index: 3, kind: input, shape index: {}]
  %s4 = inlined_call_operand.vmem [shape: f32[2,16,16,128], index: 4, kind: output, shape index: {0}]
  %s5 = inlined_call_operand.vmem [shape: f32[2,2,128], index: 5, kind: output, shape index: {1}]
  %6 = xla_tuple %s4, %s5
  %s7 = sld [smem:[#allocation0]]
  $region57: #{bottleneck_resblock.6} parent=0
    _
  %s9 = ssub.s32 1, %s7
  %s10 = scalar_select 0, %s9, %s7
  loop: start=0, step=1, limit=4
  $region2: #{bottleneck_resblock.6} parent=0 // loop_pre_header
    _
  $region3: #{bottleneck_resblock.6} parent=0 // loop_header
    %s12 = sphi 0, %s16
    %p13 = scmp.ge.s32.totalorder %s12, 4
    %s22 = sphi 0, %s24
    %s25 = sphi 0, %s22
    %s26 = sphi 0, %s25
    %s42 = sphi 0, %s26
    %s46 = sphi 0, %s46
    %s48 = sphi 0, %s46
    %s49 = sphi 0, %s48
    %s63 = sphi 0, %s49
    %s67 = sphi 0, %s67
    %s69 = sphi 0, %s67
    %s70 = sphi 0, %s69
    %s84 = sphi 0, %s70
    %s88 = sphi 0, %s88
    %s90 = sphi 0, %s88
    %s91 = sphi 0, %s90
    %s105 = sphi 0, %s91
    %s111 = sphi 0, %s113
    %s114 = sphi 0, %s111
    %s115 = sphi 0, %s114
    %s131 = sphi 0, %s115
    %s137 = sphi 0, %s139
    %s140 = sphi 0, %s137
    %s141 = sphi 0, %s140
    %s157 = sphi 0, %s141
  $region4: #{bottleneck_resblock.6} parent=0 // loop_header_branch
    %15 = sbr.rel (%p13) target = $region8
  $region5: #{bottleneck_resblock.6} parent=0 // loop_body
    %s17 = ssub.s32 %s12, 1
    %s18 = ssub.s32 %s12, 2
    %s19 = sadd.s32 %s12, 1
    %s20 = ssub.s32 %s12, %s19
    %p21 = scmp.eq.s32.totalorder %s20, 0
    %s23 = sadd.s32 %s22, 1
    %s24 = scalar_select %p21, %s22, %s23
    %p27 = pneg %p21
    %p28 = scmp.eq.s32.totalorder %s12, 1
    %p29 = por %p27, %p28
    %p30 = scmp.ne.s32.totalorder %s22, %s25
    %p31 = scmp.eq.s32.totalorder %s12, 0
    %p32 = por %p30, %p31
    %p33 = scmp.ne.s32.totalorder %s22, %s25
    %p34 = scmp.eq.s32.totalorder %s17, 1
    %p35 = por %p33, %p34
    %p36 = scmp.ne.s32.totalorder %s25, %s26
    %p37 = scmp.eq.s32.totalorder %s17, 0
    %p38 = por %p36, %p37
    %p39 = scmp.ne.s32.totalorder %s25, %s26
    %p40 = scmp.eq.s32.totalorder %s18, 1
    %p41 = por %p39, %p40
    %p43 = scmp.ne.s32.totalorder %s26, %s42
    %p44 = scmp.eq.s32.totalorder %s18, 0
    %p45 = por %p43, %p44
    %s47 = sadd.s32 %s46, 1
    %p50 = scmp.eq.s32.totalorder %s12, 1
    %p51 = scmp.ne.s32.totalorder %s46, %s48
    %p52 = scmp.eq.s32.totalorder %s12, 0
    %p53 = por %p51, %p52
    %p54 = scmp.ne.s32.totalorder %s46, %s48
    %p55 = scmp.eq.s32.totalorder %s17, 1
    %p56 = por %p54, %p55
    %p57 = scmp.ne.s32.totalorder %s48, %s49
    %p58 = scmp.eq.s32.totalorder %s17, 0
    %p59 = por %p57, %p58
    %p60 = scmp.ne.s32.totalorder %s48, %s49
    %p61 = scmp.eq.s32.totalorder %s18, 1
    %p62 = por %p60, %p61
    %p64 = scmp.ne.s32.totalorder %s49, %s63
    %p65 = scmp.eq.s32.totalorder %s18, 0
    %p66 = por %p64, %p65
    %s68 = sadd.s32 %s67, 1
    %p71 = scmp.eq.s32.totalorder %s12, 1
    %p72 = scmp.ne.s32.totalorder %s67, %s69
    %p73 = scmp.eq.s32.totalorder %s12, 0
    %p74 = por %p72, %p73
    %p75 = scmp.ne.s32.totalorder %s67, %s69
    %p76 = scmp.eq.s32.totalorder %s17, 1
    %p77 = por %p75, %p76
    %p78 = scmp.ne.s32.totalorder %s69, %s70
    %p79 = scmp.eq.s32.totalorder %s17, 0
    %p80 = por %p78, %p79
    %p81 = scmp.ne.s32.totalorder %s69, %s70
    %p82 = scmp.eq.s32.totalorder %s18, 1
    %p83 = por %p81, %p82
    %p85 = scmp.ne.s32.totalorder %s70, %s84
    %p86 = scmp.eq.s32.totalorder %s18, 0
    %p87 = por %p85, %p86
    %s89 = sadd.s32 %s88, 1
    %p92 = scmp.eq.s32.totalorder %s12, 1
    %p93 = scmp.ne.s32.totalorder %s88, %s90
    %p94 = scmp.eq.s32.totalorder %s12, 0
    %p95 = por %p93, %p94
    %p96 = scmp.ne.s32.totalorder %s88, %s90
    %p97 = scmp.eq.s32.totalorder %s17, 1
    %p98 = por %p96, %p97
    %p99 = scmp.ne.s32.totalorder %s90, %s91
    %p100 = scmp.eq.s32.totalorder %s17, 0
    %p101 = por %p99, %p100
    %p102 = scmp.ne.s32.totalorder %s90, %s91
    %p103 = scmp.eq.s32.totalorder %s18, 1
    %p104 = por %p102, %p103
    %p106 = scmp.ne.s32.totalorder %s91, %s105
    %p107 = scmp.eq.s32.totalorder %s18, 0
    %p108 = por %p106, %p107
    %s109 = ssub.s32 %s12, %s19
    %p110 = scmp.eq.s32.totalorder %s109, 0
    %s112 = sadd.s32 %s111, 1
    %s113 = scalar_select %p110, %s111, %s112
    %p116 = pneg %p110
    %p117 = scmp.eq.s32.totalorder %s12, 1
    %p118 = por %p116, %p117
    %p119 = scmp.ne.s32.totalorder %s111, %s114
    %p120 = scmp.eq.s32.totalorder %s12, 0
    %p121 = por %p119, %p120
    %p122 = scmp.ne.s32.totalorder %s111, %s114
    %p123 = scmp.eq.s32.totalorder %s17, 1
    %p124 = por %p122, %p123
    %p125 = scmp.ne.s32.totalorder %s114, %s115
    %p126 = scmp.eq.s32.totalorder %s17, 0
    %p127 = por %p125, %p126
    %p128 = scmp.ne.s32.totalorder %s114, %s115
    %p129 = scmp.eq.s32.totalorder %s18, 1
    %p130 = por %p128, %p129
    %p132 = scmp.ne.s32.totalorder %s115, %s131
    %p133 = scmp.eq.s32.totalorder %s18, 0
    %p134 = por %p132, %p133
    %s135 = ssub.s32 %s12, %s19
    %p136 = scmp.eq.s32.totalorder %s135, 0
    %s138 = sadd.s32 %s137, 1
    %s139 = scalar_select %p136, %s137, %s138
    %p142 = pneg %p136
    %p143 = scmp.eq.s32.totalorder %s12, 1
    %p144 = por %p142, %p143
    %p145 = scmp.ne.s32.totalorder %s137, %s140
    %p146 = scmp.eq.s32.totalorder %s12, 0
    %p147 = por %p145, %p146
    %p148 = scmp.ne.s32.totalorder %s137, %s140
    %p149 = scmp.eq.s32.totalorder %s17, 1
    %p150 = por %p148, %p149
    %p151 = scmp.ne.s32.totalorder %s140, %s141
    %p152 = scmp.eq.s32.totalorder %s17, 0
    %p153 = por %p151, %p152
    %p154 = scmp.ne.s32.totalorder %s140, %s141
    %p155 = scmp.eq.s32.totalorder %s18, 1
    %p156 = por %p154, %p155
    %p158 = scmp.ne.s32.totalorder %s141, %s157
    %p159 = scmp.eq.s32.totalorder %s18, 0
    %p160 = por %p158, %p159
    %p161 = scmp.le.s32.totalorder 1, %s12
    %p162 = scmp.lt.s32.totalorder %s12, 3
    %p163 = pnand %p161, %p162
    %p164 = pneg %p163
    // Predicated region
    $region9: #{bottleneck_resblock.6} parent=5 // pred_check
      _
    $region10: #{bottleneck_resblock.6} parent=5 // pred_check_branch
      %166 = sbr.rel (%p163) target = $region12
    $region11: #{bottleneck_resblock.6} parent=5 // pred_region
      %s167 = ssub.s32 %s12, 1
      // Predicated region
      $region13: #{bottleneck_resblock.6} parent=11 // pred_check
        %p168 = pneg %p59
      $region14: #{bottleneck_resblock.6} parent=11 // pred_check_branch
        %170 = sbr.rel (%p168) target = $region16
      $region15: #{bottleneck_resblock.6} parent=11 // pred_region
        _
      $region16: #{bottleneck_resblock.6} parent=11 // pred_fallthru
        _
      // Predicated region
      $region17: #{bottleneck_resblock.6} parent=11 // pred_check
        %p171 = pneg %p80
      $region18: #{bottleneck_resblock.6} parent=11 // pred_check_branch
        %173 = sbr.rel (%p171) target = $region20
      $region19: #{bottleneck_resblock.6} parent=11 // pred_region
        _
      $region20: #{bottleneck_resblock.6} parent=11 // pred_fallthru
        _
      // Predicated region
      $region21: #{bottleneck_resblock.6} parent=11 // pred_check
        %p174 = pneg %p101
      $region22: #{bottleneck_resblock.6} parent=11 // pred_check_branch
        %176 = sbr.rel (%p174) target = $region24
      $region23: #{bottleneck_resblock.6} parent=11 // pred_region
        _
      $region24: #{bottleneck_resblock.6} parent=11 // pred_fallthru
        _
    $region12: #{bottleneck_resblock.6} parent=5 // pred_fallthru
      _
    %p177 = scmp.lt.s32.totalorder %s12, 2
    // Predicated region
    $region25: #{bottleneck_resblock.6} parent=5 // pred_check
      %p178 = pneg %p177
    $region26: #{bottleneck_resblock.6} parent=5 // pred_check_branch
      %180 = sbr.rel (%p178) target = $region28
    $region27: #{bottleneck_resblock.6} parent=5 // pred_region
      // Predicated region
      $region29: #{bottleneck_resblock.6} parent=27 // pred_check
        %p181 = pneg %p32
      $region30: #{bottleneck_resblock.6} parent=27 // pred_check_branch
        %183 = sbr.rel (%p181) target = $region32
      $region31: #{bottleneck_resblock.6} parent=27 // pred_region
        %p184 = scmp.lt.s32.totalorder %s12, 1
        %s185 = scalar_select %p184, %s12, 1
        %s186 = smul.addr %s185, 32
        %s187 = smul.addr %s186, 8
        %s188 = scalar_lea.vmem %s0, %s187
      $region32: #{bottleneck_resblock.6} parent=27 // pred_fallthru
        _
    $region28: #{bottleneck_resblock.6} parent=5 // pred_fallthru
      _
    %p189 = scmp.le.s32.totalorder 1, %s12
    %p190 = scmp.lt.s32.totalorder %s12, 3
    %p191 = pnand %p189, %p190
    %p192 = pneg %p191
    // Predicated region
    $region33: #{bottleneck_resblock.6} parent=5 // pred_check
      _
    $region34: #{bottleneck_resblock.6} parent=5 // pred_check_branch
      %194 = sbr.rel (%p191) target = $region36
    $region35: #{bottleneck_resblock.6} parent=5 // pred_region
      %s195 = ssub.s32 %s12, 1
      %p196 = scmp.lt.s32.totalorder %s17, 1
      %s197 = scalar_select %p196, %s17, 1
      %s198 = smul.addr %s197, 32
      %s199 = smul.addr %s198, 8
      %s200 = scalar_lea.vmem %s0, %s199
      %p201 = pneg %p38
      %p202 = pneg %p35
      %p203 = pneg %p59
      %p204 = pneg %p56
      %p205 = pneg %p80
      %p206 = pneg %p77
      %p207 = pneg %p101
      %p208 = pneg %p98
      %p209 = pneg %p127
      %p210 = pneg %p124
      %p211 = scmp.lt.s32.totalorder %s17, 1
      %s212 = scalar_select %p211, %s17, 1
      %s213 = smul.addr %s212, 32
      %s214 = smul.addr %s213, 8
      %s215 = scalar_lea.vmem %s4, %s214
      %p216 = pneg %p153
      %p217 = pneg %p150
      %p218 = scmp.lt.s32.totalorder %s17, 1
      %s219 = scalar_select %p218, %s17, 1
      %s220 = smul.addr %s219, 2
      %s221 = scalar_lea.vmem %s5, %s220
      %p222 = scmp.lt.s32.totalorder %s17, 1
      %s223 = scalar_select %p222, %s17, 1
      %s224 = smul.addr %s223, 32
      %s225 = smul.addr %s224, 8
      %s226 = scalar_lea.vmem %s0, %s225
      %p227 = scmp.lt.s32.totalorder %s17, 1
      %s228 = scalar_select %p227, %s17, 1
      %s229 = smul.addr %s228, 32
      %s230 = smul.addr %s229, 8
      %s231 = scalar_lea.vmem %s4, %s230
      %p232 = scmp.lt.s32.totalorder %s17, 1
      %s233 = scalar_select %p232, %s17, 1
      %s234 = smul.addr %s233, 2
      %s235 = scalar_lea.vmem %s5, %s234
      %v236 = vld [vmem:[%s226] sm:$0xff]
      %v237 = vld [vmem:[%s226 + $0x8] sm:$0xff]
      %v238 = vld [vmem:[%s226 + $0x10] sm:$0xff]
      %v239 = vld [vmem:[%s226 + $0x18] sm:$0xff]
      %v240 = vld [vmem:[%s226 + $0x20] sm:$0xff]
      %v241 = vld [vmem:[%s226 + $0x28] sm:$0xff]
      %v242 = vld [vmem:[%s226 + $0x30] sm:$0xff]
      %v243 = vld [vmem:[%s226 + $0x38] sm:$0xff]
      %v244 = vld [vmem:[%s226 + $0x40] sm:$0xff]
      %v245 = vld [vmem:[%s226 + $0x48] sm:$0xff]
      %v246 = vld [vmem:[%s226 + $0x50] sm:$0xff]
      %v247 = vld [vmem:[%s226 + $0x58] sm:$0xff]
      %v248 = vld [vmem:[%s226 + $0x60] sm:$0xff]
      %v249 = vld [vmem:[%s226 + $0x68] sm:$0xff]
      %v250 = vld [vmem:[%s226 + $0x70] sm:$0xff]
      %v251 = vld [vmem:[%s226 + $0x78] sm:$0xff]
      %v252 = vld [vmem:[%s226 + $0x80] sm:$0xff]
      %v253 = vld [vmem:[%s226 + $0x88] sm:$0xff]
      %v254 = vld [vmem:[%s226 + $0x90] sm:$0xff]
      %v255 = vld [vmem:[%s226 + $0x98] sm:$0xff]
      %v256 = vld [vmem:[%s226 + $0xa0] sm:$0xff]
      %v257 = vld [vmem:[%s226 + $0xa8] sm:$0xff]
      %v258 = vld [vmem:[%s226 + $0xb0] sm:$0xff]
      %v259 = vld [vmem:[%s226 + $0xb8] sm:$0xff]
      %v260 = vld [vmem:[%s226 + $0xc0] sm:$0xff]
      %v261 = vld [vmem:[%s226 + $0xc8] sm:$0xff]
      %v262 = vld [vmem:[%s226 + $0xd0] sm:$0xff]
      %v263 = vld [vmem:[%s226 + $0xd8] sm:$0xff]
      %v264 = vld [vmem:[%s226 + $0xe0] sm:$0xff]
      %v265 = vld [vmem:[%s226 + $0xe8] sm:$0xff]
      %v266 = vld [vmem:[%s226 + $0xf0] sm:$0xff]
      %v267 = vld [vmem:[%s226 + $0xf8] sm:$0xff]
      %v268 = vld [vmem:[%s1] sm:$0x1]
      %v270 = vlaneseq
      %v271 = vshrl.u32 %v270, 7
      %v272 = vsub.s32 0, %v271
      %v273 = vrot.slane %v268, %v272
      %v275 = vmul.f32 %v236, %v273
      %v276 = vmul.f32 %v237, %v273
      %v277 = vmul.f32 %v238, %v273
      %v278 = vmul.f32 %v239, %v273
      %v279 = vmul.f32 %v240, %v273
      %v280 = vmul.f32 %v241, %v273
      %v281 = vmul.f32 %v242, %v273
      %v282 = vmul.f32 %v243, %v273
      %v283 = vmul.f32 %v244, %v273
      %v284 = vmul.f32 %v245, %v273
      %v285 = vmul.f32 %v246, %v273
      %v286 = vmul.f32 %v247, %v273
      %v287 = vmul.f32 %v248, %v273
      %v288 = vmul.f32 %v249, %v273
      %v289 = vmul.f32 %v250, %v273
      %v290 = vmul.f32 %v251, %v273
      %v291 = vmul.f32 %v252, %v273
      %v292 = vmul.f32 %v253, %v273
      %v293 = vmul.f32 %v254, %v273
      %v294 = vmul.f32 %v255, %v273
      %v295 = vmul.f32 %v256, %v273
      %v296 = vmul.f32 %v257, %v273
      %v297 = vmul.f32 %v258, %v273
      %v298 = vmul.f32 %v259, %v273
      %v299 = vmul.f32 %v260, %v273
      %v300 = vmul.f32 %v261, %v273
      %v301 = vmul.f32 %v262, %v273
      %v302 = vmul.f32 %v263, %v273
      %v303 = vmul.f32 %v264, %v273
      %v304 = vmul.f32 %v265, %v273
      %v305 = vmul.f32 %v266, %v273
      %v306 = vmul.f32 %v267, %v273
      %v307 = vld [vmem:[%s2] sm:$0x1]
      %v309 = vlaneseq
      %v310 = vshrl.u32 %v309, 7
      %v311 = vsub.s32 0, %v310
      %v312 = vrot.slane %v307, %v311
      %v314 = vadd.f32 %v275, %v312
      %v315 = vadd.f32 %v276, %v312
      %v316 = vadd.f32 %v277, %v312
      %v317 = vadd.f32 %v278, %v312
      %v318 = vadd.f32 %v279, %v312
      %v319 = vadd.f32 %v280, %v312
      %v320 = vadd.f32 %v281, %v312
      %v321 = vadd.f32 %v282, %v312
      %v322 = vadd.f32 %v283, %v312
      %v323 = vadd.f32 %v284, %v312
      %v324 = vadd.f32 %v285, %v312
      %v325 = vadd.f32 %v286, %v312
      %v326 = vadd.f32 %v287, %v312
      %v327 = vadd.f32 %v288, %v312
      %v328 = vadd.f32 %v289, %v312
      %v329 = vadd.f32 %v290, %v312
      %v330 = vadd.f32 %v291, %v312
      %v331 = vadd.f32 %v292, %v312
      %v332 = vadd.f32 %v293, %v312
      %v333 = vadd.f32 %v294, %v312
      %v334 = vadd.f32 %v295, %v312
      %v335 = vadd.f32 %v296, %v312
      %v336 = vadd.f32 %v297, %v312
      %v337 = vadd.f32 %v298, %v312
      %v338 = vadd.f32 %v299, %v312
      %v339 = vadd.f32 %v300, %v312
      %v340 = vadd.f32 %v301, %v312
      %v341 = vadd.f32 %v302, %v312
      %v342 = vadd.f32 %v303, %v312
      %v343 = vadd.f32 %v304, %v312
      %v344 = vadd.f32 %v305, %v312
      %v345 = vadd.f32 %v306, %v312
      %v346 = vmax.f32 %v314, 0.0
      %v347 = vmax.f32 %v315, 0.0
      %v348 = vmax.f32 %v316, 0.0
      %v349 = vmax.f32 %v317, 0.0
      %v350 = vmax.f32 %v318, 0.0
      %v351 = vmax.f32 %v319, 0.0
      %v352 = vmax.f32 %v320, 0.0
      %v353 = vmax.f32 %v321, 0.0
      %v354 = vmax.f32 %v322, 0.0
      %v355 = vmax.f32 %v323, 0.0
      %v356 = vmax.f32 %v324, 0.0
      %v357 = vmax.f32 %v325, 0.0
      %v358 = vmax.f32 %v326, 0.0
      %v359 = vmax.f32 %v327, 0.0
      %v360 = vmax.f32 %v328, 0.0
      %v361 = vmax.f32 %v329, 0.0
      %v362 = vmax.f32 %v330, 0.0
      %v363 = vmax.f32 %v331, 0.0
      %v364 = vmax.f32 %v332, 0.0
      %v365 = vmax.f32 %v333, 0.0
      %v366 = vmax.f32 %v334, 0.0
      %v367 = vmax.f32 %v335, 0.0
      %v368 = vmax.f32 %v336, 0.0
      %v369 = vmax.f32 %v337, 0.0
      %v370 = vmax.f32 %v338, 0.0
      %v371 = vmax.f32 %v339, 0.0
      %v372 = vmax.f32 %v340, 0.0
      %v373 = vmax.f32 %v341, 0.0
      %v374 = vmax.f32 %v342, 0.0
      %v375 = vmax.f32 %v343, 0.0
      %v376 = vmax.f32 %v344, 0.0
      %v377 = vmax.f32 %v345, 0.0
      %v378 = vld [vmem:[%s3] sm:$0xff]
      %v379 = vld [vmem:[%s3 + $0x8] sm:$0xff]
      %v380 = vld [vmem:[%s3 + $0x10] sm:$0xff]
      %v381 = vld [vmem:[%s3 + $0x18] sm:$0xff]
      %v382 = vld [vmem:[%s3 + $0x20] sm:$0xff]
      %v383 = vld [vmem:[%s3 + $0x28] sm:$0xff]
      %v384 = vld [vmem:[%s3 + $0x30] sm:$0xff]
      %v385 = vld [vmem:[%s3 + $0x38] sm:$0xff]
      %v386 = vld [vmem:[%s3 + $0x40] sm:$0xff]
      %v387 = vld [vmem:[%s3 + $0x48] sm:$0xff]
      %v388 = vld [vmem:[%s3 + $0x50] sm:$0xff]
      %v389 = vld [vmem:[%s3 + $0x58] sm:$0xff]
      %v390 = vld [vmem:[%s3 + $0x60] sm:$0xff]
      %v391 = vld [vmem:[%s3 + $0x68] sm:$0xff]
      %v392 = vld [vmem:[%s3 + $0x70] sm:$0xff]
      %v393 = vld [vmem:[%s3 + $0x78] sm:$0xff]
      %394 = vmatprep.subr.mxu0 0.0
      %395 = vmatpush1.msra.mxu0 %v393
      %396 = vmatprep.subr.mxu0 0.0
      %397 = vmatpush1.msra.mxu0 %v392
      %398 = vmatprep.subr.mxu0 0.0
      %399 = vmatpush1.msra.mxu0 %v391
      %400 = vmatprep.subr.mxu0 0.0
      %401 = vmatpush1.msra.mxu0 %v390
      %402 = vmatprep.subr.mxu0 0.0
      %403 = vmatpush1.msra.mxu0 %v389
      %404 = vmatprep.subr.mxu0 0.0
      %405 = vmatpush1.msra.mxu0 %v388
      %406 = vmatprep.subr.mxu0 0.0
      %407 = vmatpush1.msra.mxu0 %v387
      %408 = vmatprep.subr.mxu0 0.0
      %409 = vmatpush1.msra.mxu0 %v386
      %410 = vmatprep.subr.mxu0 0.0
      %411 = vmatpush1.msra.mxu0 %v385
      %412 = vmatprep.subr.mxu0 0.0
      %413 = vmatpush1.msra.mxu0 %v384
      %414 = vmatprep.subr.mxu0 0.0
      %415 = vmatpush1.msra.mxu0 %v383
      %416 = vmatprep.subr.mxu0 0.0
      %417 = vmatpush1.msra.mxu0 %v382
      %418 = vmatprep.subr.mxu0 0.0
      %419 = vmatpush1.msra.mxu0 %v381
      %420 = vmatprep.subr.mxu0 0.0
      %421 = vmatpush1.msra.mxu0 %v380
      %422 = vmatprep.subr.mxu0 0.0
      %423 = vmatpush1.msra.mxu0 %v379
      %424 = vmatprep.subr.mxu0 0.0
      %425 = vmatpush1.msra.mxu0 %v378
      %426 = vmatprep.subr.mxu0 0.0
      %427 = vmatpush2.msra.mxu0 0.0
      %428 = vmatprep.subr.mxu0 0.0
      %429 = vmatpush2.msra.mxu0 0.0
      %430 = vmatprep.subr.mxu0 0.0
      %431 = vmatpush2.msra.mxu0 0.0
      %432 = vmatprep.subr.mxu0 0.0
      %433 = vmatpush2.msra.mxu0 0.0
      %434 = vmatprep.subr.mxu0 0.0
      %435 = vmatpush2.msra.mxu0 0.0
      %436 = vmatprep.subr.mxu0 0.0
      %437 = vmatpush2.msra.mxu0 0.0
      %438 = vmatprep.subr.mxu0 0.0
      %439 = vmatpush2.msra.mxu0 0.0
      %440 = vmatprep.subr.mxu0 0.0
      %441 = vmatpush2.msra.mxu0 0.0
      %442 = vmatprep.subr.mxu0 0.0
      %443 = vmatpush2.msra.mxu0 0.0
      %444 = vmatprep.subr.mxu0 0.0
      %445 = vmatpush2.msra.mxu0 0.0
      %446 = vmatprep.subr.mxu0 0.0
      %447 = vmatpush2.msra.mxu0 0.0
      %448 = vmatprep.subr.mxu0 0.0
      %449 = vmatpush2.msra.mxu0 0.0
      %450 = vmatprep.subr.mxu0 0.0
      %451 = vmatpush2.msra.mxu0 0.0
      %452 = vmatprep.subr.mxu0 0.0
      %453 = vmatpush2.msra.mxu0 0.0
      %454 = vmatprep.subr.mxu0 0.0
      %455 = vmatpush2.msra.mxu0 0.0
      %456 = vmatprep.subr.mxu0 0.0
      %457 = vmatpush2.msra.mxu0 0.0
      %458 = vmatprep.mubr.f32.mxu0 0.0
      %459 = vmatmul.mubr.f32.gmra.mxu0 %v346
      %v460 = vpop.f32.mrf.mxu0
      %v461 = vadd.f32 0.0, %v460
      %v462 = vpop.f32.mrf.mxu0
      %463 = vmatprep.mubr.f32.mxu0 0.0
      %464 = vmatmul.mubr.f32.gmra.mxu0 %v347
      %v465 = vpop.f32.mrf.mxu0
      %v466 = vadd.f32 0.0, %v465
      %v467 = vpop.f32.mrf.mxu0
      %468 = vmatprep.mubr.f32.mxu0 0.0
      %469 = vmatmul.mubr.f32.gmra.mxu0 %v348
      %v470 = vpop.f32.mrf.mxu0
      %v471 = vadd.f32 0.0, %v470
      %v472 = vpop.f32.mrf.mxu0
      %473 = vmatprep.mubr.f32.mxu0 0.0
      %474 = vmatmul.mubr.f32.gmra.mxu0 %v349
      %v475 = vpop.f32.mrf.mxu0
      %v476 = vadd.f32 0.0, %v475
      %v477 = vpop.f32.mrf.mxu0
      %478 = vmatprep.mubr.f32.mxu0 0.0
      %479 = vmatmul.mubr.f32.gmra.mxu0 %v350
      %v480 = vpop.f32.mrf.mxu0
      %v481 = vadd.f32 0.0, %v480
      %v482 = vpop.f32.mrf.mxu0
      %483 = vmatprep.mubr.f32.mxu0 0.0
      %484 = vmatmul.mubr.f32.gmra.mxu0 %v351
      %v485 = vpop.f32.mrf.mxu0
      %v486 = vadd.f32 0.0, %v485
      %v487 = vpop.f32.mrf.mxu0
      %488 = vmatprep.mubr.f32.mxu0 0.0
      %489 = vmatmul.mubr.f32.gmra.mxu0 %v352
      %v490 = vpop.f32.mrf.mxu0
      %v491 = vadd.f32 0.0, %v490
      %v492 = vpop.f32.mrf.mxu0
      %493 = vmatprep.mubr.f32.mxu0 0.0
      %494 = vmatmul.mubr.f32.gmra.mxu0 %v353
      %v495 = vpop.f32.mrf.mxu0
      %v496 = vadd.f32 0.0, %v495
      %v497 = vpop.f32.mrf.mxu0
      %498 = vmatprep.mubr.f32.mxu0 0.0
      %499 = vmatmul.mubr.f32.gmra.mxu0 %v354
      %v500 = vpop.f32.mrf.mxu0
      %v501 = vadd.f32 0.0, %v500
      %v502 = vpop.f32.mrf.mxu0
      %503 = vmatprep.mubr.f32.mxu0 0.0
      %504 = vmatmul.mubr.f32.gmra.mxu0 %v355
      %v505 = vpop.f32.mrf.mxu0
      %v506 = vadd.f32 0.0, %v505
      %v507 = vpop.f32.mrf.mxu0
      %508 = vmatprep.mubr.f32.mxu0 0.0
      %509 = vmatmul.mubr.f32.gmra.mxu0 %v356
      %v510 = vpop.f32.mrf.mxu0
      %v511 = vadd.f32 0.0, %v510
      %v512 = vpop.f32.mrf.mxu0
      %513 = vmatprep.mubr.f32.mxu0 0.0
      %514 = vmatmul.mubr.f32.gmra.mxu0 %v357
      %v515 = vpop.f32.mrf.mxu0
      %v516 = vadd.f32 0.0, %v515
      %v517 = vpop.f32.mrf.mxu0
      %518 = vmatprep.mubr.f32.mxu0 0.0
      %519 = vmatmul.mubr.f32.gmra.mxu0 %v358
      %v520 = vpop.f32.mrf.mxu0
      %v521 = vadd.f32 0.0, %v520
      %v522 = vpop.f32.mrf.mxu0
      %523 = vmatprep.mubr.f32.mxu0 0.0
      %524 = vmatmul.mubr.f32.gmra.mxu0 %v359
      %v525 = vpop.f32.mrf.mxu0
      %v526 = vadd.f32 0.0, %v525
      %v527 = vpop.f32.mrf.mxu0
      %528 = vmatprep.mubr.f32.mxu0 0.0
      %529 = vmatmul.mubr.f32.gmra.mxu0 %v360
      %v530 = vpop.f32.mrf.mxu0
      %v531 = vadd.f32 0.0, %v530
      %v532 = vpop.f32.mrf.mxu0
      %533 = vmatprep.mubr.f32.mxu0 0.0
      %534 = vmatmul.mubr.f32.gmra.mxu0 %v361
      %v535 = vpop.f32.mrf.mxu0
      %v536 = vadd.f32 0.0, %v535
      %v537 = vpop.f32.mrf.mxu0
      %538 = vmatprep.mubr.f32.mxu0 0.0
      %539 = vmatmul.mubr.f32.gmra.mxu0 %v362
      %v540 = vpop.f32.mrf.mxu0
      %v541 = vadd.f32 0.0, %v540
      %v542 = vpop.f32.mrf.mxu0
      %543 = vmatprep.mubr.f32.mxu0 0.0
      %544 = vmatmul.mubr.f32.gmra.mxu0 %v363
      %v545 = vpop.f32.mrf.mxu0
      %v546 = vadd.f32 0.0, %v545
      %v547 = vpop.f32.mrf.mxu0
      %548 = vmatprep.mubr.f32.mxu0 0.0
      %549 = vmatmul.mubr.f32.gmra.mxu0 %v364
      %v550 = vpop.f32.mrf.mxu0
      %v551 = vadd.f32 0.0, %v550
      %v552 = vpop.f32.mrf.mxu0
      %553 = vmatprep.mubr.f32.mxu0 0.0
      %554 = vmatmul.mubr.f32.gmra.mxu0 %v365
      %v555 = vpop.f32.mrf.mxu0
      %v556 = vadd.f32 0.0, %v555
      %v557 = vpop.f32.mrf.mxu0
      %558 = vmatprep.mubr.f32.mxu0 0.0
      %559 = vmatmul.mubr.f32.gmra.mxu0 %v366
      %v560 = vpop.f32.mrf.mxu0
      %v561 = vadd.f32 0.0, %v560
      %v562 = vpop.f32.mrf.mxu0
      %563 = vmatprep.mubr.f32.mxu0 0.0
      %564 = vmatmul.mubr.f32.gmra.mxu0 %v367
      %v565 = vpop.f32.mrf.mxu0
      %v566 = vadd.f32 0.0, %v565
      %v567 = vpop.f32.mrf.mxu0
      %568 = vmatprep.mubr.f32.mxu0 0.0
      %569 = vmatmul.mubr.f32.gmra.mxu0 %v368
      %v570 = vpop.f32.mrf.mxu0
      %v571 = vadd.f32 0.0, %v570
      %v572 = vpop.f32.mrf.mxu0
      %573 = vmatprep.mubr.f32.mxu0 0.0
      %574 = vmatmul.mubr.f32.gmra.mxu0 %v369
      %v575 = vpop.f32.mrf.mxu0
      %v576 = vadd.f32 0.0, %v575
      %v577 = vpop.f32.mrf.mxu0
      %578 = vmatprep.mubr.f32.mxu0 0.0
      %579 = vmatmul.mubr.f32.gmra.mxu0 %v370
      %v580 = vpop.f32.mrf.mxu0
      %v581 = vadd.f32 0.0, %v580
      %v582 = vpop.f32.mrf.mxu0
      %583 = vmatprep.mubr.f32.mxu0 0.0
      %584 = vmatmul.mubr.f32.gmra.mxu0 %v371
      %v585 = vpop.f32.mrf.mxu0
      %v586 = vadd.f32 0.0, %v585
      %v587 = vpop.f32.mrf.mxu0
      %588 = vmatprep.mubr.f32.mxu0 0.0
      %589 = vmatmul.mubr.f32.gmra.mxu0 %v372
      %v590 = vpop.f32.mrf.mxu0
      %v591 = vadd.f32 0.0, %v590
      %v592 = vpop.f32.mrf.mxu0
      %593 = vmatprep.mubr.f32.mxu0 0.0
      %594 = vmatmul.mubr.f32.gmra.mxu0 %v373
      %v595 = vpop.f32.mrf.mxu0
      %v596 = vadd.f32 0.0, %v595
      %v597 = vpop.f32.mrf.mxu0
      %598 = vmatprep.mubr.f32.mxu0 0.0
      %599 = vmatmul.mubr.f32.gmra.mxu0 %v374
      %v600 = vpop.f32.mrf.mxu0
      %v601 = vadd.f32 0.0, %v600
      %v602 = vpop.f32.mrf.mxu0
      %603 = vmatprep.mubr.f32.mxu0 0.0
      %604 = vmatmul.mubr.f32.gmra.mxu0 %v375
      %v605 = vpop.f32.mrf.mxu0
      %v606 = vadd.f32 0.0, %v605
      %v607 = vpop.f32.mrf.mxu0
      %608 = vmatprep.mubr.f32.mxu0 0.0
      %609 = vmatmul.mubr.f32.gmra.mxu0 %v376
      %v610 = vpop.f32.mrf.mxu0
      %v611 = vadd.f32 0.0, %v610
      %v612 = vpop.f32.mrf.mxu0
      %613 = vmatprep.mubr.f32.mxu0 0.0
      %614 = vmatmul.mubr.f32.gmra.mxu0 %v377
      %v615 = vpop.f32.mrf.mxu0
      %v616 = vadd.f32 0.0, %v615
      %v617 = vpop.f32.mrf.mxu0
      %618 = vdwg.mxu0
      %619 = vst [vmem:[%s231] sm:$0xff] %v461
      %620 = vst [vmem:[%s231 + $0x8] sm:$0xff] %v466
      %621 = vst [vmem:[%s231 + $0x10] sm:$0xff] %v471
      %622 = vst [vmem:[%s231 + $0x18] sm:$0xff] %v476
      %623 = vst [vmem:[%s231 + $0x20] sm:$0xff] %v481
      %624 = vst [vmem:[%s231 + $0x28] sm:$0xff] %v486
      %625 = vst [vmem:[%s231 + $0x30] sm:$0xff] %v491
      %626 = vst [vmem:[%s231 + $0x38] sm:$0xff] %v496
      %627 = vst [vmem:[%s231 + $0x40] sm:$0xff] %v501
      %628 = vst [vmem:[%s231 + $0x48] sm:$0xff] %v506
      %629 = vst [vmem:[%s231 + $0x50] sm:$0xff] %v511
      %630 = vst [vmem:[%s231 + $0x58] sm:$0xff] %v516
      %631 = vst [vmem:[%s231 + $0x60] sm:$0xff] %v521
      %632 = vst [vmem:[%s231 + $0x68] sm:$0xff] %v526
      %633 = vst [vmem:[%s231 + $0x70] sm:$0xff] %v531
      %634 = vst [vmem:[%s231 + $0x78] sm:$0xff] %v536
      %635 = vst [vmem:[%s231 + $0x80] sm:$0xff] %v541
      %636 = vst [vmem:[%s231 + $0x88] sm:$0xff] %v546
      %637 = vst [vmem:[%s231 + $0x90] sm:$0xff] %v551
      %638 = vst [vmem:[%s231 + $0x98] sm:$0xff] %v556
      %639 = vst [vmem:[%s231 + $0xa0] sm:$0xff] %v561
      %640 = vst [vmem:[%s231 + $0xa8] sm:$0xff] %v566
      %641 = vst [vmem:[%s231 + $0xb0] sm:$0xff] %v571
      %642 = vst [vmem:[%s231 + $0xb8] sm:$0xff] %v576
      %643 = vst [vmem:[%s231 + $0xc0] sm:$0xff] %v581
      %644 = vst [vmem:[%s231 + $0xc8] sm:$0xff] %v586
      %645 = vst [vmem:[%s231 + $0xd0] sm:$0xff] %v591
      %646 = vst [vmem:[%s231 + $0xd8] sm:$0xff] %v596
      %647 = vst [vmem:[%s231 + $0xe0] sm:$0xff] %v601
      %648 = vst [vmem:[%s231 + $0xe8] sm:$0xff] %v606
      %649 = vst [vmem:[%s231 + $0xf0] sm:$0xff] %v611
      %650 = vst [vmem:[%s231 + $0xf8] sm:$0xff] %v616
      %v651 = vadd.f32 %v461, %v466
      %v652 = vadd.f32 %v651, %v471
      %v653 = vadd.f32 %v652, %v476
      %v654 = vadd.f32 %v653, %v481
      %v655 = vadd.f32 %v654, %v486
      %v656 = vadd.f32 %v655, %v491
      %v657 = vadd.f32 %v656, %v496
      %v658 = vadd.f32 %v657, %v501
      %v659 = vadd.f32 %v658, %v506
      %v660 = vadd.f32 %v659, %v511
      %v661 = vadd.f32 %v660, %v516
      %v662 = vadd.f32 %v661, %v521
      %v663 = vadd.f32 %v662, %v526
      %v664 = vadd.f32 %v663, %v531
      %v665 = vadd.f32 %v664, %v536
      %v666 = vadd.f32 %v665, %v541
      %v667 = vadd.f32 %v666, %v546
      %v668 = vadd.f32 %v667, %v551
      %v669 = vadd.f32 %v668, %v556
      %v670 = vadd.f32 %v669, %v561
      %v671 = vadd.f32 %v670, %v566
      %v672 = vadd.f32 %v671, %v571
      %v673 = vadd.f32 %v672, %v576
      %v674 = vadd.f32 %v673, %v581
      %v675 = vadd.f32 %v674, %v586
      %v676 = vadd.f32 %v675, %v591
      %v677 = vadd.f32 %v676, %v596
      %v678 = vadd.f32 %v677, %v601
      %v679 = vadd.f32 %v678, %v606
      %v680 = vadd.f32 %v679, %v611
      %v681 = vadd.f32 %v680, %v616
      %v682 = vrot.slane %v681, 4
      %v683 = vadd.f32 %v681, %v682
      %v684 = vrot.slane %v683, 2
      %v685 = vadd.f32 %v683, %v684
      %v686 = vrot.slane %v685, 1
      %v687 = vadd.f32 %v685, %v686
      %v688 = vmul.f32 %v461, %v461
      %v689 = vmul.f32 %v466, %v466
      %v690 = vmul.f32 %v471, %v471
      %v691 = vmul.f32 %v476, %v476
      %v692 = vmul.f32 %v481, %v481
      %v693 = vmul.f32 %v486, %v486
      %v694 = vmul.f32 %v491, %v491
      %v695 = vmul.f32 %v496, %v496
      %v696 = vmul.f32 %v501, %v501
      %v697 = vmul.f32 %v506, %v506
      %v698 = vmul.f32 %v511, %v511
      %v699 = vmul.f32 %v516, %v516
      %v700 = vmul.f32 %v521, %v521
      %v701 = vmul.f32 %v526, %v526
      %v702 = vmul.f32 %v531, %v531
      %v703 = vmul.f32 %v536, %v536
      %v704 = vmul.f32 %v541, %v541
      %v705 = vmul.f32 %v546, %v546
      %v706 = vmul.f32 %v551, %v551
      %v707 = vmul.f32 %v556, %v556
      %v708 = vmul.f32 %v561, %v561
      %v709 = vmul.f32 %v566, %v566
      %v710 = vmul.f32 %v571, %v571
      %v711 = vmul.f32 %v576, %v576
      %v712 = vmul.f32 %v581, %v581
      %v713 = vmul.f32 %v586, %v586
      %v714 = vmul.f32 %v591, %v591
      %v715 = vmul.f32 %v596, %v596
      %v716 = vmul.f32 %v601, %v601
      %v717 = vmul.f32 %v606, %v606
      %v718 = vmul.f32 %v611, %v611
      %v719 = vmul.f32 %v616, %v616
      %v720 = vadd.f32 %v688, %v689
      %v721 = vadd.f32 %v720, %v690
      %v722 = vadd.f32 %v721, %v691
      %v723 = vadd.f32 %v722, %v692
      %v724 = vadd.f32 %v723, %v693
      %v725 = vadd.f32 %v724, %v694
      %v726 = vadd.f32 %v725, %v695
      %v727 = vadd.f32 %v726, %v696
      %v728 = vadd.f32 %v727, %v697
      %v729 = vadd.f32 %v728, %v698
      %v730 = vadd.f32 %v729, %v699
      %v731 = vadd.f32 %v730, %v700
      %v732 = vadd.f32 %v731, %v701
      %v733 = vadd.f32 %v732, %v702
      %v734 = vadd.f32 %v733, %v703
      %v735 = vadd.f32 %v734, %v704
      %v736 = vadd.f32 %v735, %v705
      %v737 = vadd.f32 %v736, %v706
      %v738 = vadd.f32 %v737, %v707
      %v739 = vadd.f32 %v738, %v708
      %v740 = vadd.f32 %v739, %v709
      %v741 = vadd.f32 %v740, %v710
      %v742 = vadd.f32 %v741, %v711
      %v743 = vadd.f32 %v742, %v712
      %v744 = vadd.f32 %v743, %v713
      %v745 = vadd.f32 %v744, %v714
      %v746 = vadd.f32 %v745, %v715
      %v747 = vadd.f32 %v746, %v716
      %v748 = vadd.f32 %v747, %v717
      %v749 = vadd.f32 %v748, %v718
      %v750 = vadd.f32 %v749, %v719
      %v751 = vrot.slane %v750, 4
      %v752 = vadd.f32 %v750, %v751
      %v753 = vrot.slane %v752, 2
      %v754 = vadd.f32 %v752, %v753
      %v755 = vrot.slane %v754, 1
      %v756 = vadd.f32 %v754, %v755
      %vm757 = vcmask 1040384
      %v758 = vsel %vm757, %v687, %v756
      %759 = vst [vmem:[%s235] sm:$0x3] %v758
      %p760 = scmp.lt.s32.totalorder %s17, 1
      %s761 = scalar_select %p760, %s17, 1
      %s762 = smul.addr %s761, 32
      %s763 = smul.addr %s762, 8
      %s764 = scalar_lea.vmem %s4, %s763
      %p765 = scmp.lt.s32.totalorder %s17, 1
      %s766 = scalar_select %p765, %s17, 1
      %s767 = smul.addr %s766, 2
      %s768 = scalar_lea.vmem %s5, %s767
      // Predicated region
      $region37: #{bottleneck_resblock.6} parent=35 // pred_check
        %p769 = pneg %p124
      $region38: #{bottleneck_resblock.6} parent=35 // pred_check_branch
        %771 = sbr.rel (%p769) target = $region40
      $region39: #{bottleneck_resblock.6} parent=35 // pred_region
        _
      $region40: #{bottleneck_resblock.6} parent=35 // pred_fallthru
        _
      // Predicated region
      $region41: #{bottleneck_resblock.6} parent=35 // pred_check
        %p772 = pneg %p150
      $region42: #{bottleneck_resblock.6} parent=35 // pred_check_branch
        %774 = sbr.rel (%p772) target = $region44
      $region43: #{bottleneck_resblock.6} parent=35 // pred_region
        _
      $region44: #{bottleneck_resblock.6} parent=35 // pred_fallthru
        _
    $region36: #{bottleneck_resblock.6} parent=5 // pred_fallthru
      _
    %p775 = scmp.le.s32.totalorder 2, %s12
    // Predicated region
    $region45: #{bottleneck_resblock.6} parent=5 // pred_check
      %p776 = pneg %p775
    $region46: #{bottleneck_resblock.6} parent=5 // pred_check_branch
      %778 = sbr.rel (%p776) target = $region48
    $region47: #{bottleneck_resblock.6} parent=5 // pred_region
      %s779 = ssub.s32 %s12, 2
      // Predicated region
      $region49: #{bottleneck_resblock.6} parent=47 // pred_check
        %p780 = pneg %p130
      $region50: #{bottleneck_resblock.6} parent=47 // pred_check_branch
        %782 = sbr.rel (%p780) target = $region52
      $region51: #{bottleneck_resblock.6} parent=47 // pred_region
        %p783 = scmp.lt.s32.totalorder %s18, 1
        %s784 = scalar_select %p783, %s18, 1
        %s785 = smul.addr %s784, 32
        %s786 = smul.addr %s785, 8
        %s787 = scalar_lea.vmem %s4, %s786
      $region52: #{bottleneck_resblock.6} parent=47 // pred_fallthru
        _
      // Predicated region
      $region53: #{bottleneck_resblock.6} parent=47 // pred_check
        %p788 = pneg %p156
      $region54: #{bottleneck_resblock.6} parent=47 // pred_check_branch
        %790 = sbr.rel (%p788) target = $region56
      $region55: #{bottleneck_resblock.6} parent=47 // pred_region
        %p791 = scmp.lt.s32.totalorder %s18, 1
        %s792 = scalar_select %p791, %s18, 1
        %s793 = smul.addr %s792, 2
        %s794 = scalar_lea.vmem %s5, %s793
      $region56: #{bottleneck_resblock.6} parent=47 // pred_fallthru
        _
    $region48: #{bottleneck_resblock.6} parent=5 // pred_fallthru
      _
  $region6: #{bottleneck_resblock.6} parent=0 // loop_footer
    %s16 = sadd.s32 1, %s12
  $region7: #{bottleneck_resblock.6} parent=0 // loop_footer_branch
    %11 = sbr.rel target = $region3
  $region8: #{bottleneck_resblock.6} parent=0 // loop_exit
    _

// kernel: bottleneck_resblock.4
$region0: #{bottleneck_resblock.4}
  #allocation0 [shape = 'u32[]', space=smem, size = 0x4, offset = 0x4, fixed_abs, tag = 'smem constant byte address 0x4 - core index']
  #allocation1 [shape = 'u32[144,128]{1,0:T(1,128)}', space=vmem, size = 0x12000, scoped, tag = 'internal scratch']
  %s0 = inlined_call_operand.vmem [shape: f32[2,16,16,128], index: 0, kind: input, shape index: {}]
  %s1 = inlined_call_operand.vmem [shape: f32[128,128], index: 1, kind: input, shape index: {}]
  %s2 = inlined_call_operand.vmem [shape: f32[128,128], index: 2, kind: input, shape index: {}]
  %s3 = inlined_call_operand.vmem [shape: f32[2,16,16,128], index: 3, kind: output, shape index: {0}]
  %s4 = inlined_call_operand.vmem [shape: f32[2,16,16,128], index: 4, kind: output, shape index: {1}]
  %s5 = inlined_call_operand.vmem [shape: f32[2,2,128], index: 5, kind: output, shape index: {2}]
  %s6 = inlined_call_operand.vmem [shape: f32[2,2,128], index: 6, kind: output, shape index: {3}]
  %7 = xla_tuple %s3, %s4, %s5, %s6
  %s8 = sld [smem:[#allocation0]]
  $region69: #{bottleneck_resblock.4} parent=0
    _
  %s10 = ssub.s32 1, %s8
  %s11 = scalar_select 0, %s10, %s8
  loop: start=0, step=1, limit=4
  $region2: #{bottleneck_resblock.4} parent=0 // loop_pre_header
    _
  $region3: #{bottleneck_resblock.4} parent=0 // loop_header
    %s13 = sphi 0, %s17
    %p14 = scmp.ge.s32.totalorder %s13, 4
    %s23 = sphi 0, %s25
    %s26 = sphi 0, %s23
    %s27 = sphi 0, %s26
    %s43 = sphi 0, %s27
    %s47 = sphi 0, %s47
    %s49 = sphi 0, %s47
    %s50 = sphi 0, %s49
    %s64 = sphi 0, %s50
    %s68 = sphi 0, %s68
    %s70 = sphi 0, %s68
    %s71 = sphi 0, %s70
    %s85 = sphi 0, %s71
    %s91 = sphi 0, %s93
    %s94 = sphi 0, %s91
    %s95 = sphi 0, %s94
    %s111 = sphi 0, %s95
    %s117 = sphi 0, %s119
    %s120 = sphi 0, %s117
    %s121 = sphi 0, %s120
    %s137 = sphi 0, %s121
    %s143 = sphi 0, %s145
    %s146 = sphi 0, %s143
    %s147 = sphi 0, %s146
    %s163 = sphi 0, %s147
    %s169 = sphi 0, %s171
    %s172 = sphi 0, %s169
    %s173 = sphi 0, %s172
    %s189 = sphi 0, %s173
  $region4: #{bottleneck_resblock.4} parent=0 // loop_header_branch
    %16 = sbr.rel (%p14) target = $region8
  $region5: #{bottleneck_resblock.4} parent=0 // loop_body
    %s18 = ssub.s32 %s13, 1
    %s19 = ssub.s32 %s13, 2
    %s20 = sadd.s32 %s13, 1
    %s21 = ssub.s32 %s13, %s20
    %p22 = scmp.eq.s32.totalorder %s21, 0
    %s24 = sadd.s32 %s23, 1
    %s25 = scalar_select %p22, %s23, %s24
    %p28 = pneg %p22
    %p29 = scmp.eq.s32.totalorder %s13, 1
    %p30 = por %p28, %p29
    %p31 = scmp.ne.s32.totalorder %s23, %s26
    %p32 = scmp.eq.s32.totalorder %s13, 0
    %p33 = por %p31, %p32
    %p34 = scmp.ne.s32.totalorder %s23, %s26
    %p35 = scmp.eq.s32.totalorder %s18, 1
    %p36 = por %p34, %p35
    %p37 = scmp.ne.s32.totalorder %s26, %s27
    %p38 = scmp.eq.s32.totalorder %s18, 0
    %p39 = por %p37, %p38
    %p40 = scmp.ne.s32.totalorder %s26, %s27
    %p41 = scmp.eq.s32.totalorder %s19, 1
    %p42 = por %p40, %p41
    %p44 = scmp.ne.s32.totalorder %s27, %s43
    %p45 = scmp.eq.s32.totalorder %s19, 0
    %p46 = por %p44, %p45
    %s48 = sadd.s32 %s47, 1
    %p51 = scmp.eq.s32.totalorder %s13, 1
    %p52 = scmp.ne.s32.totalorder %s47, %s49
    %p53 = scmp.eq.s32.totalorder %s13, 0
    %p54 = por %p52, %p53
    %p55 = scmp.ne.s32.totalorder %s47, %s49
    %p56 = scmp.eq.s32.totalorder %s18, 1
    %p57 = por %p55, %p56
    %p58 = scmp.ne.s32.totalorder %s49, %s50
    %p59 = scmp.eq.s32.totalorder %s18, 0
    %p60 = por %p58, %p59
    %p61 = scmp.ne.s32.totalorder %s49, %s50
    %p62 = scmp.eq.s32.totalorder %s19, 1
    %p63 = por %p61, %p62
    %p65 = scmp.ne.s32.totalorder %s50, %s64
    %p66 = scmp.eq.s32.totalorder %s19, 0
    %p67 = por %p65, %p66
    %s69 = sadd.s32 %s68, 1
    %p72 = scmp.eq.s32.totalorder %s13, 1
    %p73 = scmp.ne.s32.totalorder %s68, %s70
    %p74 = scmp.eq.s32.totalorder %s13, 0
    %p75 = por %p73, %p74
    %p76 = scmp.ne.s32.totalorder %s68, %s70
    %p77 = scmp.eq.s32.totalorder %s18, 1
    %p78 = por %p76, %p77
    %p79 = scmp.ne.s32.totalorder %s70, %s71
    %p80 = scmp.eq.s32.totalorder %s18, 0
    %p81 = por %p79, %p80
    %p82 = scmp.ne.s32.totalorder %s70, %s71
    %p83 = scmp.eq.s32.totalorder %s19, 1
    %p84 = por %p82, %p83
    %p86 = scmp.ne.s32.totalorder %s71, %s85
    %p87 = scmp.eq.s32.totalorder %s19, 0
    %p88 = por %p86, %p87
    %s89 = ssub.s32 %s13, %s20
    %p90 = scmp.eq.s32.totalorder %s89, 0
    %s92 = sadd.s32 %s91, 1
    %s93 = scalar_select %p90, %s91, %s92
    %p96 = pneg %p90
    %p97 = scmp.eq.s32.totalorder %s13, 1
    %p98 = por %p96, %p97
    %p99 = scmp.ne.s32.totalorder %s91, %s94
    %p100 = scmp.eq.s32.totalorder %s13, 0
    %p101 = por %p99, %p100
    %p102 = scmp.ne.s32.totalorder %s91, %s94
    %p103 = scmp.eq.s32.totalorder %s18, 1
    %p104 = por %p102, %p103
    %p105 = scmp.ne.s32.totalorder %s94, %s95
    %p106 = scmp.eq.s32.totalorder %s18, 0
    %p107 = por %p105, %p106
    %p108 = scmp.ne.s32.totalorder %s94, %s95
    %p109 = scmp.eq.s32.totalorder %s19, 1
    %p110 = por %p108, %p109
    %p112 = scmp.ne.s32.totalorder %s95, %s111
    %p113 = scmp.eq.s32.totalorder %s19, 0
    %p114 = por %p112, %p113
    %s115 = ssub.s32 %s13, %s20
    %p116 = scmp.eq.s32.totalorder %s115, 0
    %s118 = sadd.s32 %s117, 1
    %s119 = scalar_select %p116, %s117, %s118
    %p122 = pneg %p116
    %p123 = scmp.eq.s32.totalorder %s13, 1
    %p124 = por %p122, %p123
    %p125 = scmp.ne.s32.totalorder %s117, %s120
    %p126 = scmp.eq.s32.totalorder %s13, 0
    %p127 = por %p125, %p126
    %p128 = scmp.ne.s32.totalorder %s117, %s120
    %p129 = scmp.eq.s32.totalorder %s18, 1
    %p130 = por %p128, %p129
    %p131 = scmp.ne.s32.totalorder %s120, %s121
    %p132 = scmp.eq.s32.totalorder %s18, 0
    %p133 = por %p131, %p132
    %p134 = scmp.ne.s32.totalorder %s120, %s121
    %p135 = scmp.eq.s32.totalorder %s19, 1
    %p136 = por %p134, %p135
    %p138 = scmp.ne.s32.totalorder %s121, %s137
    %p139 = scmp.eq.s32.totalorder %s19, 0
    %p140 = por %p138, %p139
    %s141 = ssub.s32 %s13, %s20
    %p142 = scmp.eq.s32.totalorder %s141, 0
    %s144 = sadd.s32 %s143, 1
    %s145 = scalar_select %p142, %s143, %s144
    %p148 = pneg %p142
    %p149 = scmp.eq.s32.totalorder %s13, 1
    %p150 = por %p148, %p149
    %p151 = scmp.ne.s32.totalorder %s143, %s146
    %p152 = scmp.eq.s32.totalorder %s13, 0
    %p153 = por %p151, %p152
    %p154 = scmp.ne.s32.totalorder %s143, %s146
    %p155 = scmp.eq.s32.totalorder %s18, 1
    %p156 = por %p154, %p155
    %p157 = scmp.ne.s32.totalorder %s146, %s147
    %p158 = scmp.eq.s32.totalorder %s18, 0
    %p159 = por %p157, %p158
    %p160 = scmp.ne.s32.totalorder %s146, %s147
    %p161 = scmp.eq.s32.totalorder %s19, 1
    %p162 = por %p160, %p161
    %p164 = scmp.ne.s32.totalorder %s147, %s163
    %p165 = scmp.eq.s32.totalorder %s19, 0
    %p166 = por %p164, %p165
    %s167 = ssub.s32 %s13, %s20
    %p168 = scmp.eq.s32.totalorder %s167, 0
    %s170 = sadd.s32 %s169, 1
    %s171 = scalar_select %p168, %s169, %s170
    %p174 = pneg %p168
    %p175 = scmp.eq.s32.totalorder %s13, 1
    %p176 = por %p174, %p175
    %p177 = scmp.ne.s32.totalorder %s169, %s172
    %p178 = scmp.eq.s32.totalorder %s13, 0
    %p179 = por %p177, %p178
    %p180 = scmp.ne.s32.totalorder %s169, %s172
    %p181 = scmp.eq.s32.totalorder %s18, 1
    %p182 = por %p180, %p181
    %p183 = scmp.ne.s32.totalorder %s172, %s173
    %p184 = scmp.eq.s32.totalorder %s18, 0
    %p185 = por %p183, %p184
    %p186 = scmp.ne.s32.totalorder %s172, %s173
    %p187 = scmp.eq.s32.totalorder %s19, 1
    %p188 = por %p186, %p187
    %p190 = scmp.ne.s32.totalorder %s173, %s189
    %p191 = scmp.eq.s32.totalorder %s19, 0
    %p192 = por %p190, %p191
    %p193 = scmp.le.s32.totalorder 1, %s13
    %p194 = scmp.lt.s32.totalorder %s13, 3
    %p195 = pnand %p193, %p194
    %p196 = pneg %p195
    // Predicated region
    $region9: #{bottleneck_resblock.4} parent=5 // pred_check
      _
    $region10: #{bottleneck_resblock.4} parent=5 // pred_check_branch
      %198 = sbr.rel (%p195) target = $region12
    $region11: #{bottleneck_resblock.4} parent=5 // pred_region
      %s199 = ssub.s32 %s13, 1
      // Predicated region
      $region13: #{bottleneck_resblock.4} parent=11 // pred_check
        %p200 = pneg %p60
      $region14: #{bottleneck_resblock.4} parent=11 // pred_check_branch
        %202 = sbr.rel (%p200) target = $region16
      $region15: #{bottleneck_resblock.4} parent=11 // pred_region
        _
      $region16: #{bottleneck_resblock.4} parent=11 // pred_fallthru
        _
      // Predicated region
      $region17: #{bottleneck_resblock.4} parent=11 // pred_check
        %p203 = pneg %p81
      $region18: #{bottleneck_resblock.4} parent=11 // pred_check_branch
        %205 = sbr.rel (%p203) target = $region20
      $region19: #{bottleneck_resblock.4} parent=11 // pred_region
        _
      $region20: #{bottleneck_resblock.4} parent=11 // pred_fallthru
        _
    $region12: #{bottleneck_resblock.4} parent=5 // pred_fallthru
      _
    %p206 = scmp.lt.s32.totalorder %s13, 2
    // Predicated region
    $region21: #{bottleneck_resblock.4} parent=5 // pred_check
      %p207 = pneg %p206
    $region22: #{bottleneck_resblock.4} parent=5 // pred_check_branch
      %209 = sbr.rel (%p207) target = $region24
    $region23: #{bottleneck_resblock.4} parent=5 // pred_region
      // Predicated region
      $region25: #{bottleneck_resblock.4} parent=23 // pred_check
        %p210 = pneg %p33
      $region26: #{bottleneck_resblock.4} parent=23 // pred_check_branch
        %212 = sbr.rel (%p210) target = $region28
      $region27: #{bottleneck_resblock.4} parent=23 // pred_region
        %p213 = scmp.lt.s32.totalorder %s13, 1
        %s214 = scalar_select %p213, %s13, 1
        %s215 = smul.addr %s214, 32
        %s216 = smul.addr %s215, 8
        %s217 = scalar_lea.vmem %s0, %s216
      $region28: #{bottleneck_resblock.4} parent=23 // pred_fallthru
        _
    $region24: #{bottleneck_resblock.4} parent=5 // pred_fallthru
      _
    %p218 = scmp.le.s32.totalorder 1, %s13
    %p219 = scmp.lt.s32.totalorder %s13, 3
    %p220 = pnand %p218, %p219
    %p221 = pneg %p220
    // Predicated region
    $region29: #{bottleneck_resblock.4} parent=5 // pred_check
      _
    $region30: #{bottleneck_resblock.4} parent=5 // pred_check_branch
      %223 = sbr.rel (%p220) target = $region32
    $region31: #{bottleneck_resblock.4} parent=5 // pred_region
      %s224 = ssub.s32 %s13, 1
      %p225 = scmp.lt.s32.totalorder %s18, 1
      %s226 = scalar_select %p225, %s18, 1
      %s227 = smul.addr %s226, 32
      %s228 = smul.addr %s227, 8
      %s229 = scalar_lea.vmem %s0, %s228
      %p230 = pneg %p39
      %p231 = pneg %p36
      %p232 = pneg %p60
      %p233 = pneg %p57
      %p234 = pneg %p81
      %p235 = pneg %p78
      %p236 = pneg %p107
      %p237 = pneg %p104
      %p238 = scmp.lt.s32.totalorder %s18, 1
      %s239 = scalar_select %p238, %s18, 1
      %s240 = smul.addr %s239, 32
      %s241 = smul.addr %s240, 8
      %s242 = scalar_lea.vmem %s3, %s241
      %p243 = pneg %p133
      %p244 = pneg %p130
      %p245 = scmp.lt.s32.totalorder %s18, 1
      %s246 = scalar_select %p245, %s18, 1
      %s247 = smul.addr %s246, 32
      %s248 = smul.addr %s247, 8
      %s249 = scalar_lea.vmem %s4, %s248
      %p250 = pneg %p159
      %p251 = pneg %p156
      %p252 = scmp.lt.s32.totalorder %s18, 1
      %s253 = scalar_select %p252, %s18, 1
      %s254 = smul.addr %s253, 2
      %s255 = scalar_lea.vmem %s5, %s254
      %p256 = pneg %p185
      %p257 = pneg %p182
      %p258 = scmp.lt.s32.totalorder %s18, 1
      %s259 = scalar_select %p258, %s18, 1
      %s260 = smul.addr %s259, 2
      %s261 = scalar_lea.vmem %s6, %s260
      %p262 = scmp.lt.s32.totalorder %s18, 1
      %s263 = scalar_select %p262, %s18, 1
      %s264 = smul.addr %s263, 32
      %s265 = smul.addr %s264, 8
      %s266 = scalar_lea.vmem %s0, %s265
      %p267 = scmp.lt.s32.totalorder %s18, 1
      %s268 = scalar_select %p267, %s18, 1
      %s269 = smul.addr %s268, 32
      %s270 = smul.addr %s269, 8
      %s271 = scalar_lea.vmem %s3, %s270
      %p272 = scmp.lt.s32.totalorder %s18, 1
      %s273 = scalar_select %p272, %s18, 1
      %s274 = smul.addr %s273, 32
      %s275 = smul.addr %s274, 8
      %s276 = scalar_lea.vmem %s4, %s275
      %p277 = scmp.lt.s32.totalorder %s18, 1
      %s278 = scalar_select %p277, %s18, 1
      %s279 = smul.addr %s278, 2
      %s280 = scalar_lea.vmem %s5, %s279
      %p281 = scmp.lt.s32.totalorder %s18, 1
      %s282 = scalar_select %p281, %s18, 1
      %s283 = smul.addr %s282, 2
      %s284 = scalar_lea.vmem %s6, %s283
      %v285 = vld [vmem:[%s266] sm:$0xff]
      %v286 = vld [vmem:[%s266 + $0x8] sm:$0xff]
      %v287 = vld [vmem:[%s266 + $0x10] sm:$0xff]
      %v288 = vld [vmem:[%s266 + $0x18] sm:$0xff]
      %v289 = vld [vmem:[%s266 + $0x20] sm:$0xff]
      %v290 = vld [vmem:[%s266 + $0x28] sm:$0xff]
      %v291 = vld [vmem:[%s266 + $0x30] sm:$0xff]
      %v292 = vld [vmem:[%s266 + $0x38] sm:$0xff]
      %v293 = vld [vmem:[%s266 + $0x40] sm:$0xff]
      %v294 = vld [vmem:[%s266 + $0x48] sm:$0xff]
      %v295 = vld [vmem:[%s266 + $0x50] sm:$0xff]
      %v296 = vld [vmem:[%s266 + $0x58] sm:$0xff]
      %v297 = vld [vmem:[%s266 + $0x60] sm:$0xff]
      %v298 = vld [vmem:[%s266 + $0x68] sm:$0xff]
      %v299 = vld [vmem:[%s266 + $0x70] sm:$0xff]
      %v300 = vld [vmem:[%s266 + $0x78] sm:$0xff]
      %v301 = vld [vmem:[%s266 + $0x80] sm:$0xff]
      %v302 = vld [vmem:[%s266 + $0x88] sm:$0xff]
      %v303 = vld [vmem:[%s266 + $0x90] sm:$0xff]
      %v304 = vld [vmem:[%s266 + $0x98] sm:$0xff]
      %v305 = vld [vmem:[%s266 + $0xa0] sm:$0xff]
      %v306 = vld [vmem:[%s266 + $0xa8] sm:$0xff]
      %v307 = vld [vmem:[%s266 + $0xb0] sm:$0xff]
      %v308 = vld [vmem:[%s266 + $0xb8] sm:$0xff]
      %v309 = vld [vmem:[%s266 + $0xc0] sm:$0xff]
      %v310 = vld [vmem:[%s266 + $0xc8] sm:$0xff]
      %v311 = vld [vmem:[%s266 + $0xd0] sm:$0xff]
      %v312 = vld [vmem:[%s266 + $0xd8] sm:$0xff]
      %v313 = vld [vmem:[%s266 + $0xe0] sm:$0xff]
      %v314 = vld [vmem:[%s266 + $0xe8] sm:$0xff]
      %v315 = vld [vmem:[%s266 + $0xf0] sm:$0xff]
      %v316 = vld [vmem:[%s266 + $0xf8] sm:$0xff]
      %v317 = vld [vmem:[%s1] sm:$0xff]
      %v318 = vld [vmem:[%s1 + $0x8] sm:$0xff]
      %v319 = vld [vmem:[%s1 + $0x10] sm:$0xff]
      %v320 = vld [vmem:[%s1 + $0x18] sm:$0xff]
      %v321 = vld [vmem:[%s1 + $0x20] sm:$0xff]
      %v322 = vld [vmem:[%s1 + $0x28] sm:$0xff]
      %v323 = vld [vmem:[%s1 + $0x30] sm:$0xff]
      %v324 = vld [vmem:[%s1 + $0x38] sm:$0xff]
      %v325 = vld [vmem:[%s1 + $0x40] sm:$0xff]
      %v326 = vld [vmem:[%s1 + $0x48] sm:$0xff]
      %v327 = vld [vmem:[%s1 + $0x50] sm:$0xff]
      %v328 = vld [vmem:[%s1 + $0x58] sm:$0xff]
      %v329 = vld [vmem:[%s1 + $0x60] sm:$0xff]
      %v330 = vld [vmem:[%s1 + $0x68] sm:$0xff]
      %v331 = vld [vmem:[%s1 + $0x70] sm:$0xff]
      %v332 = vld [vmem:[%s1 + $0x78] sm:$0xff]
      %333 = vmatprep.subr.mxu0 0.0
      %334 = vmatpush1.msra.mxu0 %v332
      %335 = vmatprep.subr.mxu0 0.0
      %336 = vmatpush1.msra.mxu0 %v331
      %337 = vmatprep.subr.mxu0 0.0
      %338 = vmatpush1.msra.mxu0 %v330
      %339 = vmatprep.subr.mxu0 0.0
      %340 = vmatpush1.msra.mxu0 %v329
      %341 = vmatprep.subr.mxu0 0.0
      %342 = vmatpush1.msra.mxu0 %v328
      %343 = vmatprep.subr.mxu0 0.0
      %344 = vmatpush1.msra.mxu0 %v327
      %345 = vmatprep.subr.mxu0 0.0
      %346 = vmatpush1.msra.mxu0 %v326
      %347 = vmatprep.subr.mxu0 0.0
      %348 = vmatpush1.msra.mxu0 %v325
      %349 = vmatprep.subr.mxu0 0.0
      %350 = vmatpush1.msra.mxu0 %v324
      %351 = vmatprep.subr.mxu0 0.0
      %352 = vmatpush1.msra.mxu0 %v323
      %353 = vmatprep.subr.mxu0 0.0
      %354 = vmatpush1.msra.mxu0 %v322
      %355 = vmatprep.subr.mxu0 0.0
      %356 = vmatpush1.msra.mxu0 %v321
      %357 = vmatprep.subr.mxu0 0.0
      %358 = vmatpush1.msra.mxu0 %v320
      %359 = vmatprep.subr.mxu0 0.0
      %360 = vmatpush1.msra.mxu0 %v319
      %361 = vmatprep.subr.mxu0 0.0
      %362 = vmatpush1.msra.mxu0 %v318
      %363 = vmatprep.subr.mxu0 0.0
      %364 = vmatpush1.msra.mxu0 %v317
      %365 = vmatprep.subr.mxu0 0.0
      %366 = vmatpush2.msra.mxu0 0.0
      %367 = vmatprep.subr.mxu0 0.0
      %368 = vmatpush2.msra.mxu0 0.0
      %369 = vmatprep.subr.mxu0 0.0
      %370 = vmatpush2.msra.mxu0 0.0
      %371 = vmatprep.subr.mxu0 0.0
      %372 = vmatpush2.msra.mxu0 0.0
      %373 = vmatprep.subr.mxu0 0.0
      %374 = vmatpush2.msra.mxu0 0.0
      %375 = vmatprep.subr.mxu0 0.0
      %376 = vmatpush2.msra.mxu0 0.0
      %377 = vmatprep.subr.mxu0 0.0
      %378 = vmatpush2.msra.mxu0 0.0
      %379 = vmatprep.subr.mxu0 0.0
      %380 = vmatpush2.msra.mxu0 0.0
      %381 = vmatprep.subr.mxu0 0.0
      %382 = vmatpush2.msra.mxu0 0.0
      %383 = vmatprep.subr.mxu0 0.0
      %384 = vmatpush2.msra.mxu0 0.0
      %385 = vmatprep.subr.mxu0 0.0
      %386 = vmatpush2.msra.mxu0 0.0
      %387 = vmatprep.subr.mxu0 0.0
      %388 = vmatpush2.msra.mxu0 0.0
      %389 = vmatprep.subr.mxu0 0.0
      %390 = vmatpush2.msra.mxu0 0.0
      %391 = vmatprep.subr.mxu0 0.0
      %392 = vmatpush2.msra.mxu0 0.0
      %393 = vmatprep.subr.mxu0 0.0
      %394 = vmatpush2.msra.mxu0 0.0
      %395 = vmatprep.subr.mxu0 0.0
      %396 = vmatpush2.msra.mxu0 0.0
      %397 = vmatprep.mubr.f32.mxu0 0.0
      %398 = vmatmul.mubr.f32.gmra.mxu0 %v285
      %v399 = vpop.f32.mrf.mxu0
      %v400 = vadd.f32 0.0, %v399
      %v401 = vpop.f32.mrf.mxu0
      %402 = vmatprep.mubr.f32.mxu0 0.0
      %403 = vmatmul.mubr.f32.gmra.mxu0 %v286
      %v404 = vpop.f32.mrf.mxu0
      %v405 = vadd.f32 0.0, %v404
      %v406 = vpop.f32.mrf.mxu0
      %407 = vmatprep.mubr.f32.mxu0 0.0
      %408 = vmatmul.mubr.f32.gmra.mxu0 %v287
      %v409 = vpop.f32.mrf.mxu0
      %v410 = vadd.f32 0.0, %v409
      %v411 = vpop.f32.mrf.mxu0
      %412 = vmatprep.mubr.f32.mxu0 0.0
      %413 = vmatmul.mubr.f32.gmra.mxu0 %v288
      %v414 = vpop.f32.mrf.mxu0
      %v415 = vadd.f32 0.0, %v414
      %v416 = vpop.f32.mrf.mxu0
      %417 = vmatprep.mubr.f32.mxu0 0.0
      %418 = vmatmul.mubr.f32.gmra.mxu0 %v289
      %v419 = vpop.f32.mrf.mxu0
      %v420 = vadd.f32 0.0, %v419
      %v421 = vpop.f32.mrf.mxu0
      %422 = vmatprep.mubr.f32.mxu0 0.0
      %423 = vmatmul.mubr.f32.gmra.mxu0 %v290
      %v424 = vpop.f32.mrf.mxu0
      %v425 = vadd.f32 0.0, %v424
      %v426 = vpop.f32.mrf.mxu0
      %427 = vmatprep.mubr.f32.mxu0 0.0
      %428 = vmatmul.mubr.f32.gmra.mxu0 %v291
      %v429 = vpop.f32.mrf.mxu0
      %v430 = vadd.f32 0.0, %v429
      %v431 = vpop.f32.mrf.mxu0
      %432 = vmatprep.mubr.f32.mxu0 0.0
      %433 = vmatmul.mubr.f32.gmra.mxu0 %v292
      %v434 = vpop.f32.mrf.mxu0
      %v435 = vadd.f32 0.0, %v434
      %v436 = vpop.f32.mrf.mxu0
      %437 = vmatprep.mubr.f32.mxu0 0.0
      %438 = vmatmul.mubr.f32.gmra.mxu0 %v293
      %v439 = vpop.f32.mrf.mxu0
      %v440 = vadd.f32 0.0, %v439
      %v441 = vpop.f32.mrf.mxu0
      %442 = vmatprep.mubr.f32.mxu0 0.0
      %443 = vmatmul.mubr.f32.gmra.mxu0 %v294
      %v444 = vpop.f32.mrf.mxu0
      %v445 = vadd.f32 0.0, %v444
      %v446 = vpop.f32.mrf.mxu0
      %447 = vmatprep.mubr.f32.mxu0 0.0
      %448 = vmatmul.mubr.f32.gmra.mxu0 %v295
      %v449 = vpop.f32.mrf.mxu0
      %v450 = vadd.f32 0.0, %v449
      %v451 = vpop.f32.mrf.mxu0
      %452 = vmatprep.mubr.f32.mxu0 0.0
      %453 = vmatmul.mubr.f32.gmra.mxu0 %v296
      %v454 = vpop.f32.mrf.mxu0
      %v455 = vadd.f32 0.0, %v454
      %v456 = vpop.f32.mrf.mxu0
      %457 = vmatprep.mubr.f32.mxu0 0.0
      %458 = vmatmul.mubr.f32.gmra.mxu0 %v297
      %v459 = vpop.f32.mrf.mxu0
      %v460 = vadd.f32 0.0, %v459
      %v461 = vpop.f32.mrf.mxu0
      %462 = vmatprep.mubr.f32.mxu0 0.0
      %463 = vmatmul.mubr.f32.gmra.mxu0 %v298
      %v464 = vpop.f32.mrf.mxu0
      %v465 = vadd.f32 0.0, %v464
      %v466 = vpop.f32.mrf.mxu0
      %467 = vmatprep.mubr.f32.mxu0 0.0
      %468 = vmatmul.mubr.f32.gmra.mxu0 %v299
      %v469 = vpop.f32.mrf.mxu0
      %v470 = vadd.f32 0.0, %v469
      %v471 = vpop.f32.mrf.mxu0
      %472 = vmatprep.mubr.f32.mxu0 0.0
      %473 = vmatmul.mubr.f32.gmra.mxu0 %v300
      %v474 = vpop.f32.mrf.mxu0
      %v475 = vadd.f32 0.0, %v474
      %v476 = vpop.f32.mrf.mxu0
      %477 = vmatprep.mubr.f32.mxu0 0.0
      %478 = vmatmul.mubr.f32.gmra.mxu0 %v301
      %v479 = vpop.f32.mrf.mxu0
      %v480 = vadd.f32 0.0, %v479
      %v481 = vpop.f32.mrf.mxu0
      %482 = vmatprep.mubr.f32.mxu0 0.0
      %483 = vmatmul.mubr.f32.gmra.mxu0 %v302
      %v484 = vpop.f32.mrf.mxu0
      %v485 = vadd.f32 0.0, %v484
      %v486 = vpop.f32.mrf.mxu0
      %487 = vmatprep.mubr.f32.mxu0 0.0
      %488 = vmatmul.mubr.f32.gmra.mxu0 %v303
      %v489 = vpop.f32.mrf.mxu0
      %v490 = vadd.f32 0.0, %v489
      %v491 = vpop.f32.mrf.mxu0
      %492 = vmatprep.mubr.f32.mxu0 0.0
      %493 = vmatmul.mubr.f32.gmra.mxu0 %v304
      %v494 = vpop.f32.mrf.mxu0
      %v495 = vadd.f32 0.0, %v494
      %v496 = vpop.f32.mrf.mxu0
      %497 = vmatprep.mubr.f32.mxu0 0.0
      %498 = vmatmul.mubr.f32.gmra.mxu0 %v305
      %v499 = vpop.f32.mrf.mxu0
      %v500 = vadd.f32 0.0, %v499
      %v501 = vpop.f32.mrf.mxu0
      %502 = vmatprep.mubr.f32.mxu0 0.0
      %503 = vmatmul.mubr.f32.gmra.mxu0 %v306
      %v504 = vpop.f32.mrf.mxu0
      %v505 = vadd.f32 0.0, %v504
      %v506 = vpop.f32.mrf.mxu0
      %507 = vmatprep.mubr.f32.mxu0 0.0
      %508 = vmatmul.mubr.f32.gmra.mxu0 %v307
      %v509 = vpop.f32.mrf.mxu0
      %v510 = vadd.f32 0.0, %v509
      %v511 = vpop.f32.mrf.mxu0
      %512 = vmatprep.mubr.f32.mxu0 0.0
      %513 = vmatmul.mubr.f32.gmra.mxu0 %v308
      %v514 = vpop.f32.mrf.mxu0
      %v515 = vadd.f32 0.0, %v514
      %v516 = vpop.f32.mrf.mxu0
      %517 = vmatprep.mubr.f32.mxu0 0.0
      %518 = vmatmul.mubr.f32.gmra.mxu0 %v309
      %v519 = vpop.f32.mrf.mxu0
      %v520 = vadd.f32 0.0, %v519
      %v521 = vpop.f32.mrf.mxu0
      %522 = vmatprep.mubr.f32.mxu0 0.0
      %523 = vmatmul.mubr.f32.gmra.mxu0 %v310
      %v524 = vpop.f32.mrf.mxu0
      %v525 = vadd.f32 0.0, %v524
      %v526 = vpop.f32.mrf.mxu0
      %527 = vmatprep.mubr.f32.mxu0 0.0
      %528 = vmatmul.mubr.f32.gmra.mxu0 %v311
      %v529 = vpop.f32.mrf.mxu0
      %v530 = vadd.f32 0.0, %v529
      %v531 = vpop.f32.mrf.mxu0
      %532 = vmatprep.mubr.f32.mxu0 0.0
      %533 = vmatmul.mubr.f32.gmra.mxu0 %v312
      %v534 = vpop.f32.mrf.mxu0
      %v535 = vadd.f32 0.0, %v534
      %v536 = vpop.f32.mrf.mxu0
      %537 = vmatprep.mubr.f32.mxu0 0.0
      %538 = vmatmul.mubr.f32.gmra.mxu0 %v313
      %v539 = vpop.f32.mrf.mxu0
      %v540 = vadd.f32 0.0, %v539
      %v541 = vpop.f32.mrf.mxu0
      %542 = vmatprep.mubr.f32.mxu0 0.0
      %543 = vmatmul.mubr.f32.gmra.mxu0 %v314
      %v544 = vpop.f32.mrf.mxu0
      %v545 = vadd.f32 0.0, %v544
      %v546 = vpop.f32.mrf.mxu0
      %547 = vmatprep.mubr.f32.mxu0 0.0
      %548 = vmatmul.mubr.f32.gmra.mxu0 %v315
      %v549 = vpop.f32.mrf.mxu0
      %v550 = vadd.f32 0.0, %v549
      %v551 = vpop.f32.mrf.mxu0
      %552 = vmatprep.mubr.f32.mxu0 0.0
      %553 = vmatmul.mubr.f32.gmra.mxu0 %v316
      %v554 = vpop.f32.mrf.mxu0
      %v555 = vadd.f32 0.0, %v554
      %v556 = vpop.f32.mrf.mxu0
      %557 = vdwg.mxu0
      %558 = vst [vmem:[%s271] sm:$0xff] %v400
      %559 = vst [vmem:[%s271 + $0x8] sm:$0xff] %v405
      %560 = vst [vmem:[%s271 + $0x10] sm:$0xff] %v410
      %561 = vst [vmem:[%s271 + $0x18] sm:$0xff] %v415
      %562 = vst [vmem:[%s271 + $0x20] sm:$0xff] %v420
      %563 = vst [vmem:[%s271 + $0x28] sm:$0xff] %v425
      %564 = vst [vmem:[%s271 + $0x30] sm:$0xff] %v430
      %565 = vst [vmem:[%s271 + $0x38] sm:$0xff] %v435
      %566 = vst [vmem:[%s271 + $0x40] sm:$0xff] %v440
      %567 = vst [vmem:[%s271 + $0x48] sm:$0xff] %v445
      %568 = vst [vmem:[%s271 + $0x50] sm:$0xff] %v450
      %569 = vst [vmem:[%s271 + $0x58] sm:$0xff] %v455
      %570 = vst [vmem:[%s271 + $0x60] sm:$0xff] %v460
      %571 = vst [vmem:[%s271 + $0x68] sm:$0xff] %v465
      %572 = vst [vmem:[%s271 + $0x70] sm:$0xff] %v470
      %573 = vst [vmem:[%s271 + $0x78] sm:$0xff] %v475
      %574 = vst [vmem:[%s271 + $0x80] sm:$0xff] %v480
      %575 = vst [vmem:[%s271 + $0x88] sm:$0xff] %v485
      %576 = vst [vmem:[%s271 + $0x90] sm:$0xff] %v490
      %577 = vst [vmem:[%s271 + $0x98] sm:$0xff] %v495
      %578 = vst [vmem:[%s271 + $0xa0] sm:$0xff] %v500
      %579 = vst [vmem:[%s271 + $0xa8] sm:$0xff] %v505
      %580 = vst [vmem:[%s271 + $0xb0] sm:$0xff] %v510
      %581 = vst [vmem:[%s271 + $0xb8] sm:$0xff] %v515
      %582 = vst [vmem:[%s271 + $0xc0] sm:$0xff] %v520
      %583 = vst [vmem:[%s271 + $0xc8] sm:$0xff] %v525
      %584 = vst [vmem:[%s271 + $0xd0] sm:$0xff] %v530
      %585 = vst [vmem:[%s271 + $0xd8] sm:$0xff] %v535
      %586 = vst [vmem:[%s271 + $0xe0] sm:$0xff] %v540
      %587 = vst [vmem:[%s271 + $0xe8] sm:$0xff] %v545
      %588 = vst [vmem:[%s271 + $0xf0] sm:$0xff] %v550
      %589 = vst [vmem:[%s271 + $0xf8] sm:$0xff] %v555
      %v590 = vadd.f32 %v400, %v405
      %v591 = vadd.f32 %v590, %v410
      %v592 = vadd.f32 %v591, %v415
      %v593 = vadd.f32 %v592, %v420
      %v594 = vadd.f32 %v593, %v425
      %v595 = vadd.f32 %v594, %v430
      %v596 = vadd.f32 %v595, %v435
      %v597 = vadd.f32 %v596, %v440
      %v598 = vadd.f32 %v597, %v445
      %v599 = vadd.f32 %v598, %v450
      %v600 = vadd.f32 %v599, %v455
      %v601 = vadd.f32 %v600, %v460
      %v602 = vadd.f32 %v601, %v465
      %v603 = vadd.f32 %v602, %v470
      %v604 = vadd.f32 %v603, %v475
      %v605 = vadd.f32 %v604, %v480
      %v606 = vadd.f32 %v605, %v485
      %v607 = vadd.f32 %v606, %v490
      %v608 = vadd.f32 %v607, %v495
      %v609 = vadd.f32 %v608, %v500
      %v610 = vadd.f32 %v609, %v505
      %v611 = vadd.f32 %v610, %v510
      %v612 = vadd.f32 %v611, %v515
      %v613 = vadd.f32 %v612, %v520
      %v614 = vadd.f32 %v613, %v525
      %v615 = vadd.f32 %v614, %v530
      %v616 = vadd.f32 %v615, %v535
      %v617 = vadd.f32 %v616, %v540
      %v618 = vadd.f32 %v617, %v545
      %v619 = vadd.f32 %v618, %v550
      %v620 = vadd.f32 %v619, %v555
      %v621 = vrot.slane %v620, 4
      %v622 = vadd.f32 %v620, %v621
      %v623 = vrot.slane %v622, 2
      %v624 = vadd.f32 %v622, %v623
      %v625 = vrot.slane %v624, 1
      %v626 = vadd.f32 %v624, %v625
      %v627 = vmul.f32 %v400, %v400
      %v628 = vmul.f32 %v405, %v405
      %v629 = vmul.f32 %v410, %v410
      %v630 = vmul.f32 %v415, %v415
      %v631 = vmul.f32 %v420, %v420
      %v632 = vmul.f32 %v425, %v425
      %v633 = vmul.f32 %v430, %v430
      %v634 = vmul.f32 %v435, %v435
      %v635 = vmul.f32 %v440, %v440
      %v636 = vmul.f32 %v445, %v445
      %v637 = vmul.f32 %v450, %v450
      %v638 = vmul.f32 %v455, %v455
      %v639 = vmul.f32 %v460, %v460
      %v640 = vmul.f32 %v465, %v465
      %v641 = vmul.f32 %v470, %v470
      %v642 = vmul.f32 %v475, %v475
      %v643 = vmul.f32 %v480, %v480
      %v644 = vmul.f32 %v485, %v485
      %v645 = vmul.f32 %v490, %v490
      %v646 = vmul.f32 %v495, %v495
      %v647 = vmul.f32 %v500, %v500
      %v648 = vmul.f32 %v505, %v505
      %v649 = vmul.f32 %v510, %v510
      %v650 = vmul.f32 %v515, %v515
      %v651 = vmul.f32 %v520, %v520
      %v652 = vmul.f32 %v525, %v525
      %v653 = vmul.f32 %v530, %v530
      %v654 = vmul.f32 %v535, %v535
      %v655 = vmul.f32 %v540, %v540
      %v656 = vmul.f32 %v545, %v545
      %v657 = vmul.f32 %v550, %v550
      %v658 = vmul.f32 %v555, %v555
      %v659 = vadd.f32 %v627, %v628
      %v660 = vadd.f32 %v659, %v629
      %v661 = vadd.f32 %v660, %v630
      %v662 = vadd.f32 %v661, %v631
      %v663 = vadd.f32 %v662, %v632
      %v664 = vadd.f32 %v663, %v633
      %v665 = vadd.f32 %v664, %v634
      %v666 = vadd.f32 %v665, %v635
      %v667 = vadd.f32 %v666, %v636
      %v668 = vadd.f32 %v667, %v637
      %v669 = vadd.f32 %v668, %v638
      %v670 = vadd.f32 %v669, %v639
      %v671 = vadd.f32 %v670, %v640
      %v672 = vadd.f32 %v671, %v641
      %v673 = vadd.f32 %v672, %v642
      %v674 = vadd.f32 %v673, %v643
      %v675 = vadd.f32 %v674, %v644
      %v676 = vadd.f32 %v675, %v645
      %v677 = vadd.f32 %v676, %v646
      %v678 = vadd.f32 %v677, %v647
      %v679 = vadd.f32 %v678, %v648
      %v680 = vadd.f32 %v679, %v649
      %v681 = vadd.f32 %v680, %v650
      %v682 = vadd.f32 %v681, %v651
      %v683 = vadd.f32 %v682, %v652
      %v684 = vadd.f32 %v683, %v653
      %v685 = vadd.f32 %v684, %v654
      %v686 = vadd.f32 %v685, %v655
      %v687 = vadd.f32 %v686, %v656
      %v688 = vadd.f32 %v687, %v657
      %v689 = vadd.f32 %v688, %v658
      %v690 = vrot.slane %v689, 4
      %v691 = vadd.f32 %v689, %v690
      %v692 = vrot.slane %v691, 2
      %v693 = vadd.f32 %v691, %v692
      %v694 = vrot.slane %v693, 1
      %v695 = vadd.f32 %v693, %v694
      %vm696 = vcmask 1040384
      %v697 = vsel %vm696, %v626, %v695
      %698 = vst [vmem:[%s280] sm:$0x3] %v697
      %v699 = vld [vmem:[%s2] sm:$0xff]
      %v700 = vld [vmem:[%s2 + $0x8] sm:$0xff]
      %v701 = vld [vmem:[%s2 + $0x10] sm:$0xff]
      %v702 = vld [vmem:[%s2 + $0x18] sm:$0xff]
      %v703 = vld [vmem:[%s2 + $0x20] sm:$0xff]
      %v704 = vld [vmem:[%s2 + $0x28] sm:$0xff]
      %v705 = vld [vmem:[%s2 + $0x30] sm:$0xff]
      %v706 = vld [vmem:[%s2 + $0x38] sm:$0xff]
      %v707 = vld [vmem:[%s2 + $0x40] sm:$0xff]
      %v708 = vld [vmem:[%s2 + $0x48] sm:$0xff]
      %v709 = vld [vmem:[%s2 + $0x50] sm:$0xff]
      %v710 = vld [vmem:[%s2 + $0x58] sm:$0xff]
      %v711 = vld [vmem:[%s2 + $0x60] sm:$0xff]
      %v712 = vld [vmem:[%s2 + $0x68] sm:$0xff]
      %v713 = vld [vmem:[%s2 + $0x70] sm:$0xff]
      %v714 = vld [vmem:[%s2 + $0x78] sm:$0xff]
      %715 = vmatprep.subr.mxu0 0.0
      %716 = vmatpush1.msra.mxu0 %v714
      %717 = vmatprep.subr.mxu0 0.0
      %718 = vmatpush1.msra.mxu0 %v713
      %719 = vmatprep.subr.mxu0 0.0
      %720 = vmatpush1.msra.mxu0 %v712
      %721 = vmatprep.subr.mxu0 0.0
      %722 = vmatpush1.msra.mxu0 %v711
      %723 = vmatprep.subr.mxu0 0.0
      %724 = vmatpush1.msra.mxu0 %v710
      %725 = vmatprep.subr.mxu0 0.0
      %726 = vmatpush1.msra.mxu0 %v709
      %727 = vmatprep.subr.mxu0 0.0
      %728 = vmatpush1.msra.mxu0 %v708
      %729 = vmatprep.subr.mxu0 0.0
      %730 = vmatpush1.msra.mxu0 %v707
      %731 = vmatprep.subr.mxu0 0.0
      %732 = vmatpush1.msra.mxu0 %v706
      %733 = vmatprep.subr.mxu0 0.0
      %734 = vmatpush1.msra.mxu0 %v705
      %735 = vmatprep.subr.mxu0 0.0
      %736 = vmatpush1.msra.mxu0 %v704
      %737 = vmatprep.subr.mxu0 0.0
      %738 = vmatpush1.msra.mxu0 %v703
      %739 = vmatprep.subr.mxu0 0.0
      %740 = vmatpush1.msra.mxu0 %v702
      %741 = vmatprep.subr.mxu0 0.0
      %742 = vmatpush1.msra.mxu0 %v701
      %743 = vmatprep.subr.mxu0 0.0
      %744 = vmatpush1.msra.mxu0 %v700
      %745 = vmatprep.subr.mxu0 0.0
      %746 = vmatpush1.msra.mxu0 %v699
      %747 = vmatprep.subr.mxu0 0.0
      %748 = vmatpush2.msra.mxu0 0.0
      %749 = vmatprep.subr.mxu0 0.0
      %750 = vmatpush2.msra.mxu0 0.0
      %751 = vmatprep.subr.mxu0 0.0
      %752 = vmatpush2.msra.mxu0 0.0
      %753 = vmatprep.subr.mxu0 0.0
      %754 = vmatpush2.msra.mxu0 0.0
      %755 = vmatprep.subr.mxu0 0.0
      %756 = vmatpush2.msra.mxu0 0.0
      %757 = vmatprep.subr.mxu0 0.0
      %758 = vmatpush2.msra.mxu0 0.0
      %759 = vmatprep.subr.mxu0 0.0
      %760 = vmatpush2.msra.mxu0 0.0
      %761 = vmatprep.subr.mxu0 0.0
      %762 = vmatpush2.msra.mxu0 0.0
      %763 = vmatprep.subr.mxu0 0.0
      %764 = vmatpush2.msra.mxu0 0.0
      %765 = vmatprep.subr.mxu0 0.0
      %766 = vmatpush2.msra.mxu0 0.0
      %767 = vmatprep.subr.mxu0 0.0
      %768 = vmatpush2.msra.mxu0 0.0
      %769 = vmatprep.subr.mxu0 0.0
      %770 = vmatpush2.msra.mxu0 0.0
      %771 = vmatprep.subr.mxu0 0.0
      %772 = vmatpush2.msra.mxu0 0.0
      %773 = vmatprep.subr.mxu0 0.0
      %774 = vmatpush2.msra.mxu0 0.0
      %775 = vmatprep.subr.mxu0 0.0
      %776 = vmatpush2.msra.mxu0 0.0
      %777 = vmatprep.subr.mxu0 0.0
      %778 = vmatpush2.msra.mxu0 0.0
      %779 = vmatprep.mubr.f32.mxu0 0.0
      %780 = vmatmul.mubr.f32.gmra.mxu0 %v285
      %v781 = vpop.f32.mrf.mxu0
      %v782 = vadd.f32 0.0, %v781
      %v783 = vpop.f32.mrf.mxu0
      %784 = vmatprep.mubr.f32.mxu0 0.0
      %785 = vmatmul.mubr.f32.gmra.mxu0 %v286
      %v786 = vpop.f32.mrf.mxu0
      %v787 = vadd.f32 0.0, %v786
      %v788 = vpop.f32.mrf.mxu0
      %789 = vmatprep.mubr.f32.mxu0 0.0
      %790 = vmatmul.mubr.f32.gmra.mxu0 %v287
      %v791 = vpop.f32.mrf.mxu0
      %v792 = vadd.f32 0.0, %v791
      %v793 = vpop.f32.mrf.mxu0
      %794 = vmatprep.mubr.f32.mxu0 0.0
      %795 = vmatmul.mubr.f32.gmra.mxu0 %v288
      %v796 = vpop.f32.mrf.mxu0
      %v797 = vadd.f32 0.0, %v796
      %v798 = vpop.f32.mrf.mxu0
      %799 = vmatprep.mubr.f32.mxu0 0.0
      %800 = vmatmul.mubr.f32.gmra.mxu0 %v289
      %v801 = vpop.f32.mrf.mxu0
      %v802 = vadd.f32 0.0, %v801
      %v803 = vpop.f32.mrf.mxu0
      %804 = vmatprep.mubr.f32.mxu0 0.0
      %805 = vmatmul.mubr.f32.gmra.mxu0 %v290
      %v806 = vpop.f32.mrf.mxu0
      %v807 = vadd.f32 0.0, %v806
      %v808 = vpop.f32.mrf.mxu0
      %809 = vmatprep.mubr.f32.mxu0 0.0
      %810 = vmatmul.mubr.f32.gmra.mxu0 %v291
      %v811 = vpop.f32.mrf.mxu0
      %v812 = vadd.f32 0.0, %v811
      %v813 = vpop.f32.mrf.mxu0
      %814 = vmatprep.mubr.f32.mxu0 0.0
      %815 = vmatmul.mubr.f32.gmra.mxu0 %v292
      %v816 = vpop.f32.mrf.mxu0
      %v817 = vadd.f32 0.0, %v816
      %v818 = vpop.f32.mrf.mxu0
      %819 = vmatprep.mubr.f32.mxu0 0.0
      %820 = vmatmul.mubr.f32.gmra.mxu0 %v293
      %v821 = vpop.f32.mrf.mxu0
      %v822 = vadd.f32 0.0, %v821
      %v823 = vpop.f32.mrf.mxu0
      %824 = vmatprep.mubr.f32.mxu0 0.0
      %825 = vmatmul.mubr.f32.gmra.mxu0 %v294
      %v826 = vpop.f32.mrf.mxu0
      %v827 = vadd.f32 0.0, %v826
      %v828 = vpop.f32.mrf.mxu0
      %829 = vmatprep.mubr.f32.mxu0 0.0
      %830 = vmatmul.mubr.f32.gmra.mxu0 %v295
      %v831 = vpop.f32.mrf.mxu0
      %v832 = vadd.f32 0.0, %v831
      %v833 = vpop.f32.mrf.mxu0
      %834 = vmatprep.mubr.f32.mxu0 0.0
      %835 = vmatmul.mubr.f32.gmra.mxu0 %v296
      %v836 = vpop.f32.mrf.mxu0
      %v837 = vadd.f32 0.0, %v836
      %v838 = vpop.f32.mrf.mxu0
      %839 = vmatprep.mubr.f32.mxu0 0.0
      %840 = vmatmul.mubr.f32.gmra.mxu0 %v297
      %v841 = vpop.f32.mrf.mxu0
      %v842 = vadd.f32 0.0, %v841
      %v843 = vpop.f32.mrf.mxu0
      %844 = vmatprep.mubr.f32.mxu0 0.0
      %845 = vmatmul.mubr.f32.gmra.mxu0 %v298
      %v846 = vpop.f32.mrf.mxu0
      %v847 = vadd.f32 0.0, %v846
      %v848 = vpop.f32.mrf.mxu0
      %849 = vmatprep.mubr.f32.mxu0 0.0
      %850 = vmatmul.mubr.f32.gmra.mxu0 %v299
      %v851 = vpop.f32.mrf.mxu0
      %v852 = vadd.f32 0.0, %v851
      %v853 = vpop.f32.mrf.mxu0
      %854 = vmatprep.mubr.f32.mxu0 0.0
      %855 = vmatmul.mubr.f32.gmra.mxu0 %v300
      %v856 = vpop.f32.mrf.mxu0
      %v857 = vadd.f32 0.0, %v856
      %v858 = vpop.f32.mrf.mxu0
      %859 = vmatprep.mubr.f32.mxu0 0.0
      %860 = vmatmul.mubr.f32.gmra.mxu0 %v301
      %v861 = vpop.f32.mrf.mxu0
      %v862 = vadd.f32 0.0, %v861
      %v863 = vpop.f32.mrf.mxu0
      %864 = vmatprep.mubr.f32.mxu0 0.0
      %865 = vmatmul.mubr.f32.gmra.mxu0 %v302
      %v866 = vpop.f32.mrf.mxu0
      %v867 = vadd.f32 0.0, %v866
      %v868 = vpop.f32.mrf.mxu0
      %869 = vmatprep.mubr.f32.mxu0 0.0
      %870 = vmatmul.mubr.f32.gmra.mxu0 %v303
      %v871 = vpop.f32.mrf.mxu0
      %v872 = vadd.f32 0.0, %v871
      %v873 = vpop.f32.mrf.mxu0
      %874 = vmatprep.mubr.f32.mxu0 0.0
      %875 = vmatmul.mubr.f32.gmra.mxu0 %v304
      %v876 = vpop.f32.mrf.mxu0
      %v877 = vadd.f32 0.0, %v876
      %v878 = vpop.f32.mrf.mxu0
      %879 = vmatprep.mubr.f32.mxu0 0.0
      %880 = vmatmul.mubr.f32.gmra.mxu0 %v305
      %v881 = vpop.f32.mrf.mxu0
      %v882 = vadd.f32 0.0, %v881
      %v883 = vpop.f32.mrf.mxu0
      %884 = vmatprep.mubr.f32.mxu0 0.0
      %885 = vmatmul.mubr.f32.gmra.mxu0 %v306
      %v886 = vpop.f32.mrf.mxu0
      %v887 = vadd.f32 0.0, %v886
      %v888 = vpop.f32.mrf.mxu0
      %889 = vmatprep.mubr.f32.mxu0 0.0
      %890 = vmatmul.mubr.f32.gmra.mxu0 %v307
      %v891 = vpop.f32.mrf.mxu0
      %v892 = vadd.f32 0.0, %v891
      %v893 = vpop.f32.mrf.mxu0
      %894 = vmatprep.mubr.f32.mxu0 0.0
      %895 = vmatmul.mubr.f32.gmra.mxu0 %v308
      %v896 = vpop.f32.mrf.mxu0
      %v897 = vadd.f32 0.0, %v896
      %v898 = vpop.f32.mrf.mxu0
      %899 = vmatprep.mubr.f32.mxu0 0.0
      %900 = vmatmul.mubr.f32.gmra.mxu0 %v309
      %v901 = vpop.f32.mrf.mxu0
      %v902 = vadd.f32 0.0, %v901
      %v903 = vpop.f32.mrf.mxu0
      %904 = vmatprep.mubr.f32.mxu0 0.0
      %905 = vmatmul.mubr.f32.gmra.mxu0 %v310
      %v906 = vpop.f32.mrf.mxu0
      %v907 = vadd.f32 0.0, %v906
      %v908 = vpop.f32.mrf.mxu0
      %909 = vmatprep.mubr.f32.mxu0 0.0
      %910 = vmatmul.mubr.f32.gmra.mxu0 %v311
      %v911 = vpop.f32.mrf.mxu0
      %v912 = vadd.f32 0.0, %v911
      %v913 = vpop.f32.mrf.mxu0
      %914 = vmatprep.mubr.f32.mxu0 0.0
      %915 = vmatmul.mubr.f32.gmra.mxu0 %v312
      %v916 = vpop.f32.mrf.mxu0
      %v917 = vadd.f32 0.0, %v916
      %v918 = vpop.f32.mrf.mxu0
      %919 = vmatprep.mubr.f32.mxu0 0.0
      %920 = vmatmul.mubr.f32.gmra.mxu0 %v313
      %v921 = vpop.f32.mrf.mxu0
      %v922 = vadd.f32 0.0, %v921
      %v923 = vpop.f32.mrf.mxu0
      %924 = vmatprep.mubr.f32.mxu0 0.0
      %925 = vmatmul.mubr.f32.gmra.mxu0 %v314
      %v926 = vpop.f32.mrf.mxu0
      %v927 = vadd.f32 0.0, %v926
      %v928 = vpop.f32.mrf.mxu0
      %929 = vmatprep.mubr.f32.mxu0 0.0
      %930 = vmatmul.mubr.f32.gmra.mxu0 %v315
      %v931 = vpop.f32.mrf.mxu0
      %v932 = vadd.f32 0.0, %v931
      %v933 = vpop.f32.mrf.mxu0
      %934 = vmatprep.mubr.f32.mxu0 0.0
      %935 = vmatmul.mubr.f32.gmra.mxu0 %v316
      %v936 = vpop.f32.mrf.mxu0
      %v937 = vadd.f32 0.0, %v936
      %v938 = vpop.f32.mrf.mxu0
      %939 = vdwg.mxu0
      %940 = vst [vmem:[%s276] sm:$0xff] %v782
      %941 = vst [vmem:[%s276 + $0x8] sm:$0xff] %v787
      %942 = vst [vmem:[%s276 + $0x10] sm:$0xff] %v792
      %943 = vst [vmem:[%s276 + $0x18] sm:$0xff] %v797
      %944 = vst [vmem:[%s276 + $0x20] sm:$0xff] %v802
      %945 = vst [vmem:[%s276 + $0x28] sm:$0xff] %v807
      %946 = vst [vmem:[%s276 + $0x30] sm:$0xff] %v812
      %947 = vst [vmem:[%s276 + $0x38] sm:$0xff] %v817
      %948 = vst [vmem:[%s276 + $0x40] sm:$0xff] %v822
      %949 = vst [vmem:[%s276 + $0x48] sm:$0xff] %v827
      %950 = vst [vmem:[%s276 + $0x50] sm:$0xff] %v832
      %951 = vst [vmem:[%s276 + $0x58] sm:$0xff] %v837
      %952 = vst [vmem:[%s276 + $0x60] sm:$0xff] %v842
      %953 = vst [vmem:[%s276 + $0x68] sm:$0xff] %v847
      %954 = vst [vmem:[%s276 + $0x70] sm:$0xff] %v852
      %955 = vst [vmem:[%s276 + $0x78] sm:$0xff] %v857
      %956 = vst [vmem:[%s276 + $0x80] sm:$0xff] %v862
      %957 = vst [vmem:[%s276 + $0x88] sm:$0xff] %v867
      %958 = vst [vmem:[%s276 + $0x90] sm:$0xff] %v872
      %959 = vst [vmem:[%s276 + $0x98] sm:$0xff] %v877
      %960 = vst [vmem:[%s276 + $0xa0] sm:$0xff] %v882
      %961 = vst [vmem:[%s276 + $0xa8] sm:$0xff] %v887
      %962 = vst [vmem:[%s276 + $0xb0] sm:$0xff] %v892
      %963 = vst [vmem:[%s276 + $0xb8] sm:$0xff] %v897
      %964 = vst [vmem:[%s276 + $0xc0] sm:$0xff] %v902
      %965 = vst [vmem:[%s276 + $0xc8] sm:$0xff] %v907
      %966 = vst [vmem:[%s276 + $0xd0] sm:$0xff] %v912
      %967 = vst [vmem:[%s276 + $0xd8] sm:$0xff] %v917
      %968 = vst [vmem:[%s276 + $0xe0] sm:$0xff] %v922
      %969 = vst [vmem:[%s276 + $0xe8] sm:$0xff] %v927
      %970 = vst [vmem:[%s276 + $0xf0] sm:$0xff] %v932
      %971 = vst [vmem:[%s276 + $0xf8] sm:$0xff] %v937
      %v972 = vadd.f32 %v782, %v787
      %v973 = vadd.f32 %v972, %v792
      %v974 = vadd.f32 %v973, %v797
      %v975 = vadd.f32 %v974, %v802
      %v976 = vadd.f32 %v975, %v807
      %v977 = vadd.f32 %v976, %v812
      %v978 = vadd.f32 %v977, %v817
      %v979 = vadd.f32 %v978, %v822
      %v980 = vadd.f32 %v979, %v827
      %v981 = vadd.f32 %v980, %v832
      %v982 = vadd.f32 %v981, %v837
      %v983 = vadd.f32 %v982, %v842
      %v984 = vadd.f32 %v983, %v847
      %v985 = vadd.f32 %v984, %v852
      %v986 = vadd.f32 %v985, %v857
      %v987 = vadd.f32 %v986, %v862
      %v988 = vadd.f32 %v987, %v867
      %v989 = vadd.f32 %v988, %v872
      %v990 = vadd.f32 %v989, %v877
      %v991 = vadd.f32 %v990, %v882
      %v992 = vadd.f32 %v991, %v887
      %v993 = vadd.f32 %v992, %v892
      %v994 = vadd.f32 %v993, %v897
      %v995 = vadd.f32 %v994, %v902
      %v996 = vadd.f32 %v995, %v907
      %v997 = vadd.f32 %v996, %v912
      %v998 = vadd.f32 %v997, %v917
      %v999 = vadd.f32 %v998, %v922
      %v1000 = vadd.f32 %v999, %v927
      %v1001 = vadd.f32 %v1000, %v932
      %v1002 = vadd.f32 %v1001, %v937
      %v1003 = vrot.slane %v1002, 4
      %v1004 = vadd.f32 %v1002, %v1003
      %v1005 = vrot.slane %v1004, 2
      %v1006 = vadd.f32 %v1004, %v1005
      %v1007 = vrot.slane %v1006, 1
      %v1008 = vadd.f32 %v1006, %v1007
      %v1009 = vmul.f32 %v782, %v782
      %v1010 = vmul.f32 %v787, %v787
      %v1011 = vmul.f32 %v792, %v792
      %v1012 = vmul.f32 %v797, %v797
      %v1013 = vmul.f32 %v802, %v802
      %v1014 = vmul.f32 %v807, %v807
      %v1015 = vmul.f32 %v812, %v812
      %v1016 = vmul.f32 %v817, %v817
      %v1017 = vmul.f32 %v822, %v822
      %v1018 = vmul.f32 %v827, %v827
      %v1019 = vmul.f32 %v832, %v832
      %v1020 = vmul.f32 %v837, %v837
      %v1021 = vmul.f32 %v842, %v842
      %v1022 = vmul.f32 %v847, %v847
      %v1023 = vmul.f32 %v852, %v852
      %v1024 = vmul.f32 %v857, %v857
      %v1025 = vmul.f32 %v862, %v862
      %v1026 = vmul.f32 %v867, %v867
      %v1027 = vmul.f32 %v872, %v872
      %v1028 = vmul.f32 %v877, %v877
      %v1029 = vmul.f32 %v882, %v882
      %v1030 = vmul.f32 %v887, %v887
      %v1031 = vmul.f32 %v892, %v892
      %v1032 = vmul.f32 %v897, %v897
      %v1033 = vmul.f32 %v902, %v902
      %v1034 = vmul.f32 %v907, %v907
      %v1035 = vmul.f32 %v912, %v912
      %v1036 = vmul.f32 %v917, %v917
      %v1037 = vmul.f32 %v922, %v922
      %v1038 = vmul.f32 %v927, %v927
      %v1039 = vmul.f32 %v932, %v932
      %v1040 = vmul.f32 %v937, %v937
      %v1041 = vadd.f32 %v1009, %v1010
      %v1042 = vadd.f32 %v1041, %v1011
      %v1043 = vadd.f32 %v1042, %v1012
      %v1044 = vadd.f32 %v1043, %v1013
      %v1045 = vadd.f32 %v1044, %v1014
      %v1046 = vadd.f32 %v1045, %v1015
      %v1047 = vadd.f32 %v1046, %v1016
      %v1048 = vadd.f32 %v1047, %v1017
      %v1049 = vadd.f32 %v1048, %v1018
      %v1050 = vadd.f32 %v1049, %v1019
      %v1051 = vadd.f32 %v1050, %v1020
      %v1052 = vadd.f32 %v1051, %v1021
      %v1053 = vadd.f32 %v1052, %v1022
      %v1054 = vadd.f32 %v1053, %v1023
      %v1055 = vadd.f32 %v1054, %v1024
      %v1056 = vadd.f32 %v1055, %v1025
      %v1057 = vadd.f32 %v1056, %v1026
      %v1058 = vadd.f32 %v1057, %v1027
      %v1059 = vadd.f32 %v1058, %v1028
      %v1060 = vadd.f32 %v1059, %v1029
      %v1061 = vadd.f32 %v1060, %v1030
      %v1062 = vadd.f32 %v1061, %v1031
      %v1063 = vadd.f32 %v1062, %v1032
      %v1064 = vadd.f32 %v1063, %v1033
      %v1065 = vadd.f32 %v1064, %v1034
      %v1066 = vadd.f32 %v1065, %v1035
      %v1067 = vadd.f32 %v1066, %v1036
      %v1068 = vadd.f32 %v1067, %v1037
      %v1069 = vadd.f32 %v1068, %v1038
      %v1070 = vadd.f32 %v1069, %v1039
      %v1071 = vadd.f32 %v1070, %v1040
      %v1072 = vrot.slane %v1071, 4
      %v1073 = vadd.f32 %v1071, %v1072
      %v1074 = vrot.slane %v1073, 2
      %v1075 = vadd.f32 %v1073, %v1074
      %v1076 = vrot.slane %v1075, 1
      %v1077 = vadd.f32 %v1075, %v1076
      %v1078 = vsel %vm696, %v1008, %v1077
      %1079 = vst [vmem:[%s284] sm:$0x3] %v1078
      %p1080 = scmp.lt.s32.totalorder %s18, 1
      %s1081 = scalar_select %p1080, %s18, 1
      %s1082 = smul.addr %s1081, 32
      %s1083 = smul.addr %s1082, 8
      %s1084 = scalar_lea.vmem %s3, %s1083
      %p1085 = scmp.lt.s32.totalorder %s18, 1
      %s1086 = scalar_select %p1085, %s18, 1
      %s1087 = smul.addr %s1086, 32
      %s1088 = smul.addr %s1087, 8
      %s1089 = scalar_lea.vmem %s4, %s1088
      %p1090 = scmp.lt.s32.totalorder %s18, 1
      %s1091 = scalar_select %p1090, %s18, 1
      %s1092 = smul.addr %s1091, 2
      %s1093 = scalar_lea.vmem %s5, %s1092
      %p1094 = scmp.lt.s32.totalorder %s18, 1
      %s1095 = scalar_select %p1094, %s18, 1
      %s1096 = smul.addr %s1095, 2
      %s1097 = scalar_lea.vmem %s6, %s1096
      // Predicated region
      $region33: #{bottleneck_resblock.4} parent=31 // pred_check
        %p1098 = pneg %p104
      $region34: #{bottleneck_resblock.4} parent=31 // pred_check_branch
        %1100 = sbr.rel (%p1098) target = $region36
      $region35: #{bottleneck_resblock.4} parent=31 // pred_region
        _
      $region36: #{bottleneck_resblock.4} parent=31 // pred_fallthru
        _
      // Predicated region
      $region37: #{bottleneck_resblock.4} parent=31 // pred_check
        %p1101 = pneg %p130
      $region38: #{bottleneck_resblock.4} parent=31 // pred_check_branch
        %1103 = sbr.rel (%p1101) target = $region40
      $region39: #{bottleneck_resblock.4} parent=31 // pred_region
        _
      $region40: #{bottleneck_resblock.4} parent=31 // pred_fallthru
        _
      // Predicated region
      $region41: #{bottleneck_resblock.4} parent=31 // pred_check
        %p1104 = pneg %p156
      $region42: #{bottleneck_resblock.4} parent=31 // pred_check_branch
        %1106 = sbr.rel (%p1104) target = $region44
      $region43: #{bottleneck_resblock.4} parent=31 // pred_region
        _
      $region44: #{bottleneck_resblock.4} parent=31 // pred_fallthru
        _
      // Predicated region
      $region45: #{bottleneck_resblock.4} parent=31 // pred_check
        %p1107 = pneg %p182
      $region46: #{bottleneck_resblock.4} parent=31 // pred_check_branch
        %1109 = sbr.rel (%p1107) target = $region48
      $region47: #{bottleneck_resblock.4} parent=31 // pred_region
        _
      $region48: #{bottleneck_resblock.4} parent=31 // pred_fallthru
        _
    $region32: #{bottleneck_resblock.4} parent=5 // pred_fallthru
      _
    %p1110 = scmp.le.s32.totalorder 2, %s13
    // Predicated region
    $region49: #{bottleneck_resblock.4} parent=5 // pred_check
      %p1111 = pneg %p1110
    $region50: #{bottleneck_resblock.4} parent=5 // pred_check_branch
      %1113 = sbr.rel (%p1111) target = $region52
    $region51: #{bottleneck_resblock.4} parent=5 // pred_region
      %s1114 = ssub.s32 %s13, 2
      // Predicated region
      $region53: #{bottleneck_resblock.4} parent=51 // pred_check
        %p1115 = pneg %p110
      $region54: #{bottleneck_resblock.4} parent=51 // pred_check_branch
        %1117 = sbr.rel (%p1115) target = $region56
      $region55: #{bottleneck_resblock.4} parent=51 // pred_region
        %p1118 = scmp.lt.s32.totalorder %s19, 1
        %s1119 = scalar_select %p1118, %s19, 1
        %s1120 = smul.addr %s1119, 32
        %s1121 = smul.addr %s1120, 8
        %s1122 = scalar_lea.vmem %s3, %s1121
      $region56: #{bottleneck_resblock.4} parent=51 // pred_fallthru
        _
      // Predicated region
      $region57: #{bottleneck_resblock.4} parent=51 // pred_check
        %p1123 = pneg %p136
      $region58: #{bottleneck_resblock.4} parent=51 // pred_check_branch
        %1125 = sbr.rel (%p1123) target = $region60
      $region59: #{bottleneck_resblock.4} parent=51 // pred_region
        %p1126 = scmp.lt.s32.totalorder %s19, 1
        %s1127 = scalar_select %p1126, %s19, 1
        %s1128 = smul.addr %s1127, 32
        %s1129 = smul.addr %s1128, 8
        %s1130 = scalar_lea.vmem %s4, %s1129
      $region60: #{bottleneck_resblock.4} parent=51 // pred_fallthru
        _
      // Predicated region
      $region61: #{bottleneck_resblock.4} parent=51 // pred_check
        %p1131 = pneg %p162
      $region62: #{bottleneck_resblock.4} parent=51 // pred_check_branch
        %1133 = sbr.rel (%p1131) target = $region64
      $region63: #{bottleneck_resblock.4} parent=51 // pred_region
        %p1134 = scmp.lt.s32.totalorder %s19, 1
        %s1135 = scalar_select %p1134, %s19, 1
        %s1136 = smul.addr %s1135, 2
        %s1137 = scalar_lea.vmem %s5, %s1136
      $region64: #{bottleneck_resblock.4} parent=51 // pred_fallthru
        _
      // Predicated region
      $region65: #{bottleneck_resblock.4} parent=51 // pred_check
        %p1138 = pneg %p188
      $region66: #{bottleneck_resblock.4} parent=51 // pred_check_branch
        %1140 = sbr.rel (%p1138) target = $region68
      $region67: #{bottleneck_resblock.4} parent=51 // pred_region
        %p1141 = scmp.lt.s32.totalorder %s19, 1
        %s1142 = scalar_select %p1141, %s19, 1
        %s1143 = smul.addr %s1142, 2
        %s1144 = scalar_lea.vmem %s6, %s1143
      $region68: #{bottleneck_resblock.4} parent=51 // pred_fallthru
        _
    $region52: #{bottleneck_resblock.4} parent=5 // pred_fallthru
      _
  $region6: #{bottleneck_resblock.4} parent=0 // loop_footer
    %s17 = sadd.s32 1, %s13
  $region7: #{bottleneck_resblock.4} parent=0 // loop_footer_branch
    %12 = sbr.rel target = $region3
  $region8: #{bottleneck_resblock.4} parent=0 // loop_exit
    _

// kernel: bottleneck_resblock.5
$region0: #{bottleneck_resblock.5}
  #allocation0 [shape = 'u32[]', space=smem, size = 0x4, offset = 0x4, fixed_abs, tag = 'smem constant byte address 0x4 - core index']
  #allocation1 [shape = 'u32[144,128]{1,0:T(1,128)}', space=vmem, size = 0x12000, scoped, tag = 'internal scratch']
  %s0 = inlined_call_operand.vmem [shape: f32[2,16,16,128], index: 0, kind: input, shape index: {}]
  %s1 = inlined_call_operand.vmem [shape: f32[1,128], index: 1, kind: input, shape index: {}]
  %s2 = inlined_call_operand.vmem [shape: f32[1,128], index: 2, kind: input, shape index: {}]
  %s3 = inlined_call_operand.vmem [shape: f32[3,384,128], index: 3, kind: input, shape index: {}]
  %s4 = inlined_call_operand.vmem [shape: f32[2,16,16,128], index: 4, kind: output, shape index: {0}]
  %s5 = inlined_call_operand.vmem [shape: f32[2,2,128], index: 5, kind: output, shape index: {1}]
  %6 = xla_tuple %s4, %s5
  %s7 = sld [smem:[#allocation0]]
  $region57: #{bottleneck_resblock.5} parent=0
    _
  %s9 = ssub.s32 1, %s7
  %s10 = scalar_select 0, %s9, %s7
  loop: start=0, step=1, limit=4
  $region2: #{bottleneck_resblock.5} parent=0 // loop_pre_header
    _
  $region3: #{bottleneck_resblock.5} parent=0 // loop_header
    %s12 = sphi 0, %s16
    %p13 = scmp.ge.s32.totalorder %s12, 4
    %s22 = sphi 0, %s24
    %s25 = sphi 0, %s22
    %s26 = sphi 0, %s25
    %s42 = sphi 0, %s26
    %s46 = sphi 0, %s46
    %s48 = sphi 0, %s46
    %s49 = sphi 0, %s48
    %s63 = sphi 0, %s49
    %s67 = sphi 0, %s67
    %s69 = sphi 0, %s67
    %s70 = sphi 0, %s69
    %s84 = sphi 0, %s70
    %s88 = sphi 0, %s88
    %s90 = sphi 0, %s88
    %s91 = sphi 0, %s90
    %s105 = sphi 0, %s91
    %s111 = sphi 0, %s113
    %s114 = sphi 0, %s111
    %s115 = sphi 0, %s114
    %s131 = sphi 0, %s115
    %s137 = sphi 0, %s139
    %s140 = sphi 0, %s137
    %s141 = sphi 0, %s140
    %s157 = sphi 0, %s141
  $region4: #{bottleneck_resblock.5} parent=0 // loop_header_branch
    %15 = sbr.rel (%p13) target = $region8
  $region5: #{bottleneck_resblock.5} parent=0 // loop_body
    %s17 = ssub.s32 %s12, 1
    %s18 = ssub.s32 %s12, 2
    %s19 = sadd.s32 %s12, 1
    %s20 = ssub.s32 %s12, %s19
    %p21 = scmp.eq.s32.totalorder %s20, 0
    %s23 = sadd.s32 %s22, 1
    %s24 = scalar_select %p21, %s22, %s23
    %p27 = pneg %p21
    %p28 = scmp.eq.s32.totalorder %s12, 1
    %p29 = por %p27, %p28
    %p30 = scmp.ne.s32.totalorder %s22, %s25
    %p31 = scmp.eq.s32.totalorder %s12, 0
    %p32 = por %p30, %p31
    %p33 = scmp.ne.s32.totalorder %s22, %s25
    %p34 = scmp.eq.s32.totalorder %s17, 1
    %p35 = por %p33, %p34
    %p36 = scmp.ne.s32.totalorder %s25, %s26
    %p37 = scmp.eq.s32.totalorder %s17, 0
    %p38 = por %p36, %p37
    %p39 = scmp.ne.s32.totalorder %s25, %s26
    %p40 = scmp.eq.s32.totalorder %s18, 1
    %p41 = por %p39, %p40
    %p43 = scmp.ne.s32.totalorder %s26, %s42
    %p44 = scmp.eq.s32.totalorder %s18, 0
    %p45 = por %p43, %p44
    %s47 = sadd.s32 %s46, 1
    %p50 = scmp.eq.s32.totalorder %s12, 1
    %p51 = scmp.ne.s32.totalorder %s46, %s48
    %p52 = scmp.eq.s32.totalorder %s12, 0
    %p53 = por %p51, %p52
    %p54 = scmp.ne.s32.totalorder %s46, %s48
    %p55 = scmp.eq.s32.totalorder %s17, 1
    %p56 = por %p54, %p55
    %p57 = scmp.ne.s32.totalorder %s48, %s49
    %p58 = scmp.eq.s32.totalorder %s17, 0
    %p59 = por %p57, %p58
    %p60 = scmp.ne.s32.totalorder %s48, %s49
    %p61 = scmp.eq.s32.totalorder %s18, 1
    %p62 = por %p60, %p61
    %p64 = scmp.ne.s32.totalorder %s49, %s63
    %p65 = scmp.eq.s32.totalorder %s18, 0
    %p66 = por %p64, %p65
    %s68 = sadd.s32 %s67, 1
    %p71 = scmp.eq.s32.totalorder %s12, 1
    %p72 = scmp.ne.s32.totalorder %s67, %s69
    %p73 = scmp.eq.s32.totalorder %s12, 0
    %p74 = por %p72, %p73
    %p75 = scmp.ne.s32.totalorder %s67, %s69
    %p76 = scmp.eq.s32.totalorder %s17, 1
    %p77 = por %p75, %p76
    %p78 = scmp.ne.s32.totalorder %s69, %s70
    %p79 = scmp.eq.s32.totalorder %s17, 0
    %p80 = por %p78, %p79
    %p81 = scmp.ne.s32.totalorder %s69, %s70
    %p82 = scmp.eq.s32.totalorder %s18, 1
    %p83 = por %p81, %p82
    %p85 = scmp.ne.s32.totalorder %s70, %s84
    %p86 = scmp.eq.s32.totalorder %s18, 0
    %p87 = por %p85, %p86
    %s89 = sadd.s32 %s88, 1
    %p92 = scmp.eq.s32.totalorder %s12, 1
    %p93 = scmp.ne.s32.totalorder %s88, %s90
    %p94 = scmp.eq.s32.totalorder %s12, 0
    %p95 = por %p93, %p94
    %p96 = scmp.ne.s32.totalorder %s88, %s90
    %p97 = scmp.eq.s32.totalorder %s17, 1
    %p98 = por %p96, %p97
    %p99 = scmp.ne.s32.totalorder %s90, %s91
    %p100 = scmp.eq.s32.totalorder %s17, 0
    %p101 = por %p99, %p100
    %p102 = scmp.ne.s32.totalorder %s90, %s91
    %p103 = scmp.eq.s32.totalorder %s18, 1
    %p104 = por %p102, %p103
    %p106 = scmp.ne.s32.totalorder %s91, %s105
    %p107 = scmp.eq.s32.totalorder %s18, 0
    %p108 = por %p106, %p107
    %s109 = ssub.s32 %s12, %s19
    %p110 = scmp.eq.s32.totalorder %s109, 0
    %s112 = sadd.s32 %s111, 1
    %s113 = scalar_select %p110, %s111, %s112
    %p116 = pneg %p110
    %p117 = scmp.eq.s32.totalorder %s12, 1
    %p118 = por %p116, %p117
    %p119 = scmp.ne.s32.totalorder %s111, %s114
    %p120 = scmp.eq.s32.totalorder %s12, 0
    %p121 = por %p119, %p120
    %p122 = scmp.ne.s32.totalorder %s111, %s114
    %p123 = scmp.eq.s32.totalorder %s17, 1
    %p124 = por %p122, %p123
    %p125 = scmp.ne.s32.totalorder %s114, %s115
    %p126 = scmp.eq.s32.totalorder %s17, 0
    %p127 = por %p125, %p126
    %p128 = scmp.ne.s32.totalorder %s114, %s115
    %p129 = scmp.eq.s32.totalorder %s18, 1
    %p130 = por %p128, %p129
    %p132 = scmp.ne.s32.totalorder %s115, %s131
    %p133 = scmp.eq.s32.totalorder %s18, 0
    %p134 = por %p132, %p133
    %s135 = ssub.s32 %s12, %s19
    %p136 = scmp.eq.s32.totalorder %s135, 0
    %s138 = sadd.s32 %s137, 1
    %s139 = scalar_select %p136, %s137, %s138
    %p142 = pneg %p136
    %p143 = scmp.eq.s32.totalorder %s12, 1
    %p144 = por %p142, %p143
    %p145 = scmp.ne.s32.totalorder %s137, %s140
    %p146 = scmp.eq.s32.totalorder %s12, 0
    %p147 = por %p145, %p146
    %p148 = scmp.ne.s32.totalorder %s137, %s140
    %p149 = scmp.eq.s32.totalorder %s17, 1
    %p150 = por %p148, %p149
    %p151 = scmp.ne.s32.totalorder %s140, %s141
    %p152 = scmp.eq.s32.totalorder %s17, 0
    %p153 = por %p151, %p152
    %p154 = scmp.ne.s32.totalorder %s140, %s141
    %p155 = scmp.eq.s32.totalorder %s18, 1
    %p156 = por %p154, %p155
    %p158 = scmp.ne.s32.totalorder %s141, %s157
    %p159 = scmp.eq.s32.totalorder %s18, 0
    %p160 = por %p158, %p159
    %p161 = scmp.le.s32.totalorder 1, %s12
    %p162 = scmp.lt.s32.totalorder %s12, 3
    %p163 = pnand %p161, %p162
    %p164 = pneg %p163
    // Predicated region
    $region9: #{bottleneck_resblock.5} parent=5 // pred_check
      _
    $region10: #{bottleneck_resblock.5} parent=5 // pred_check_branch
      %166 = sbr.rel (%p163) target = $region12
    $region11: #{bottleneck_resblock.5} parent=5 // pred_region
      %s167 = ssub.s32 %s12, 1
      // Predicated region
      $region13: #{bottleneck_resblock.5} parent=11 // pred_check
        %p168 = pneg %p59
      $region14: #{bottleneck_resblock.5} parent=11 // pred_check_branch
        %170 = sbr.rel (%p168) target = $region16
      $region15: #{bottleneck_resblock.5} parent=11 // pred_region
        _
      $region16: #{bottleneck_resblock.5} parent=11 // pred_fallthru
        _
      // Predicated region
      $region17: #{bottleneck_resblock.5} parent=11 // pred_check
        %p171 = pneg %p80
      $region18: #{bottleneck_resblock.5} parent=11 // pred_check_branch
        %173 = sbr.rel (%p171) target = $region20
      $region19: #{bottleneck_resblock.5} parent=11 // pred_region
        _
      $region20: #{bottleneck_resblock.5} parent=11 // pred_fallthru
        _
      // Predicated region
      $region21: #{bottleneck_resblock.5} parent=11 // pred_check
        %p174 = pneg %p101
      $region22: #{bottleneck_resblock.5} parent=11 // pred_check_branch
        %176 = sbr.rel (%p174) target = $region24
      $region23: #{bottleneck_resblock.5} parent=11 // pred_region
        _
      $region24: #{bottleneck_resblock.5} parent=11 // pred_fallthru
        _
    $region12: #{bottleneck_resblock.5} parent=5 // pred_fallthru
      _
    %p177 = scmp.lt.s32.totalorder %s12, 2
    // Predicated region
    $region25: #{bottleneck_resblock.5} parent=5 // pred_check
      %p178 = pneg %p177
    $region26: #{bottleneck_resblock.5} parent=5 // pred_check_branch
      %180 = sbr.rel (%p178) target = $region28
    $region27: #{bottleneck_resblock.5} parent=5 // pred_region
      // Predicated region
      $region29: #{bottleneck_resblock.5} parent=27 // pred_check
        %p181 = pneg %p32
      $region30: #{bottleneck_resblock.5} parent=27 // pred_check_branch
        %183 = sbr.rel (%p181) target = $region32
      $region31: #{bottleneck_resblock.5} parent=27 // pred_region
        %p184 = scmp.lt.s32.totalorder %s12, 1
        %s185 = scalar_select %p184, %s12, 1
        %s186 = smul.addr %s185, 32
        %s187 = smul.addr %s186, 8
        %s188 = scalar_lea.vmem %s0, %s187
      $region32: #{bottleneck_resblock.5} parent=27 // pred_fallthru
        _
    $region28: #{bottleneck_resblock.5} parent=5 // pred_fallthru
      _
    %p189 = scmp.le.s32.totalorder 1, %s12
    %p190 = scmp.lt.s32.totalorder %s12, 3
    %p191 = pnand %p189, %p190
    %p192 = pneg %p191
    // Predicated region
    $region33: #{bottleneck_resblock.5} parent=5 // pred_check
      _
    $region34: #{bottleneck_resblock.5} parent=5 // pred_check_branch
      %194 = sbr.rel (%p191) target = $region36
    $region35: #{bottleneck_resblock.5} parent=5 // pred_region
      %s195 = ssub.s32 %s12, 1
      %p196 = scmp.lt.s32.totalorder %s17, 1
      %s197 = scalar_select %p196, %s17, 1
      %s198 = smul.addr %s197, 32
      %s199 = smul.addr %s198, 8
      %s200 = scalar_lea.vmem %s0, %s199
      %p201 = pneg %p38
      %p202 = pneg %p35
      %p203 = pneg %p59
      %p204 = pneg %p56
      %p205 = pneg %p80
      %p206 = pneg %p77
      %p207 = pneg %p101
      %p208 = pneg %p98
      %p209 = pneg %p127
      %p210 = pneg %p124
      %p211 = scmp.lt.s32.totalorder %s17, 1
      %s212 = scalar_select %p211, %s17, 1
      %s213 = smul.addr %s212, 32
      %s214 = smul.addr %s213, 8
      %s215 = scalar_lea.vmem %s4, %s214
      %p216 = pneg %p153
      %p217 = pneg %p150
      %p218 = scmp.lt.s32.totalorder %s17, 1
      %s219 = scalar_select %p218, %s17, 1
      %s220 = smul.addr %s219, 2
      %s221 = scalar_lea.vmem %s5, %s220
      %p222 = scmp.lt.s32.totalorder %s17, 1
      %s223 = scalar_select %p222, %s17, 1
      %s224 = smul.addr %s223, 32
      %s225 = smul.addr %s224, 8
      %s226 = scalar_lea.vmem %s0, %s225
      %p227 = scmp.lt.s32.totalorder %s17, 1
      %s228 = scalar_select %p227, %s17, 1
      %s229 = smul.addr %s228, 32
      %s230 = smul.addr %s229, 8
      %s231 = scalar_lea.vmem %s4, %s230
      %p232 = scmp.lt.s32.totalorder %s17, 1
      %s233 = scalar_select %p232, %s17, 1
      %s234 = smul.addr %s233, 2
      %s235 = scalar_lea.vmem %s5, %s234
      %v236 = vld [vmem:[%s226] sm:$0xff]
      %v237 = vld [vmem:[%s226 + $0x8] sm:$0xff]
      %v238 = vld [vmem:[%s226 + $0x10] sm:$0xff]
      %v239 = vld [vmem:[%s226 + $0x18] sm:$0xff]
      %v240 = vld [vmem:[%s226 + $0x20] sm:$0xff]
      %v241 = vld [vmem:[%s226 + $0x28] sm:$0xff]
      %v242 = vld [vmem:[%s226 + $0x30] sm:$0xff]
      %v243 = vld [vmem:[%s226 + $0x38] sm:$0xff]
      %v244 = vld [vmem:[%s226 + $0x40] sm:$0xff]
      %v245 = vld [vmem:[%s226 + $0x48] sm:$0xff]
      %v246 = vld [vmem:[%s226 + $0x50] sm:$0xff]
      %v247 = vld [vmem:[%s226 + $0x58] sm:$0xff]
      %v248 = vld [vmem:[%s226 + $0x60] sm:$0xff]
      %v249 = vld [vmem:[%s226 + $0x68] sm:$0xff]
      %v250 = vld [vmem:[%s226 + $0x70] sm:$0xff]
      %v251 = vld [vmem:[%s226 + $0x78] sm:$0xff]
      %v252 = vld [vmem:[%s226 + $0x80] sm:$0xff]
      %v253 = vld [vmem:[%s226 + $0x88] sm:$0xff]
      %v254 = vld [vmem:[%s226 + $0x90] sm:$0xff]
      %v255 = vld [vmem:[%s226 + $0x98] sm:$0xff]
      %v256 = vld [vmem:[%s226 + $0xa0] sm:$0xff]
      %v257 = vld [vmem:[%s226 + $0xa8] sm:$0xff]
      %v258 = vld [vmem:[%s226 + $0xb0] sm:$0xff]
      %v259 = vld [vmem:[%s226 + $0xb8] sm:$0xff]
      %v260 = vld [vmem:[%s226 + $0xc0] sm:$0xff]
      %v261 = vld [vmem:[%s226 + $0xc8] sm:$0xff]
      %v262 = vld [vmem:[%s226 + $0xd0] sm:$0xff]
      %v263 = vld [vmem:[%s226 + $0xd8] sm:$0xff]
      %v264 = vld [vmem:[%s226 + $0xe0] sm:$0xff]
      %v265 = vld [vmem:[%s226 + $0xe8] sm:$0xff]
      %v266 = vld [vmem:[%s226 + $0xf0] sm:$0xff]
      %v267 = vld [vmem:[%s226 + $0xf8] sm:$0xff]
      %v268 = vld [vmem:[%s1] sm:$0x1]
      %v270 = vlaneseq
      %v271 = vshrl.u32 %v270, 7
      %v272 = vsub.s32 0, %v271
      %v273 = vrot.slane %v268, %v272
      %v275 = vmul.f32 %v236, %v273
      %v276 = vmul.f32 %v237, %v273
      %v277 = vmul.f32 %v238, %v273
      %v278 = vmul.f32 %v239, %v273
      %v279 = vmul.f32 %v240, %v273
      %v280 = vmul.f32 %v241, %v273
      %v281 = vmul.f32 %v242, %v273
      %v282 = vmul.f32 %v243, %v273
      %v283 = vmul.f32 %v244, %v273
      %v284 = vmul.f32 %v245, %v273
      %v285 = vmul.f32 %v246, %v273
      %v286 = vmul.f32 %v247, %v273
      %v287 = vmul.f32 %v248, %v273
      %v288 = vmul.f32 %v249, %v273
      %v289 = vmul.f32 %v250, %v273
      %v290 = vmul.f32 %v251, %v273
      %v291 = vmul.f32 %v252, %v273
      %v292 = vmul.f32 %v253, %v273
      %v293 = vmul.f32 %v254, %v273
      %v294 = vmul.f32 %v255, %v273
      %v295 = vmul.f32 %v256, %v273
      %v296 = vmul.f32 %v257, %v273
      %v297 = vmul.f32 %v258, %v273
      %v298 = vmul.f32 %v259, %v273
      %v299 = vmul.f32 %v260, %v273
      %v300 = vmul.f32 %v261, %v273
      %v301 = vmul.f32 %v262, %v273
      %v302 = vmul.f32 %v263, %v273
      %v303 = vmul.f32 %v264, %v273
      %v304 = vmul.f32 %v265, %v273
      %v305 = vmul.f32 %v266, %v273
      %v306 = vmul.f32 %v267, %v273
      %v307 = vld [vmem:[%s2] sm:$0x1]
      %v309 = vlaneseq
      %v310 = vshrl.u32 %v309, 7
      %v311 = vsub.s32 0, %v310
      %v312 = vrot.slane %v307, %v311
      %v314 = vadd.f32 %v275, %v312
      %v315 = vadd.f32 %v276, %v312
      %v316 = vadd.f32 %v277, %v312
      %v317 = vadd.f32 %v278, %v312
      %v318 = vadd.f32 %v279, %v312
      %v319 = vadd.f32 %v280, %v312
      %v320 = vadd.f32 %v281, %v312
      %v321 = vadd.f32 %v282, %v312
      %v322 = vadd.f32 %v283, %v312
      %v323 = vadd.f32 %v284, %v312
      %v324 = vadd.f32 %v285, %v312
      %v325 = vadd.f32 %v286, %v312
      %v326 = vadd.f32 %v287, %v312
      %v327 = vadd.f32 %v288, %v312
      %v328 = vadd.f32 %v289, %v312
      %v329 = vadd.f32 %v290, %v312
      %v330 = vadd.f32 %v291, %v312
      %v331 = vadd.f32 %v292, %v312
      %v332 = vadd.f32 %v293, %v312
      %v333 = vadd.f32 %v294, %v312
      %v334 = vadd.f32 %v295, %v312
      %v335 = vadd.f32 %v296, %v312
      %v336 = vadd.f32 %v297, %v312
      %v337 = vadd.f32 %v298, %v312
      %v338 = vadd.f32 %v299, %v312
      %v339 = vadd.f32 %v300, %v312
      %v340 = vadd.f32 %v301, %v312
      %v341 = vadd.f32 %v302, %v312
      %v342 = vadd.f32 %v303, %v312
      %v343 = vadd.f32 %v304, %v312
      %v344 = vadd.f32 %v305, %v312
      %v345 = vadd.f32 %v306, %v312
      %v346 = vmax.f32 %v314, 0.0
      %v347 = vmax.f32 %v315, 0.0
      %v348 = vmax.f32 %v316, 0.0
      %v349 = vmax.f32 %v317, 0.0
      %v350 = vmax.f32 %v318, 0.0
      %v351 = vmax.f32 %v319, 0.0
      %v352 = vmax.f32 %v320, 0.0
      %v353 = vmax.f32 %v321, 0.0
      %v354 = vmax.f32 %v322, 0.0
      %v355 = vmax.f32 %v323, 0.0
      %v356 = vmax.f32 %v324, 0.0
      %v357 = vmax.f32 %v325, 0.0
      %v358 = vmax.f32 %v326, 0.0
      %v359 = vmax.f32 %v327, 0.0
      %v360 = vmax.f32 %v328, 0.0
      %v361 = vmax.f32 %v329, 0.0
      %v362 = vmax.f32 %v330, 0.0
      %v363 = vmax.f32 %v331, 0.0
      %v364 = vmax.f32 %v332, 0.0
      %v365 = vmax.f32 %v333, 0.0
      %v366 = vmax.f32 %v334, 0.0
      %v367 = vmax.f32 %v335, 0.0
      %v368 = vmax.f32 %v336, 0.0
      %v369 = vmax.f32 %v337, 0.0
      %v370 = vmax.f32 %v338, 0.0
      %v371 = vmax.f32 %v339, 0.0
      %v372 = vmax.f32 %v340, 0.0
      %v373 = vmax.f32 %v341, 0.0
      %v374 = vmax.f32 %v342, 0.0
      %v375 = vmax.f32 %v343, 0.0
      %v376 = vmax.f32 %v344, 0.0
      %v377 = vmax.f32 %v345, 0.0
      %vm410 = vcmask 1040384
      %v411 = vrot.slane %v346, 7
      %v412 = vrot.slane %v347, 7
      %v413 = vsel %vm410, %v411, %v412
      %v414 = vrot.slane %v348, 7
      %v415 = vrot.slane %v349, 7
      %v416 = vsel %vm410, %v414, %v415
      %v417 = vrot.slane %v350, 7
      %v418 = vrot.slane %v351, 7
      %v419 = vsel %vm410, %v417, %v418
      %v420 = vrot.slane %v352, 7
      %v421 = vrot.slane %v353, 7
      %v422 = vsel %vm410, %v420, %v421
      %v423 = vrot.slane %v354, 7
      %v424 = vrot.slane %v355, 7
      %v425 = vsel %vm410, %v423, %v424
      %v426 = vrot.slane %v356, 7
      %v427 = vrot.slane %v357, 7
      %v428 = vsel %vm410, %v426, %v427
      %v429 = vrot.slane %v358, 7
      %v430 = vrot.slane %v359, 7
      %v431 = vsel %vm410, %v429, %v430
      %v432 = vrot.slane %v360, 7
      %v433 = vrot.slane %v361, 7
      %v434 = vsel %vm410, %v432, %v433
      %v435 = vrot.slane %v362, 7
      %v436 = vrot.slane %v363, 7
      %v437 = vsel %vm410, %v435, %v436
      %v438 = vrot.slane %v364, 7
      %v439 = vrot.slane %v365, 7
      %v440 = vsel %vm410, %v438, %v439
      %v441 = vrot.slane %v366, 7
      %v442 = vrot.slane %v367, 7
      %v443 = vsel %vm410, %v441, %v442
      %v444 = vrot.slane %v368, 7
      %v445 = vrot.slane %v369, 7
      %v446 = vsel %vm410, %v444, %v445
      %v447 = vrot.slane %v370, 7
      %v448 = vrot.slane %v371, 7
      %v449 = vsel %vm410, %v447, %v448
      %v450 = vrot.slane %v372, 7
      %v451 = vrot.slane %v373, 7
      %v452 = vsel %vm410, %v450, %v451
      %v453 = vrot.slane %v374, 7
      %v454 = vrot.slane %v375, 7
      %v455 = vsel %vm410, %v453, %v454
      %v456 = vrot.slane %v376, 7
      %v457 = vrot.slane %v377, 7
      %v458 = vsel %vm410, %v456, %v457
      %v507 = vsel %vm410, 0.0, %v411
      %v508 = vsel %vm410, 0.0, %v414
      %v509 = vsel %vm410, 0.0, %v417
      %v510 = vsel %vm410, 0.0, %v420
      %v511 = vsel %vm410, 0.0, %v423
      %v512 = vsel %vm410, 0.0, %v426
      %v513 = vsel %vm410, 0.0, %v429
      %v514 = vsel %vm410, 0.0, %v432
      %v515 = vsel %vm410, 0.0, %v435
      %v516 = vsel %vm410, 0.0, %v438
      %v517 = vsel %vm410, 0.0, %v441
      %v518 = vsel %vm410, 0.0, %v444
      %v519 = vsel %vm410, 0.0, %v447
      %v520 = vsel %vm410, 0.0, %v450
      %v521 = vsel %vm410, 0.0, %v453
      %v522 = vsel %vm410, 0.0, %v456
      %v523 = vsel %vm410, %v412, 0.0
      %v524 = vsel %vm410, %v415, 0.0
      %v525 = vsel %vm410, %v418, 0.0
      %v526 = vsel %vm410, %v421, 0.0
      %v527 = vsel %vm410, %v424, 0.0
      %v528 = vsel %vm410, %v427, 0.0
      %v529 = vsel %vm410, %v430, 0.0
      %v530 = vsel %vm410, %v433, 0.0
      %v531 = vsel %vm410, %v436, 0.0
      %v532 = vsel %vm410, %v439, 0.0
      %v533 = vsel %vm410, %v442, 0.0
      %v534 = vsel %vm410, %v445, 0.0
      %v535 = vsel %vm410, %v448, 0.0
      %v536 = vsel %vm410, %v451, 0.0
      %v537 = vsel %vm410, %v454, 0.0
      %v538 = vsel %vm410, %v457, 0.0
      %vm570 = vcmask 1046528
      %v571 = vrot.slane 0.0, 1
      %v572 = vsel %vm570, %v571, %v571
      %v573 = vrot.slane %v507, 1
      %v574 = vrot.slane %v413, 1
      %v575 = vsel %vm570, %v573, %v574
      %v576 = vrot.slane %v523, 1
      %v577 = vsel %vm570, %v574, %v576
      %v578 = vrot.slane %v508, 1
      %v579 = vrot.slane %v416, 1
      %v580 = vsel %vm570, %v578, %v579
      %v581 = vrot.slane %v524, 1
      %v582 = vsel %vm570, %v579, %v581
      %v583 = vrot.slane %v509, 1
      %v584 = vrot.slane %v419, 1
      %v585 = vsel %vm570, %v583, %v584
      %v586 = vrot.slane %v525, 1
      %v587 = vsel %vm570, %v584, %v586
      %v588 = vrot.slane %v510, 1
      %v589 = vrot.slane %v422, 1
      %v590 = vsel %vm570, %v588, %v589
      %v591 = vrot.slane %v526, 1
      %v592 = vsel %vm570, %v589, %v591
      %v593 = vrot.slane %v511, 1
      %v594 = vrot.slane %v425, 1
      %v595 = vsel %vm570, %v593, %v594
      %v596 = vrot.slane %v527, 1
      %v597 = vsel %vm570, %v594, %v596
      %v598 = vrot.slane %v512, 1
      %v599 = vrot.slane %v428, 1
      %v600 = vsel %vm570, %v598, %v599
      %v601 = vrot.slane %v528, 1
      %v602 = vsel %vm570, %v599, %v601
      %v603 = vrot.slane %v513, 1
      %v604 = vrot.slane %v431, 1
      %v605 = vsel %vm570, %v603, %v604
      %v606 = vrot.slane %v529, 1
      %v607 = vsel %vm570, %v604, %v606
      %v608 = vrot.slane %v514, 1
      %v609 = vrot.slane %v434, 1
      %v610 = vsel %vm570, %v608, %v609
      %v611 = vrot.slane %v530, 1
      %v612 = vsel %vm570, %v609, %v611
      %v613 = vrot.slane %v515, 1
      %v614 = vrot.slane %v437, 1
      %v615 = vsel %vm570, %v613, %v614
      %v616 = vrot.slane %v531, 1
      %v617 = vsel %vm570, %v614, %v616
      %v618 = vrot.slane %v516, 1
      %v619 = vrot.slane %v440, 1
      %v620 = vsel %vm570, %v618, %v619
      %v621 = vrot.slane %v532, 1
      %v622 = vsel %vm570, %v619, %v621
      %v623 = vrot.slane %v517, 1
      %v624 = vrot.slane %v443, 1
      %v625 = vsel %vm570, %v623, %v624
      %v626 = vrot.slane %v533, 1
      %v627 = vsel %vm570, %v624, %v626
      %v628 = vrot.slane %v518, 1
      %v629 = vrot.slane %v446, 1
      %v630 = vsel %vm570, %v628, %v629
      %v631 = vrot.slane %v534, 1
      %v632 = vsel %vm570, %v629, %v631
      %v633 = vrot.slane %v519, 1
      %v634 = vrot.slane %v449, 1
      %v635 = vsel %vm570, %v633, %v634
      %v636 = vrot.slane %v535, 1
      %v637 = vsel %vm570, %v634, %v636
      %v638 = vrot.slane %v520, 1
      %v639 = vrot.slane %v452, 1
      %v640 = vsel %vm570, %v638, %v639
      %v641 = vrot.slane %v536, 1
      %v642 = vsel %vm570, %v639, %v641
      %v643 = vrot.slane %v521, 1
      %v644 = vrot.slane %v455, 1
      %v645 = vsel %vm570, %v643, %v644
      %v646 = vrot.slane %v537, 1
      %v647 = vsel %vm570, %v644, %v646
      %vm679 = vcmask 1045504
      %v680 = vrot.slane 0.0, 2
      %v681 = vsel %vm679, %v680, %v680
      %v682 = vrot.slane %v507, 2
      %v683 = vrot.slane %v413, 2
      %v684 = vsel %vm679, %v682, %v683
      %v685 = vrot.slane %v523, 2
      %v686 = vsel %vm679, %v683, %v685
      %v687 = vrot.slane %v508, 2
      %v688 = vrot.slane %v416, 2
      %v689 = vsel %vm679, %v687, %v688
      %v690 = vrot.slane %v524, 2
      %v691 = vsel %vm679, %v688, %v690
      %v692 = vrot.slane %v509, 2
      %v693 = vrot.slane %v419, 2
      %v694 = vsel %vm679, %v692, %v693
      %v695 = vrot.slane %v525, 2
      %v696 = vsel %vm679, %v693, %v695
      %v697 = vrot.slane %v510, 2
      %v698 = vrot.slane %v422, 2
      %v699 = vsel %vm679, %v697, %v698
      %v700 = vrot.slane %v526, 2
      %v701 = vsel %vm679, %v698, %v700
      %v702 = vrot.slane %v511, 2
      %v703 = vrot.slane %v425, 2
      %v704 = vsel %vm679, %v702, %v703
      %v705 = vrot.slane %v527, 2
      %v706 = vsel %vm679, %v703, %v705
      %v707 = vrot.slane %v512, 2
      %v708 = vrot.slane %v428, 2
      %v709 = vsel %vm679, %v707, %v708
      %v710 = vrot.slane %v528, 2
      %v711 = vsel %vm679, %v708, %v710
      %v712 = vrot.slane %v513, 2
      %v713 = vrot.slane %v431, 2
      %v714 = vsel %vm679, %v712, %v713
      %v715 = vrot.slane %v529, 2
      %v716 = vsel %vm679, %v713, %v715
      %v717 = vrot.slane %v514, 2
      %v718 = vrot.slane %v434, 2
      %v719 = vsel %vm679, %v717, %v718
      %v720 = vrot.slane %v530, 2
      %v721 = vsel %vm679, %v718, %v720
      %v722 = vrot.slane %v515, 2
      %v723 = vrot.slane %v437, 2
      %v724 = vsel %vm679, %v722, %v723
      %v725 = vrot.slane %v531, 2
      %v726 = vsel %vm679, %v723, %v725
      %v727 = vrot.slane %v516, 2
      %v728 = vrot.slane %v440, 2
      %v729 = vsel %vm679, %v727, %v728
      %v730 = vrot.slane %v532, 2
      %v731 = vsel %vm679, %v728, %v730
      %v732 = vrot.slane %v517, 2
      %v733 = vrot.slane %v443, 2
      %v734 = vsel %vm679, %v732, %v733
      %v735 = vrot.slane %v533, 2
      %v736 = vsel %vm679, %v733, %v735
      %v737 = vrot.slane %v518, 2
      %v738 = vrot.slane %v446, 2
      %v739 = vsel %vm679, %v737, %v738
      %v740 = vrot.slane %v534, 2
      %v741 = vsel %vm679, %v738, %v740
      %v742 = vrot.slane %v519, 2
      %v743 = vrot.slane %v449, 2
      %v744 = vsel %vm679, %v742, %v743
      %v745 = vrot.slane %v535, 2
      %v746 = vsel %vm679, %v743, %v745
      %v747 = vrot.slane %v520, 2
      %v748 = vrot.slane %v452, 2
      %v749 = vsel %vm679, %v747, %v748
      %v750 = vrot.slane %v536, 2
      %v751 = vsel %vm679, %v748, %v750
      %v752 = vrot.slane %v521, 2
      %v753 = vrot.slane %v455, 2
      %v754 = vsel %vm679, %v752, %v753
      %v755 = vrot.slane %v537, 2
      %v756 = vsel %vm679, %v753, %v755
      %v788 = vld [vmem:[%s3] sm:$0xff]
      %v789 = vld [vmem:[%s3 + $0x8] sm:$0xff]
      %v790 = vld [vmem:[%s3 + $0x10] sm:$0xff]
      %v791 = vld [vmem:[%s3 + $0x18] sm:$0xff]
      %v792 = vld [vmem:[%s3 + $0x20] sm:$0xff]
      %v793 = vld [vmem:[%s3 + $0x28] sm:$0xff]
      %v794 = vld [vmem:[%s3 + $0x30] sm:$0xff]
      %v795 = vld [vmem:[%s3 + $0x38] sm:$0xff]
      %v796 = vld [vmem:[%s3 + $0x40] sm:$0xff]
      %v797 = vld [vmem:[%s3 + $0x48] sm:$0xff]
      %v798 = vld [vmem:[%s3 + $0x50] sm:$0xff]
      %v799 = vld [vmem:[%s3 + $0x58] sm:$0xff]
      %v800 = vld [vmem:[%s3 + $0x60] sm:$0xff]
      %v801 = vld [vmem:[%s3 + $0x68] sm:$0xff]
      %v802 = vld [vmem:[%s3 + $0x70] sm:$0xff]
      %v803 = vld [vmem:[%s3 + $0x78] sm:$0xff]
      %v804 = vld [vmem:[%s3 + $0x80] sm:$0xff]
      %v805 = vld [vmem:[%s3 + $0x88] sm:$0xff]
      %v806 = vld [vmem:[%s3 + $0x90] sm:$0xff]
      %v807 = vld [vmem:[%s3 + $0x98] sm:$0xff]
      %v808 = vld [vmem:[%s3 + $0xa0] sm:$0xff]
      %v809 = vld [vmem:[%s3 + $0xa8] sm:$0xff]
      %v810 = vld [vmem:[%s3 + $0xb0] sm:$0xff]
      %v811 = vld [vmem:[%s3 + $0xb8] sm:$0xff]
      %v812 = vld [vmem:[%s3 + $0xc0] sm:$0xff]
      %v813 = vld [vmem:[%s3 + $0xc8] sm:$0xff]
      %v814 = vld [vmem:[%s3 + $0xd0] sm:$0xff]
      %v815 = vld [vmem:[%s3 + $0xd8] sm:$0xff]
      %v816 = vld [vmem:[%s3 + $0xe0] sm:$0xff]
      %v817 = vld [vmem:[%s3 + $0xe8] sm:$0xff]
      %v818 = vld [vmem:[%s3 + $0xf0] sm:$0xff]
      %v819 = vld [vmem:[%s3 + $0xf8] sm:$0xff]
      %v820 = vld [vmem:[%s3 + $0x100] sm:$0xff]
      %v821 = vld [vmem:[%s3 + $0x108] sm:$0xff]
      %v822 = vld [vmem:[%s3 + $0x110] sm:$0xff]
      %v823 = vld [vmem:[%s3 + $0x118] sm:$0xff]
      %v824 = vld [vmem:[%s3 + $0x120] sm:$0xff]
      %v825 = vld [vmem:[%s3 + $0x128] sm:$0xff]
      %v826 = vld [vmem:[%s3 + $0x130] sm:$0xff]
      %v827 = vld [vmem:[%s3 + $0x138] sm:$0xff]
      %v828 = vld [vmem:[%s3 + $0x140] sm:$0xff]
      %v829 = vld [vmem:[%s3 + $0x148] sm:$0xff]
      %v830 = vld [vmem:[%s3 + $0x150] sm:$0xff]
      %v831 = vld [vmem:[%s3 + $0x158] sm:$0xff]
      %v832 = vld [vmem:[%s3 + $0x160] sm:$0xff]
      %v833 = vld [vmem:[%s3 + $0x168] sm:$0xff]
      %v834 = vld [vmem:[%s3 + $0x170] sm:$0xff]
      %v835 = vld [vmem:[%s3 + $0x178] sm:$0xff]
      %v838 = vrot.slane %v522, 1
      %v839 = vrot.slane %v458, 1
      %v840 = vsel %vm570, %v838, %v839
      %v841 = vrot.slane %v538, 1
      %v842 = vsel %vm570, %v839, %v841
      %v845 = vrot.slane %v522, 2
      %v846 = vrot.slane %v458, 2
      %v847 = vsel %vm679, %v845, %v846
      %v848 = vrot.slane %v538, 2
      %v849 = vsel %vm679, %v846, %v848
      %s852 = scalar_lea.vmem %s3, 384
      %v853 = vld [vmem:[%s852] sm:$0xff]
      %v854 = vld [vmem:[%s852 + $0x8] sm:$0xff]
      %v855 = vld [vmem:[%s852 + $0x10] sm:$0xff]
      %v856 = vld [vmem:[%s852 + $0x18] sm:$0xff]
      %v857 = vld [vmem:[%s852 + $0x20] sm:$0xff]
      %v858 = vld [vmem:[%s852 + $0x28] sm:$0xff]
      %v859 = vld [vmem:[%s852 + $0x30] sm:$0xff]
      %v860 = vld [vmem:[%s852 + $0x38] sm:$0xff]
      %v861 = vld [vmem:[%s852 + $0x40] sm:$0xff]
      %v862 = vld [vmem:[%s852 + $0x48] sm:$0xff]
      %v863 = vld [vmem:[%s852 + $0x50] sm:$0xff]
      %v864 = vld [vmem:[%s852 + $0x58] sm:$0xff]
      %v865 = vld [vmem:[%s852 + $0x60] sm:$0xff]
      %v866 = vld [vmem:[%s852 + $0x68] sm:$0xff]
      %v867 = vld [vmem:[%s852 + $0x70] sm:$0xff]
      %v868 = vld [vmem:[%s852 + $0x78] sm:$0xff]
      %v869 = vld [vmem:[%s852 + $0x80] sm:$0xff]
      %v870 = vld [vmem:[%s852 + $0x88] sm:$0xff]
      %v871 = vld [vmem:[%s852 + $0x90] sm:$0xff]
      %v872 = vld [vmem:[%s852 + $0x98] sm:$0xff]
      %v873 = vld [vmem:[%s852 + $0xa0] sm:$0xff]
      %v874 = vld [vmem:[%s852 + $0xa8] sm:$0xff]
      %v875 = vld [vmem:[%s852 + $0xb0] sm:$0xff]
      %v876 = vld [vmem:[%s852 + $0xb8] sm:$0xff]
      %v877 = vld [vmem:[%s852 + $0xc0] sm:$0xff]
      %v878 = vld [vmem:[%s852 + $0xc8] sm:$0xff]
      %v879 = vld [vmem:[%s852 + $0xd0] sm:$0xff]
      %v880 = vld [vmem:[%s852 + $0xd8] sm:$0xff]
      %v881 = vld [vmem:[%s852 + $0xe0] sm:$0xff]
      %v882 = vld [vmem:[%s852 + $0xe8] sm:$0xff]
      %v883 = vld [vmem:[%s852 + $0xf0] sm:$0xff]
      %v884 = vld [vmem:[%s852 + $0xf8] sm:$0xff]
      %v885 = vld [vmem:[%s852 + $0x100] sm:$0xff]
      %v886 = vld [vmem:[%s852 + $0x108] sm:$0xff]
      %v887 = vld [vmem:[%s852 + $0x110] sm:$0xff]
      %v888 = vld [vmem:[%s852 + $0x118] sm:$0xff]
      %v889 = vld [vmem:[%s852 + $0x120] sm:$0xff]
      %v890 = vld [vmem:[%s852 + $0x128] sm:$0xff]
      %v891 = vld [vmem:[%s852 + $0x130] sm:$0xff]
      %v892 = vld [vmem:[%s852 + $0x138] sm:$0xff]
      %v893 = vld [vmem:[%s852 + $0x140] sm:$0xff]
      %v894 = vld [vmem:[%s852 + $0x148] sm:$0xff]
      %v895 = vld [vmem:[%s852 + $0x150] sm:$0xff]
      %v896 = vld [vmem:[%s852 + $0x158] sm:$0xff]
      %v897 = vld [vmem:[%s852 + $0x160] sm:$0xff]
      %v898 = vld [vmem:[%s852 + $0x168] sm:$0xff]
      %v899 = vld [vmem:[%s852 + $0x170] sm:$0xff]
      %v900 = vld [vmem:[%s852 + $0x178] sm:$0xff]
      %901 = vmatprep.subr.mxu0 0.0
      %902 = vmatpush1.msra.mxu0 %v868
      %903 = vmatprep.subr.mxu0 0.0
      %904 = vmatpush1.msra.mxu0 %v867
      %905 = vmatprep.subr.mxu0 0.0
      %906 = vmatpush1.msra.mxu0 %v866
      %907 = vmatprep.subr.mxu0 0.0
      %908 = vmatpush1.msra.mxu0 %v865
      %909 = vmatprep.subr.mxu0 0.0
      %910 = vmatpush1.msra.mxu0 %v864
      %911 = vmatprep.subr.mxu0 0.0
      %912 = vmatpush1.msra.mxu0 %v863
      %913 = vmatprep.subr.mxu0 0.0
      %914 = vmatpush1.msra.mxu0 %v862
      %915 = vmatprep.subr.mxu0 0.0
      %916 = vmatpush1.msra.mxu0 %v861
      %917 = vmatprep.subr.mxu0 0.0
      %918 = vmatpush1.msra.mxu0 %v860
      %919 = vmatprep.subr.mxu0 0.0
      %920 = vmatpush1.msra.mxu0 %v859
      %921 = vmatprep.subr.mxu0 0.0
      %922 = vmatpush1.msra.mxu0 %v858
      %923 = vmatprep.subr.mxu0 0.0
      %924 = vmatpush1.msra.mxu0 %v857
      %925 = vmatprep.subr.mxu0 0.0
      %926 = vmatpush1.msra.mxu0 %v856
      %927 = vmatprep.subr.mxu0 0.0
      %928 = vmatpush1.msra.mxu0 %v855
      %929 = vmatprep.subr.mxu0 0.0
      %930 = vmatpush1.msra.mxu0 %v854
      %931 = vmatprep.subr.mxu0 0.0
      %932 = vmatpush1.msra.mxu0 %v853
      %933 = vmatprep.subr.mxu0 0.0
      %934 = vmatpush2.msra.mxu0 %v884
      %935 = vmatprep.subr.mxu0 0.0
      %936 = vmatpush2.msra.mxu0 %v883
      %937 = vmatprep.subr.mxu0 0.0
      %938 = vmatpush2.msra.mxu0 %v882
      %939 = vmatprep.subr.mxu0 0.0
      %940 = vmatpush2.msra.mxu0 %v881
      %941 = vmatprep.subr.mxu0 0.0
      %942 = vmatpush2.msra.mxu0 %v880
      %943 = vmatprep.subr.mxu0 0.0
      %944 = vmatpush2.msra.mxu0 %v879
      %945 = vmatprep.subr.mxu0 0.0
      %946 = vmatpush2.msra.mxu0 %v878
      %947 = vmatprep.subr.mxu0 0.0
      %948 = vmatpush2.msra.mxu0 %v877
      %949 = vmatprep.subr.mxu0 0.0
      %950 = vmatpush2.msra.mxu0 %v876
      %951 = vmatprep.subr.mxu0 0.0
      %952 = vmatpush2.msra.mxu0 %v875
      %953 = vmatprep.subr.mxu0 0.0
      %954 = vmatpush2.msra.mxu0 %v874
      %955 = vmatprep.subr.mxu0 0.0
      %956 = vmatpush2.msra.mxu0 %v873
      %957 = vmatprep.subr.mxu0 0.0
      %958 = vmatpush2.msra.mxu0 %v872
      %959 = vmatprep.subr.mxu0 0.0
      %960 = vmatpush2.msra.mxu0 %v871
      %961 = vmatprep.subr.mxu0 0.0
      %962 = vmatpush2.msra.mxu0 %v870
      %963 = vmatprep.subr.mxu0 0.0
      %964 = vmatpush2.msra.mxu0 %v869
      %965 = vmatprep.mubr.f32.mxu0 %v575
      %966 = vmatmul.mubr.f32.gmra.mxu0 %v507
      %v967 = vpop.f32.mrf.mxu0
      %v968 = vadd.f32 0.0, %v967
      %v969 = vpop.f32.mrf.mxu0
      %970 = vmatprep.mubr.f32.mxu0 %v577
      %971 = vmatmul.mubr.f32.gmra.mxu0 %v413
      %v972 = vpop.f32.mrf.mxu0
      %v973 = vadd.f32 0.0, %v972
      %v974 = vpop.f32.mrf.mxu0
      %975 = vmatprep.mubr.f32.mxu0 %v580
      %976 = vmatmul.mubr.f32.gmra.mxu0 %v508
      %v977 = vpop.f32.mrf.mxu0
      %v978 = vadd.f32 0.0, %v977
      %v979 = vpop.f32.mrf.mxu0
      %980 = vmatprep.mubr.f32.mxu0 %v582
      %981 = vmatmul.mubr.f32.gmra.mxu0 %v416
      %v982 = vpop.f32.mrf.mxu0
      %v983 = vadd.f32 0.0, %v982
      %v984 = vpop.f32.mrf.mxu0
      %985 = vmatprep.mubr.f32.mxu0 %v585
      %986 = vmatmul.mubr.f32.gmra.mxu0 %v509
      %v987 = vpop.f32.mrf.mxu0
      %v988 = vadd.f32 0.0, %v987
      %v989 = vpop.f32.mrf.mxu0
      %990 = vmatprep.mubr.f32.mxu0 %v587
      %991 = vmatmul.mubr.f32.gmra.mxu0 %v419
      %v992 = vpop.f32.mrf.mxu0
      %v993 = vadd.f32 0.0, %v992
      %v994 = vpop.f32.mrf.mxu0
      %995 = vmatprep.mubr.f32.mxu0 %v590
      %996 = vmatmul.mubr.f32.gmra.mxu0 %v510
      %v997 = vpop.f32.mrf.mxu0
      %v998 = vadd.f32 0.0, %v997
      %v999 = vpop.f32.mrf.mxu0
      %1000 = vmatprep.mubr.f32.mxu0 %v592
      %1001 = vmatmul.mubr.f32.gmra.mxu0 %v422
      %v1002 = vpop.f32.mrf.mxu0
      %v1003 = vadd.f32 0.0, %v1002
      %v1004 = vpop.f32.mrf.mxu0
      %1005 = vmatprep.mubr.f32.mxu0 %v595
      %1006 = vmatmul.mubr.f32.gmra.mxu0 %v511
      %v1007 = vpop.f32.mrf.mxu0
      %v1008 = vadd.f32 0.0, %v1007
      %v1009 = vpop.f32.mrf.mxu0
      %1010 = vmatprep.mubr.f32.mxu0 %v597
      %1011 = vmatmul.mubr.f32.gmra.mxu0 %v425
      %v1012 = vpop.f32.mrf.mxu0
      %v1013 = vadd.f32 0.0, %v1012
      %v1014 = vpop.f32.mrf.mxu0
      %1015 = vmatprep.mubr.f32.mxu0 %v600
      %1016 = vmatmul.mubr.f32.gmra.mxu0 %v512
      %v1017 = vpop.f32.mrf.mxu0
      %v1018 = vadd.f32 0.0, %v1017
      %v1019 = vpop.f32.mrf.mxu0
      %1020 = vmatprep.mubr.f32.mxu0 %v602
      %1021 = vmatmul.mubr.f32.gmra.mxu0 %v428
      %v1022 = vpop.f32.mrf.mxu0
      %v1023 = vadd.f32 0.0, %v1022
      %v1024 = vpop.f32.mrf.mxu0
      %1025 = vmatprep.mubr.f32.mxu0 %v605
      %1026 = vmatmul.mubr.f32.gmra.mxu0 %v513
      %v1027 = vpop.f32.mrf.mxu0
      %v1028 = vadd.f32 0.0, %v1027
      %v1029 = vpop.f32.mrf.mxu0
      %1030 = vmatprep.mubr.f32.mxu0 %v607
      %1031 = vmatmul.mubr.f32.gmra.mxu0 %v431
      %v1032 = vpop.f32.mrf.mxu0
      %v1033 = vadd.f32 0.0, %v1032
      %v1034 = vpop.f32.mrf.mxu0
      %1035 = vmatprep.mubr.f32.mxu0 %v610
      %1036 = vmatmul.mubr.f32.gmra.mxu0 %v514
      %v1037 = vpop.f32.mrf.mxu0
      %v1038 = vadd.f32 0.0, %v1037
      %v1039 = vpop.f32.mrf.mxu0
      %1040 = vmatprep.mubr.f32.mxu0 %v612
      %1041 = vmatmul.mubr.f32.gmra.mxu0 %v434
      %v1042 = vpop.f32.mrf.mxu0
      %v1043 = vadd.f32 0.0, %v1042
      %v1044 = vpop.f32.mrf.mxu0
      %1045 = vmatprep.mubr.f32.mxu0 %v615
      %1046 = vmatmul.mubr.f32.gmra.mxu0 %v515
      %v1047 = vpop.f32.mrf.mxu0
      %v1048 = vadd.f32 0.0, %v1047
      %v1049 = vpop.f32.mrf.mxu0
      %1050 = vmatprep.mubr.f32.mxu0 %v617
      %1051 = vmatmul.mubr.f32.gmra.mxu0 %v437
      %v1052 = vpop.f32.mrf.mxu0
      %v1053 = vadd.f32 0.0, %v1052
      %v1054 = vpop.f32.mrf.mxu0
      %1055 = vmatprep.mubr.f32.mxu0 %v620
      %1056 = vmatmul.mubr.f32.gmra.mxu0 %v516
      %v1057 = vpop.f32.mrf.mxu0
      %v1058 = vadd.f32 0.0, %v1057
      %v1059 = vpop.f32.mrf.mxu0
      %1060 = vmatprep.mubr.f32.mxu0 %v622
      %1061 = vmatmul.mubr.f32.gmra.mxu0 %v440
      %v1062 = vpop.f32.mrf.mxu0
      %v1063 = vadd.f32 0.0, %v1062
      %v1064 = vpop.f32.mrf.mxu0
      %1065 = vmatprep.mubr.f32.mxu0 %v625
      %1066 = vmatmul.mubr.f32.gmra.mxu0 %v517
      %v1067 = vpop.f32.mrf.mxu0
      %v1068 = vadd.f32 0.0, %v1067
      %v1069 = vpop.f32.mrf.mxu0
      %1070 = vmatprep.mubr.f32.mxu0 %v627
      %1071 = vmatmul.mubr.f32.gmra.mxu0 %v443
      %v1072 = vpop.f32.mrf.mxu0
      %v1073 = vadd.f32 0.0, %v1072
      %v1074 = vpop.f32.mrf.mxu0
      %1075 = vmatprep.mubr.f32.mxu0 %v630
      %1076 = vmatmul.mubr.f32.gmra.mxu0 %v518
      %v1077 = vpop.f32.mrf.mxu0
      %v1078 = vadd.f32 0.0, %v1077
      %v1079 = vpop.f32.mrf.mxu0
      %1080 = vmatprep.mubr.f32.mxu0 %v632
      %1081 = vmatmul.mubr.f32.gmra.mxu0 %v446
      %v1082 = vpop.f32.mrf.mxu0
      %v1083 = vadd.f32 0.0, %v1082
      %v1084 = vpop.f32.mrf.mxu0
      %1085 = vmatprep.mubr.f32.mxu0 %v635
      %1086 = vmatmul.mubr.f32.gmra.mxu0 %v519
      %v1087 = vpop.f32.mrf.mxu0
      %v1088 = vadd.f32 0.0, %v1087
      %v1089 = vpop.f32.mrf.mxu0
      %1090 = vmatprep.mubr.f32.mxu0 %v637
      %1091 = vmatmul.mubr.f32.gmra.mxu0 %v449
      %v1092 = vpop.f32.mrf.mxu0
      %v1093 = vadd.f32 0.0, %v1092
      %v1094 = vpop.f32.mrf.mxu0
      %1095 = vmatprep.mubr.f32.mxu0 %v640
      %1096 = vmatmul.mubr.f32.gmra.mxu0 %v520
      %v1097 = vpop.f32.mrf.mxu0
      %v1098 = vadd.f32 0.0, %v1097
      %v1099 = vpop.f32.mrf.mxu0
      %1100 = vmatprep.mubr.f32.mxu0 %v642
      %1101 = vmatmul.mubr.f32.gmra.mxu0 %v452
      %v1102 = vpop.f32.mrf.mxu0
      %v1103 = vadd.f32 0.0, %v1102
      %v1104 = vpop.f32.mrf.mxu0
      %1105 = vmatprep.mubr.f32.mxu0 %v645
      %1106 = vmatmul.mubr.f32.gmra.mxu0 %v521
      %v1107 = vpop.f32.mrf.mxu0
      %v1108 = vadd.f32 0.0, %v1107
      %v1109 = vpop.f32.mrf.mxu0
      %1110 = vmatprep.mubr.f32.mxu0 %v647
      %1111 = vmatmul.mubr.f32.gmra.mxu0 %v455
      %v1112 = vpop.f32.mrf.mxu0
      %v1113 = vadd.f32 0.0, %v1112
      %v1114 = vpop.f32.mrf.mxu0
      %1115 = vmatprep.mubr.f32.mxu0 %v840
      %1116 = vmatmul.mubr.f32.gmra.mxu0 %v522
      %v1117 = vpop.f32.mrf.mxu0
      %v1118 = vadd.f32 0.0, %v1117
      %v1119 = vpop.f32.mrf.mxu0
      %1120 = vmatprep.mubr.f32.mxu0 %v842
      %1121 = vmatmul.mubr.f32.gmra.mxu0 %v458
      %v1122 = vpop.f32.mrf.mxu0
      %v1123 = vadd.f32 0.0, %v1122
      %v1124 = vpop.f32.mrf.mxu0
      %1125 = vdwg.mxu0
      %1126 = vmatprep.subr.mxu0 0.0
      %1127 = vmatpush1.msra.mxu0 %v900
      %1128 = vmatprep.subr.mxu0 0.0
      %1129 = vmatpush1.msra.mxu0 %v899
      %1130 = vmatprep.subr.mxu0 0.0
      %1131 = vmatpush1.msra.mxu0 %v898
      %1132 = vmatprep.subr.mxu0 0.0
      %1133 = vmatpush1.msra.mxu0 %v897
      %1134 = vmatprep.subr.mxu0 0.0
      %1135 = vmatpush1.msra.mxu0 %v896
      %1136 = vmatprep.subr.mxu0 0.0
      %1137 = vmatpush1.msra.mxu0 %v895
      %1138 = vmatprep.subr.mxu0 0.0
      %1139 = vmatpush1.msra.mxu0 %v894
      %1140 = vmatprep.subr.mxu0 0.0
      %1141 = vmatpush1.msra.mxu0 %v893
      %1142 = vmatprep.subr.mxu0 0.0
      %1143 = vmatpush1.msra.mxu0 %v892
      %1144 = vmatprep.subr.mxu0 0.0
      %1145 = vmatpush1.msra.mxu0 %v891
      %1146 = vmatprep.subr.mxu0 0.0
      %1147 = vmatpush1.msra.mxu0 %v890
      %1148 = vmatprep.subr.mxu0 0.0
      %1149 = vmatpush1.msra.mxu0 %v889
      %1150 = vmatprep.subr.mxu0 0.0
      %1151 = vmatpush1.msra.mxu0 %v888
      %1152 = vmatprep.subr.mxu0 0.0
      %1153 = vmatpush1.msra.mxu0 %v887
      %1154 = vmatprep.subr.mxu0 0.0
      %1155 = vmatpush1.msra.mxu0 %v886
      %1156 = vmatprep.subr.mxu0 0.0
      %1157 = vmatpush1.msra.mxu0 %v885
      %1158 = vmatprep.subr.mxu0 0.0
      %1159 = vmatpush2.msra.mxu0 0.0
      %1160 = vmatprep.subr.mxu0 0.0
      %1161 = vmatpush2.msra.mxu0 0.0
      %1162 = vmatprep.subr.mxu0 0.0
      %1163 = vmatpush2.msra.mxu0 0.0
      %1164 = vmatprep.subr.mxu0 0.0
      %1165 = vmatpush2.msra.mxu0 0.0
      %1166 = vmatprep.subr.mxu0 0.0
      %1167 = vmatpush2.msra.mxu0 0.0
      %1168 = vmatprep.subr.mxu0 0.0
      %1169 = vmatpush2.msra.mxu0 0.0
      %1170 = vmatprep.subr.mxu0 0.0
      %1171 = vmatpush2.msra.mxu0 0.0
      %1172 = vmatprep.subr.mxu0 0.0
      %1173 = vmatpush2.msra.mxu0 0.0
      %1174 = vmatprep.subr.mxu0 0.0
      %1175 = vmatpush2.msra.mxu0 0.0
      %1176 = vmatprep.subr.mxu0 0.0
      %1177 = vmatpush2.msra.mxu0 0.0
      %1178 = vmatprep.subr.mxu0 0.0
      %1179 = vmatpush2.msra.mxu0 0.0
      %1180 = vmatprep.subr.mxu0 0.0
      %1181 = vmatpush2.msra.mxu0 0.0
      %1182 = vmatprep.subr.mxu0 0.0
      %1183 = vmatpush2.msra.mxu0 0.0
      %1184 = vmatprep.subr.mxu0 0.0
      %1185 = vmatpush2.msra.mxu0 0.0
      %1186 = vmatprep.subr.mxu0 0.0
      %1187 = vmatpush2.msra.mxu0 0.0
      %1188 = vmatprep.subr.mxu0 0.0
      %1189 = vmatpush2.msra.mxu0 0.0
      %1190 = vmatprep.mubr.f32.mxu0 0.0
      %1191 = vmatmul.mubr.f32.gmra.mxu0 %v684
      %v1192 = vpop.f32.mrf.mxu0
      %v1193 = vadd.f32 %v968, %v1192
      %v1194 = vpop.f32.mrf.mxu0
      %1195 = vmatprep.mubr.f32.mxu0 0.0
      %1196 = vmatmul.mubr.f32.gmra.mxu0 %v686
      %v1197 = vpop.f32.mrf.mxu0
      %v1198 = vadd.f32 %v973, %v1197
      %v1199 = vpop.f32.mrf.mxu0
      %1200 = vmatprep.mubr.f32.mxu0 0.0
      %1201 = vmatmul.mubr.f32.gmra.mxu0 %v689
      %v1202 = vpop.f32.mrf.mxu0
      %v1203 = vadd.f32 %v978, %v1202
      %v1204 = vpop.f32.mrf.mxu0
      %1205 = vmatprep.mubr.f32.mxu0 0.0
      %1206 = vmatmul.mubr.f32.gmra.mxu0 %v691
      %v1207 = vpop.f32.mrf.mxu0
      %v1208 = vadd.f32 %v983, %v1207
      %v1209 = vpop.f32.mrf.mxu0
      %1210 = vmatprep.mubr.f32.mxu0 0.0
      %1211 = vmatmul.mubr.f32.gmra.mxu0 %v694
      %v1212 = vpop.f32.mrf.mxu0
      %v1213 = vadd.f32 %v988, %v1212
      %v1214 = vpop.f32.mrf.mxu0
      %1215 = vmatprep.mubr.f32.mxu0 0.0
      %1216 = vmatmul.mubr.f32.gmra.mxu0 %v696
      %v1217 = vpop.f32.mrf.mxu0
      %v1218 = vadd.f32 %v993, %v1217
      %v1219 = vpop.f32.mrf.mxu0
      %1220 = vmatprep.mubr.f32.mxu0 0.0
      %1221 = vmatmul.mubr.f32.gmra.mxu0 %v699
      %v1222 = vpop.f32.mrf.mxu0
      %v1223 = vadd.f32 %v998, %v1222
      %v1224 = vpop.f32.mrf.mxu0
      %1225 = vmatprep.mubr.f32.mxu0 0.0
      %1226 = vmatmul.mubr.f32.gmra.mxu0 %v701
      %v1227 = vpop.f32.mrf.mxu0
      %v1228 = vadd.f32 %v1003, %v1227
      %v1229 = vpop.f32.mrf.mxu0
      %1230 = vmatprep.mubr.f32.mxu0 0.0
      %1231 = vmatmul.mubr.f32.gmra.mxu0 %v704
      %v1232 = vpop.f32.mrf.mxu0
      %v1233 = vadd.f32 %v1008, %v1232
      %v1234 = vpop.f32.mrf.mxu0
      %1235 = vmatprep.mubr.f32.mxu0 0.0
      %1236 = vmatmul.mubr.f32.gmra.mxu0 %v706
      %v1237 = vpop.f32.mrf.mxu0
      %v1238 = vadd.f32 %v1013, %v1237
      %v1239 = vpop.f32.mrf.mxu0
      %1240 = vmatprep.mubr.f32.mxu0 0.0
      %1241 = vmatmul.mubr.f32.gmra.mxu0 %v709
      %v1242 = vpop.f32.mrf.mxu0
      %v1243 = vadd.f32 %v1018, %v1242
      %v1244 = vpop.f32.mrf.mxu0
      %1245 = vmatprep.mubr.f32.mxu0 0.0
      %1246 = vmatmul.mubr.f32.gmra.mxu0 %v711
      %v1247 = vpop.f32.mrf.mxu0
      %v1248 = vadd.f32 %v1023, %v1247
      %v1249 = vpop.f32.mrf.mxu0
      %1250 = vmatprep.mubr.f32.mxu0 0.0
      %1251 = vmatmul.mubr.f32.gmra.mxu0 %v714
      %v1252 = vpop.f32.mrf.mxu0
      %v1253 = vadd.f32 %v1028, %v1252
      %v1254 = vpop.f32.mrf.mxu0
      %1255 = vmatprep.mubr.f32.mxu0 0.0
      %1256 = vmatmul.mubr.f32.gmra.mxu0 %v716
      %v1257 = vpop.f32.mrf.mxu0
      %v1258 = vadd.f32 %v1033, %v1257
      %v1259 = vpop.f32.mrf.mxu0
      %1260 = vmatprep.mubr.f32.mxu0 0.0
      %1261 = vmatmul.mubr.f32.gmra.mxu0 %v719
      %v1262 = vpop.f32.mrf.mxu0
      %v1263 = vadd.f32 %v1038, %v1262
      %v1264 = vpop.f32.mrf.mxu0
      %1265 = vmatprep.mubr.f32.mxu0 0.0
      %1266 = vmatmul.mubr.f32.gmra.mxu0 %v721
      %v1267 = vpop.f32.mrf.mxu0
      %v1268 = vadd.f32 %v1043, %v1267
      %v1269 = vpop.f32.mrf.mxu0
      %1270 = vmatprep.mubr.f32.mxu0 0.0
      %1271 = vmatmul.mubr.f32.gmra.mxu0 %v724
      %v1272 = vpop.f32.mrf.mxu0
      %v1273 = vadd.f32 %v1048, %v1272
      %v1274 = vpop.f32.mrf.mxu0
      %1275 = vmatprep.mubr.f32.mxu0 0.0
      %1276 = vmatmul.mubr.f32.gmra.mxu0 %v726
      %v1277 = vpop.f32.mrf.mxu0
      %v1278 = vadd.f32 %v1053, %v1277
      %v1279 = vpop.f32.mrf.mxu0
      %1280 = vmatprep.mubr.f32.mxu0 0.0
      %1281 = vmatmul.mubr.f32.gmra.mxu0 %v729
      %v1282 = vpop.f32.mrf.mxu0
      %v1283 = vadd.f32 %v1058, %v1282
      %v1284 = vpop.f32.mrf.mxu0
      %1285 = vmatprep.mubr.f32.mxu0 0.0
      %1286 = vmatmul.mubr.f32.gmra.mxu0 %v731
      %v1287 = vpop.f32.mrf.mxu0
      %v1288 = vadd.f32 %v1063, %v1287
      %v1289 = vpop.f32.mrf.mxu0
      %1290 = vmatprep.mubr.f32.mxu0 0.0
      %1291 = vmatmul.mubr.f32.gmra.mxu0 %v734
      %v1292 = vpop.f32.mrf.mxu0
      %v1293 = vadd.f32 %v1068, %v1292
      %v1294 = vpop.f32.mrf.mxu0
      %1295 = vmatprep.mubr.f32.mxu0 0.0
      %1296 = vmatmul.mubr.f32.gmra.mxu0 %v736
      %v1297 = vpop.f32.mrf.mxu0
      %v1298 = vadd.f32 %v1073, %v1297
      %v1299 = vpop.f32.mrf.mxu0
      %1300 = vmatprep.mubr.f32.mxu0 0.0
      %1301 = vmatmul.mubr.f32.gmra.mxu0 %v739
      %v1302 = vpop.f32.mrf.mxu0
      %v1303 = vadd.f32 %v1078, %v1302
      %v1304 = vpop.f32.mrf.mxu0
      %1305 = vmatprep.mubr.f32.mxu0 0.0
      %1306 = vmatmul.mubr.f32.gmra.mxu0 %v741
      %v1307 = vpop.f32.mrf.mxu0
      %v1308 = vadd.f32 %v1083, %v1307
      %v1309 = vpop.f32.mrf.mxu0
      %1310 = vmatprep.mubr.f32.mxu0 0.0
      %1311 = vmatmul.mubr.f32.gmra.mxu0 %v744
      %v1312 = vpop.f32.mrf.mxu0
      %v1313 = vadd.f32 %v1088, %v1312
      %v1314 = vpop.f32.mrf.mxu0
      %1315 = vmatprep.mubr.f32.mxu0 0.0
      %1316 = vmatmul.mubr.f32.gmra.mxu0 %v746
      %v1317 = vpop.f32.mrf.mxu0
      %v1318 = vadd.f32 %v1093, %v1317
      %v1319 = vpop.f32.mrf.mxu0
      %1320 = vmatprep.mubr.f32.mxu0 0.0
      %1321 = vmatmul.mubr.f32.gmra.mxu0 %v749
      %v1322 = vpop.f32.mrf.mxu0
      %v1323 = vadd.f32 %v1098, %v1322
      %v1324 = vpop.f32.mrf.mxu0
      %1325 = vmatprep.mubr.f32.mxu0 0.0
      %1326 = vmatmul.mubr.f32.gmra.mxu0 %v751
      %v1327 = vpop.f32.mrf.mxu0
      %v1328 = vadd.f32 %v1103, %v1327
      %v1329 = vpop.f32.mrf.mxu0
      %1330 = vmatprep.mubr.f32.mxu0 0.0
      %1331 = vmatmul.mubr.f32.gmra.mxu0 %v754
      %v1332 = vpop.f32.mrf.mxu0
      %v1333 = vadd.f32 %v1108, %v1332
      %v1334 = vpop.f32.mrf.mxu0
      %1335 = vmatprep.mubr.f32.mxu0 0.0
      %1336 = vmatmul.mubr.f32.gmra.mxu0 %v756
      %v1337 = vpop.f32.mrf.mxu0
      %v1338 = vadd.f32 %v1113, %v1337
      %v1339 = vpop.f32.mrf.mxu0
      %1340 = vmatprep.mubr.f32.mxu0 0.0
      %1341 = vmatmul.mubr.f32.gmra.mxu0 %v847
      %v1342 = vpop.f32.mrf.mxu0
      %v1343 = vadd.f32 %v1118, %v1342
      %v1344 = vpop.f32.mrf.mxu0
      %1345 = vmatprep.mubr.f32.mxu0 0.0
      %1346 = vmatmul.mubr.f32.gmra.mxu0 %v849
      %v1347 = vpop.f32.mrf.mxu0
      %v1348 = vadd.f32 %v1123, %v1347
      %v1349 = vpop.f32.mrf.mxu0
      %1350 = vdwg.mxu0
      %1351 = vmatprep.subr.mxu0 0.0
      %1352 = vmatpush1.msra.mxu0 %v803
      %1353 = vmatprep.subr.mxu0 0.0
      %1354 = vmatpush1.msra.mxu0 %v802
      %1355 = vmatprep.subr.mxu0 0.0
      %1356 = vmatpush1.msra.mxu0 %v801
      %1357 = vmatprep.subr.mxu0 0.0
      %1358 = vmatpush1.msra.mxu0 %v800
      %1359 = vmatprep.subr.mxu0 0.0
      %1360 = vmatpush1.msra.mxu0 %v799
      %1361 = vmatprep.subr.mxu0 0.0
      %1362 = vmatpush1.msra.mxu0 %v798
      %1363 = vmatprep.subr.mxu0 0.0
      %1364 = vmatpush1.msra.mxu0 %v797
      %1365 = vmatprep.subr.mxu0 0.0
      %1366 = vmatpush1.msra.mxu0 %v796
      %1367 = vmatprep.subr.mxu0 0.0
      %1368 = vmatpush1.msra.mxu0 %v795
      %1369 = vmatprep.subr.mxu0 0.0
      %1370 = vmatpush1.msra.mxu0 %v794
      %1371 = vmatprep.subr.mxu0 0.0
      %1372 = vmatpush1.msra.mxu0 %v793
      %1373 = vmatprep.subr.mxu0 0.0
      %1374 = vmatpush1.msra.mxu0 %v792
      %1375 = vmatprep.subr.mxu0 0.0
      %1376 = vmatpush1.msra.mxu0 %v791
      %1377 = vmatprep.subr.mxu0 0.0
      %1378 = vmatpush1.msra.mxu0 %v790
      %1379 = vmatprep.subr.mxu0 0.0
      %1380 = vmatpush1.msra.mxu0 %v789
      %1381 = vmatprep.subr.mxu0 0.0
      %1382 = vmatpush1.msra.mxu0 %v788
      %1383 = vmatprep.subr.mxu0 0.0
      %1384 = vmatpush2.msra.mxu0 %v819
      %1385 = vmatprep.subr.mxu0 0.0
      %1386 = vmatpush2.msra.mxu0 %v818
      %1387 = vmatprep.subr.mxu0 0.0
      %1388 = vmatpush2.msra.mxu0 %v817
      %1389 = vmatprep.subr.mxu0 0.0
      %1390 = vmatpush2.msra.mxu0 %v816
      %1391 = vmatprep.subr.mxu0 0.0
      %1392 = vmatpush2.msra.mxu0 %v815
      %1393 = vmatprep.subr.mxu0 0.0
      %1394 = vmatpush2.msra.mxu0 %v814
      %1395 = vmatprep.subr.mxu0 0.0
      %1396 = vmatpush2.msra.mxu0 %v813
      %1397 = vmatprep.subr.mxu0 0.0
      %1398 = vmatpush2.msra.mxu0 %v812
      %1399 = vmatprep.subr.mxu0 0.0
      %1400 = vmatpush2.msra.mxu0 %v811
      %1401 = vmatprep.subr.mxu0 0.0
      %1402 = vmatpush2.msra.mxu0 %v810
      %1403 = vmatprep.subr.mxu0 0.0
      %1404 = vmatpush2.msra.mxu0 %v809
      %1405 = vmatprep.subr.mxu0 0.0
      %1406 = vmatpush2.msra.mxu0 %v808
      %1407 = vmatprep.subr.mxu0 0.0
      %1408 = vmatpush2.msra.mxu0 %v807
      %1409 = vmatprep.subr.mxu0 0.0
      %1410 = vmatpush2.msra.mxu0 %v806
      %1411 = vmatprep.subr.mxu0 0.0
      %1412 = vmatpush2.msra.mxu0 %v805
      %1413 = vmatprep.subr.mxu0 0.0
      %1414 = vmatpush2.msra.mxu0 %v804
      %1415 = vmatprep.mubr.f32.mxu0 %v572
      %1416 = vmatmul.mubr.f32.gmra.mxu0 0.0
      %v1417 = vpop.f32.mrf.mxu0
      %v1418 = vadd.f32 %v1193, %v1417
      %v1419 = vpop.f32.mrf.mxu0
      %1420 = vmatprep.mubr.f32.mxu0 %v572
      %1421 = vmatmul.mubr.f32.gmra.mxu0 0.0
      %v1422 = vpop.f32.mrf.mxu0
      %v1423 = vadd.f32 %v1198, %v1422
      %v1424 = vpop.f32.mrf.mxu0
      %1425 = vmatprep.mubr.f32.mxu0 %v575
      %1426 = vmatmul.mubr.f32.gmra.mxu0 %v507
      %v1427 = vpop.f32.mrf.mxu0
      %v1428 = vadd.f32 %v1203, %v1427
      %v1429 = vpop.f32.mrf.mxu0
      %1430 = vmatprep.mubr.f32.mxu0 %v577
      %1431 = vmatmul.mubr.f32.gmra.mxu0 %v413
      %v1432 = vpop.f32.mrf.mxu0
      %v1433 = vadd.f32 %v1208, %v1432
      %v1434 = vpop.f32.mrf.mxu0
      %1435 = vmatprep.mubr.f32.mxu0 %v580
      %1436 = vmatmul.mubr.f32.gmra.mxu0 %v508
      %v1437 = vpop.f32.mrf.mxu0
      %v1438 = vadd.f32 %v1213, %v1437
      %v1439 = vpop.f32.mrf.mxu0
      %1440 = vmatprep.mubr.f32.mxu0 %v582
      %1441 = vmatmul.mubr.f32.gmra.mxu0 %v416
      %v1442 = vpop.f32.mrf.mxu0
      %v1443 = vadd.f32 %v1218, %v1442
      %v1444 = vpop.f32.mrf.mxu0
      %1445 = vmatprep.mubr.f32.mxu0 %v585
      %1446 = vmatmul.mubr.f32.gmra.mxu0 %v509
      %v1447 = vpop.f32.mrf.mxu0
      %v1448 = vadd.f32 %v1223, %v1447
      %v1449 = vpop.f32.mrf.mxu0
      %1450 = vmatprep.mubr.f32.mxu0 %v587
      %1451 = vmatmul.mubr.f32.gmra.mxu0 %v419
      %v1452 = vpop.f32.mrf.mxu0
      %v1453 = vadd.f32 %v1228, %v1452
      %v1454 = vpop.f32.mrf.mxu0
      %1455 = vmatprep.mubr.f32.mxu0 %v590
      %1456 = vmatmul.mubr.f32.gmra.mxu0 %v510
      %v1457 = vpop.f32.mrf.mxu0
      %v1458 = vadd.f32 %v1233, %v1457
      %v1459 = vpop.f32.mrf.mxu0
      %1460 = vmatprep.mubr.f32.mxu0 %v592
      %1461 = vmatmul.mubr.f32.gmra.mxu0 %v422
      %v1462 = vpop.f32.mrf.mxu0
      %v1463 = vadd.f32 %v1238, %v1462
      %v1464 = vpop.f32.mrf.mxu0
      %1465 = vmatprep.mubr.f32.mxu0 %v595
      %1466 = vmatmul.mubr.f32.gmra.mxu0 %v511
      %v1467 = vpop.f32.mrf.mxu0
      %v1468 = vadd.f32 %v1243, %v1467
      %v1469 = vpop.f32.mrf.mxu0
      %1470 = vmatprep.mubr.f32.mxu0 %v597
      %1471 = vmatmul.mubr.f32.gmra.mxu0 %v425
      %v1472 = vpop.f32.mrf.mxu0
      %v1473 = vadd.f32 %v1248, %v1472
      %v1474 = vpop.f32.mrf.mxu0
      %1475 = vmatprep.mubr.f32.mxu0 %v600
      %1476 = vmatmul.mubr.f32.gmra.mxu0 %v512
      %v1477 = vpop.f32.mrf.mxu0
      %v1478 = vadd.f32 %v1253, %v1477
      %v1479 = vpop.f32.mrf.mxu0
      %1480 = vmatprep.mubr.f32.mxu0 %v602
      %1481 = vmatmul.mubr.f32.gmra.mxu0 %v428
      %v1482 = vpop.f32.mrf.mxu0
      %v1483 = vadd.f32 %v1258, %v1482
      %v1484 = vpop.f32.mrf.mxu0
      %1485 = vmatprep.mubr.f32.mxu0 %v605
      %1486 = vmatmul.mubr.f32.gmra.mxu0 %v513
      %v1487 = vpop.f32.mrf.mxu0
      %v1488 = vadd.f32 %v1263, %v1487
      %v1489 = vpop.f32.mrf.mxu0
      %1490 = vmatprep.mubr.f32.mxu0 %v607
      %1491 = vmatmul.mubr.f32.gmra.mxu0 %v431
      %v1492 = vpop.f32.mrf.mxu0
      %v1493 = vadd.f32 %v1268, %v1492
      %v1494 = vpop.f32.mrf.mxu0
      %1495 = vmatprep.mubr.f32.mxu0 %v610
      %1496 = vmatmul.mubr.f32.gmra.mxu0 %v514
      %v1497 = vpop.f32.mrf.mxu0
      %v1498 = vadd.f32 %v1273, %v1497
      %v1499 = vpop.f32.mrf.mxu0
      %1500 = vmatprep.mubr.f32.mxu0 %v612
      %1501 = vmatmul.mubr.f32.gmra.mxu0 %v434
      %v1502 = vpop.f32.mrf.mxu0
      %v1503 = vadd.f32 %v1278, %v1502
      %v1504 = vpop.f32.mrf.mxu0
      %1505 = vmatprep.mubr.f32.mxu0 %v615
      %1506 = vmatmul.mubr.f32.gmra.mxu0 %v515
      %v1507 = vpop.f32.mrf.mxu0
      %v1508 = vadd.f32 %v1283, %v1507
      %v1509 = vpop.f32.mrf.mxu0
      %1510 = vmatprep.mubr.f32.mxu0 %v617
      %1511 = vmatmul.mubr.f32.gmra.mxu0 %v437
      %v1512 = vpop.f32.mrf.mxu0
      %v1513 = vadd.f32 %v1288, %v1512
      %v1514 = vpop.f32.mrf.mxu0
      %1515 = vmatprep.mubr.f32.mxu0 %v620
      %1516 = vmatmul.mubr.f32.gmra.mxu0 %v516
      %v1517 = vpop.f32.mrf.mxu0
      %v1518 = vadd.f32 %v1293, %v1517
      %v1519 = vpop.f32.mrf.mxu0
      %1520 = vmatprep.mubr.f32.mxu0 %v622
      %1521 = vmatmul.mubr.f32.gmra.mxu0 %v440
      %v1522 = vpop.f32.mrf.mxu0
      %v1523 = vadd.f32 %v1298, %v1522
      %v1524 = vpop.f32.mrf.mxu0
      %1525 = vmatprep.mubr.f32.mxu0 %v625
      %1526 = vmatmul.mubr.f32.gmra.mxu0 %v517
      %v1527 = vpop.f32.mrf.mxu0
      %v1528 = vadd.f32 %v1303, %v1527
      %v1529 = vpop.f32.mrf.mxu0
      %1530 = vmatprep.mubr.f32.mxu0 %v627
      %1531 = vmatmul.mubr.f32.gmra.mxu0 %v443
      %v1532 = vpop.f32.mrf.mxu0
      %v1533 = vadd.f32 %v1308, %v1532
      %v1534 = vpop.f32.mrf.mxu0
      %1535 = vmatprep.mubr.f32.mxu0 %v630
      %1536 = vmatmul.mubr.f32.gmra.mxu0 %v518
      %v1537 = vpop.f32.mrf.mxu0
      %v1538 = vadd.f32 %v1313, %v1537
      %v1539 = vpop.f32.mrf.mxu0
      %1540 = vmatprep.mubr.f32.mxu0 %v632
      %1541 = vmatmul.mubr.f32.gmra.mxu0 %v446
      %v1542 = vpop.f32.mrf.mxu0
      %v1543 = vadd.f32 %v1318, %v1542
      %v1544 = vpop.f32.mrf.mxu0
      %1545 = vmatprep.mubr.f32.mxu0 %v635
      %1546 = vmatmul.mubr.f32.gmra.mxu0 %v519
      %v1547 = vpop.f32.mrf.mxu0
      %v1548 = vadd.f32 %v1323, %v1547
      %v1549 = vpop.f32.mrf.mxu0
      %1550 = vmatprep.mubr.f32.mxu0 %v637
      %1551 = vmatmul.mubr.f32.gmra.mxu0 %v449
      %v1552 = vpop.f32.mrf.mxu0
      %v1553 = vadd.f32 %v1328, %v1552
      %v1554 = vpop.f32.mrf.mxu0
      %1555 = vmatprep.mubr.f32.mxu0 %v640
      %1556 = vmatmul.mubr.f32.gmra.mxu0 %v520
      %v1557 = vpop.f32.mrf.mxu0
      %v1558 = vadd.f32 %v1333, %v1557
      %v1559 = vpop.f32.mrf.mxu0
      %1560 = vmatprep.mubr.f32.mxu0 %v642
      %1561 = vmatmul.mubr.f32.gmra.mxu0 %v452
      %v1562 = vpop.f32.mrf.mxu0
      %v1563 = vadd.f32 %v1338, %v1562
      %v1564 = vpop.f32.mrf.mxu0
      %1565 = vmatprep.mubr.f32.mxu0 %v645
      %1566 = vmatmul.mubr.f32.gmra.mxu0 %v521
      %v1567 = vpop.f32.mrf.mxu0
      %v1568 = vadd.f32 %v1343, %v1567
      %v1569 = vpop.f32.mrf.mxu0
      %1570 = vmatprep.mubr.f32.mxu0 %v647
      %1571 = vmatmul.mubr.f32.gmra.mxu0 %v455
      %v1572 = vpop.f32.mrf.mxu0
      %v1573 = vadd.f32 %v1348, %v1572
      %v1574 = vpop.f32.mrf.mxu0
      %1575 = vdwg.mxu0
      %1576 = vmatprep.subr.mxu0 0.0
      %1577 = vmatpush1.msra.mxu0 %v835
      %1578 = vmatprep.subr.mxu0 0.0
      %1579 = vmatpush1.msra.mxu0 %v834
      %1580 = vmatprep.subr.mxu0 0.0
      %1581 = vmatpush1.msra.mxu0 %v833
      %1582 = vmatprep.subr.mxu0 0.0
      %1583 = vmatpush1.msra.mxu0 %v832
      %1584 = vmatprep.subr.mxu0 0.0
      %1585 = vmatpush1.msra.mxu0 %v831
      %1586 = vmatprep.subr.mxu0 0.0
      %1587 = vmatpush1.msra.mxu0 %v830
      %1588 = vmatprep.subr.mxu0 0.0
      %1589 = vmatpush1.msra.mxu0 %v829
      %1590 = vmatprep.subr.mxu0 0.0
      %1591 = vmatpush1.msra.mxu0 %v828
      %1592 = vmatprep.subr.mxu0 0.0
      %1593 = vmatpush1.msra.mxu0 %v827
      %1594 = vmatprep.subr.mxu0 0.0
      %1595 = vmatpush1.msra.mxu0 %v826
      %1596 = vmatprep.subr.mxu0 0.0
      %1597 = vmatpush1.msra.mxu0 %v825
      %1598 = vmatprep.subr.mxu0 0.0
      %1599 = vmatpush1.msra.mxu0 %v824
      %1600 = vmatprep.subr.mxu0 0.0
      %1601 = vmatpush1.msra.mxu0 %v823
      %1602 = vmatprep.subr.mxu0 0.0
      %1603 = vmatpush1.msra.mxu0 %v822
      %1604 = vmatprep.subr.mxu0 0.0
      %1605 = vmatpush1.msra.mxu0 %v821
      %1606 = vmatprep.subr.mxu0 0.0
      %1607 = vmatpush1.msra.mxu0 %v820
      %1608 = vmatprep.subr.mxu0 0.0
      %1609 = vmatpush2.msra.mxu0 0.0
      %1610 = vmatprep.subr.mxu0 0.0
      %1611 = vmatpush2.msra.mxu0 0.0
      %1612 = vmatprep.subr.mxu0 0.0
      %1613 = vmatpush2.msra.mxu0 0.0
      %1614 = vmatprep.subr.mxu0 0.0
      %1615 = vmatpush2.msra.mxu0 0.0
      %1616 = vmatprep.subr.mxu0 0.0
      %1617 = vmatpush2.msra.mxu0 0.0
      %1618 = vmatprep.subr.mxu0 0.0
      %1619 = vmatpush2.msra.mxu0 0.0
      %1620 = vmatprep.subr.mxu0 0.0
      %1621 = vmatpush2.msra.mxu0 0.0
      %1622 = vmatprep.subr.mxu0 0.0
      %1623 = vmatpush2.msra.mxu0 0.0
      %1624 = vmatprep.subr.mxu0 0.0
      %1625 = vmatpush2.msra.mxu0 0.0
      %1626 = vmatprep.subr.mxu0 0.0
      %1627 = vmatpush2.msra.mxu0 0.0
      %1628 = vmatprep.subr.mxu0 0.0
      %1629 = vmatpush2.msra.mxu0 0.0
      %1630 = vmatprep.subr.mxu0 0.0
      %1631 = vmatpush2.msra.mxu0 0.0
      %1632 = vmatprep.subr.mxu0 0.0
      %1633 = vmatpush2.msra.mxu0 0.0
      %1634 = vmatprep.subr.mxu0 0.0
      %1635 = vmatpush2.msra.mxu0 0.0
      %1636 = vmatprep.subr.mxu0 0.0
      %1637 = vmatpush2.msra.mxu0 0.0
      %1638 = vmatprep.subr.mxu0 0.0
      %1639 = vmatpush2.msra.mxu0 0.0
      %1640 = vmatprep.mubr.f32.mxu0 0.0
      %1641 = vmatmul.mubr.f32.gmra.mxu0 %v681
      %v1642 = vpop.f32.mrf.mxu0
      %v1643 = vadd.f32 %v1418, %v1642
      %v1644 = vpop.f32.mrf.mxu0
      %1645 = vmatprep.mubr.f32.mxu0 0.0
      %1646 = vmatmul.mubr.f32.gmra.mxu0 %v681
      %v1647 = vpop.f32.mrf.mxu0
      %v1648 = vadd.f32 %v1423, %v1647
      %v1649 = vpop.f32.mrf.mxu0
      %1650 = vmatprep.mubr.f32.mxu0 0.0
      %1651 = vmatmul.mubr.f32.gmra.mxu0 %v684
      %v1652 = vpop.f32.mrf.mxu0
      %v1653 = vadd.f32 %v1428, %v1652
      %v1654 = vpop.f32.mrf.mxu0
      %1655 = vmatprep.mubr.f32.mxu0 0.0
      %1656 = vmatmul.mubr.f32.gmra.mxu0 %v686
      %v1657 = vpop.f32.mrf.mxu0
      %v1658 = vadd.f32 %v1433, %v1657
      %v1659 = vpop.f32.mrf.mxu0
      %1660 = vmatprep.mubr.f32.mxu0 0.0
      %1661 = vmatmul.mubr.f32.gmra.mxu0 %v689
      %v1662 = vpop.f32.mrf.mxu0
      %v1663 = vadd.f32 %v1438, %v1662
      %v1664 = vpop.f32.mrf.mxu0
      %1665 = vmatprep.mubr.f32.mxu0 0.0
      %1666 = vmatmul.mubr.f32.gmra.mxu0 %v691
      %v1667 = vpop.f32.mrf.mxu0
      %v1668 = vadd.f32 %v1443, %v1667
      %v1669 = vpop.f32.mrf.mxu0
      %1670 = vmatprep.mubr.f32.mxu0 0.0
      %1671 = vmatmul.mubr.f32.gmra.mxu0 %v694
      %v1672 = vpop.f32.mrf.mxu0
      %v1673 = vadd.f32 %v1448, %v1672
      %v1674 = vpop.f32.mrf.mxu0
      %1675 = vmatprep.mubr.f32.mxu0 0.0
      %1676 = vmatmul.mubr.f32.gmra.mxu0 %v696
      %v1677 = vpop.f32.mrf.mxu0
      %v1678 = vadd.f32 %v1453, %v1677
      %v1679 = vpop.f32.mrf.mxu0
      %1680 = vmatprep.mubr.f32.mxu0 0.0
      %1681 = vmatmul.mubr.f32.gmra.mxu0 %v699
      %v1682 = vpop.f32.mrf.mxu0
      %v1683 = vadd.f32 %v1458, %v1682
      %v1684 = vpop.f32.mrf.mxu0
      %1685 = vmatprep.mubr.f32.mxu0 0.0
      %1686 = vmatmul.mubr.f32.gmra.mxu0 %v701
      %v1687 = vpop.f32.mrf.mxu0
      %v1688 = vadd.f32 %v1463, %v1687
      %v1689 = vpop.f32.mrf.mxu0
      %1690 = vmatprep.mubr.f32.mxu0 0.0
      %1691 = vmatmul.mubr.f32.gmra.mxu0 %v704
      %v1692 = vpop.f32.mrf.mxu0
      %v1693 = vadd.f32 %v1468, %v1692
      %v1694 = vpop.f32.mrf.mxu0
      %1695 = vmatprep.mubr.f32.mxu0 0.0
      %1696 = vmatmul.mubr.f32.gmra.mxu0 %v706
      %v1697 = vpop.f32.mrf.mxu0
      %v1698 = vadd.f32 %v1473, %v1697
      %v1699 = vpop.f32.mrf.mxu0
      %1700 = vmatprep.mubr.f32.mxu0 0.0
      %1701 = vmatmul.mubr.f32.gmra.mxu0 %v709
      %v1702 = vpop.f32.mrf.mxu0
      %v1703 = vadd.f32 %v1478, %v1702
      %v1704 = vpop.f32.mrf.mxu0
      %1705 = vmatprep.mubr.f32.mxu0 0.0
      %1706 = vmatmul.mubr.f32.gmra.mxu0 %v711
      %v1707 = vpop.f32.mrf.mxu0
      %v1708 = vadd.f32 %v1483, %v1707
      %v1709 = vpop.f32.mrf.mxu0
      %1710 = vmatprep.mubr.f32.mxu0 0.0
      %1711 = vmatmul.mubr.f32.gmra.mxu0 %v714
      %v1712 = vpop.f32.mrf.mxu0
      %v1713 = vadd.f32 %v1488, %v1712
      %v1714 = vpop.f32.mrf.mxu0
      %1715 = vmatprep.mubr.f32.mxu0 0.0
      %1716 = vmatmul.mubr.f32.gmra.mxu0 %v716
      %v1717 = vpop.f32.mrf.mxu0
      %v1718 = vadd.f32 %v1493, %v1717
      %v1719 = vpop.f32.mrf.mxu0
      %1720 = vmatprep.mubr.f32.mxu0 0.0
      %1721 = vmatmul.mubr.f32.gmra.mxu0 %v719
      %v1722 = vpop.f32.mrf.mxu0
      %v1723 = vadd.f32 %v1498, %v1722
      %v1724 = vpop.f32.mrf.mxu0
      %1725 = vmatprep.mubr.f32.mxu0 0.0
      %1726 = vmatmul.mubr.f32.gmra.mxu0 %v721
      %v1727 = vpop.f32.mrf.mxu0
      %v1728 = vadd.f32 %v1503, %v1727
      %v1729 = vpop.f32.mrf.mxu0
      %1730 = vmatprep.mubr.f32.mxu0 0.0
      %1731 = vmatmul.mubr.f32.gmra.mxu0 %v724
      %v1732 = vpop.f32.mrf.mxu0
      %v1733 = vadd.f32 %v1508, %v1732
      %v1734 = vpop.f32.mrf.mxu0
      %1735 = vmatprep.mubr.f32.mxu0 0.0
      %1736 = vmatmul.mubr.f32.gmra.mxu0 %v726
      %v1737 = vpop.f32.mrf.mxu0
      %v1738 = vadd.f32 %v1513, %v1737
      %v1739 = vpop.f32.mrf.mxu0
      %1740 = vmatprep.mubr.f32.mxu0 0.0
      %1741 = vmatmul.mubr.f32.gmra.mxu0 %v729
      %v1742 = vpop.f32.mrf.mxu0
      %v1743 = vadd.f32 %v1518, %v1742
      %v1744 = vpop.f32.mrf.mxu0
      %1745 = vmatprep.mubr.f32.mxu0 0.0
      %1746 = vmatmul.mubr.f32.gmra.mxu0 %v731
      %v1747 = vpop.f32.mrf.mxu0
      %v1748 = vadd.f32 %v1523, %v1747
      %v1749 = vpop.f32.mrf.mxu0
      %1750 = vmatprep.mubr.f32.mxu0 0.0
      %1751 = vmatmul.mubr.f32.gmra.mxu0 %v734
      %v1752 = vpop.f32.mrf.mxu0
      %v1753 = vadd.f32 %v1528, %v1752
      %v1754 = vpop.f32.mrf.mxu0
      %1755 = vmatprep.mubr.f32.mxu0 0.0
      %1756 = vmatmul.mubr.f32.gmra.mxu0 %v736
      %v1757 = vpop.f32.mrf.mxu0
      %v1758 = vadd.f32 %v1533, %v1757
      %v1759 = vpop.f32.mrf.mxu0
      %1760 = vmatprep.mubr.f32.mxu0 0.0
      %1761 = vmatmul.mubr.f32.gmra.mxu0 %v739
      %v1762 = vpop.f32.mrf.mxu0
      %v1763 = vadd.f32 %v1538, %v1762
      %v1764 = vpop.f32.mrf.mxu0
      %1765 = vmatprep.mubr.f32.mxu0 0.0
      %1766 = vmatmul.mubr.f32.gmra.mxu0 %v741
      %v1767 = vpop.f32.mrf.mxu0
      %v1768 = vadd.f32 %v1543, %v1767
      %v1769 = vpop.f32.mrf.mxu0
      %1770 = vmatprep.mubr.f32.mxu0 0.0
      %1771 = vmatmul.mubr.f32.gmra.mxu0 %v744
      %v1772 = vpop.f32.mrf.mxu0
      %v1773 = vadd.f32 %v1548, %v1772
      %v1774 = vpop.f32.mrf.mxu0
      %1775 = vmatprep.mubr.f32.mxu0 0.0
      %1776 = vmatmul.mubr.f32.gmra.mxu0 %v746
      %v1777 = vpop.f32.mrf.mxu0
      %v1778 = vadd.f32 %v1553, %v1777
      %v1779 = vpop.f32.mrf.mxu0
      %1780 = vmatprep.mubr.f32.mxu0 0.0
      %1781 = vmatmul.mubr.f32.gmra.mxu0 %v749
      %v1782 = vpop.f32.mrf.mxu0
      %v1783 = vadd.f32 %v1558, %v1782
      %v1784 = vpop.f32.mrf.mxu0
      %1785 = vmatprep.mubr.f32.mxu0 0.0
      %1786 = vmatmul.mubr.f32.gmra.mxu0 %v751
      %v1787 = vpop.f32.mrf.mxu0
      %v1788 = vadd.f32 %v1563, %v1787
      %v1789 = vpop.f32.mrf.mxu0
      %1790 = vmatprep.mubr.f32.mxu0 0.0
      %1791 = vmatmul.mubr.f32.gmra.mxu0 %v754
      %v1792 = vpop.f32.mrf.mxu0
      %v1793 = vadd.f32 %v1568, %v1792
      %v1794 = vpop.f32.mrf.mxu0
      %1795 = vmatprep.mubr.f32.mxu0 0.0
      %1796 = vmatmul.mubr.f32.gmra.mxu0 %v756
      %v1797 = vpop.f32.mrf.mxu0
      %v1798 = vadd.f32 %v1573, %v1797
      %v1799 = vpop.f32.mrf.mxu0
      %1800 = vdwg.mxu0
      %s1801 = scalar_lea.vmem %s3, 768
      %v1802 = vld [vmem:[%s1801] sm:$0xff]
      %v1803 = vld [vmem:[%s1801 + $0x8] sm:$0xff]
      %v1804 = vld [vmem:[%s1801 + $0x10] sm:$0xff]
      %v1805 = vld [vmem:[%s1801 + $0x18] sm:$0xff]
      %v1806 = vld [vmem:[%s1801 + $0x20] sm:$0xff]
      %v1807 = vld [vmem:[%s1801 + $0x28] sm:$0xff]
      %v1808 = vld [vmem:[%s1801 + $0x30] sm:$0xff]
      %v1809 = vld [vmem:[%s1801 + $0x38] sm:$0xff]
      %v1810 = vld [vmem:[%s1801 + $0x40] sm:$0xff]
      %v1811 = vld [vmem:[%s1801 + $0x48] sm:$0xff]
      %v1812 = vld [vmem:[%s1801 + $0x50] sm:$0xff]
      %v1813 = vld [vmem:[%s1801 + $0x58] sm:$0xff]
      %v1814 = vld [vmem:[%s1801 + $0x60] sm:$0xff]
      %v1815 = vld [vmem:[%s1801 + $0x68] sm:$0xff]
      %v1816 = vld [vmem:[%s1801 + $0x70] sm:$0xff]
      %v1817 = vld [vmem:[%s1801 + $0x78] sm:$0xff]
      %v1818 = vld [vmem:[%s1801 + $0x80] sm:$0xff]
      %v1819 = vld [vmem:[%s1801 + $0x88] sm:$0xff]
      %v1820 = vld [vmem:[%s1801 + $0x90] sm:$0xff]
      %v1821 = vld [vmem:[%s1801 + $0x98] sm:$0xff]
      %v1822 = vld [vmem:[%s1801 + $0xa0] sm:$0xff]
      %v1823 = vld [vmem:[%s1801 + $0xa8] sm:$0xff]
      %v1824 = vld [vmem:[%s1801 + $0xb0] sm:$0xff]
      %v1825 = vld [vmem:[%s1801 + $0xb8] sm:$0xff]
      %v1826 = vld [vmem:[%s1801 + $0xc0] sm:$0xff]
      %v1827 = vld [vmem:[%s1801 + $0xc8] sm:$0xff]
      %v1828 = vld [vmem:[%s1801 + $0xd0] sm:$0xff]
      %v1829 = vld [vmem:[%s1801 + $0xd8] sm:$0xff]
      %v1830 = vld [vmem:[%s1801 + $0xe0] sm:$0xff]
      %v1831 = vld [vmem:[%s1801 + $0xe8] sm:$0xff]
      %v1832 = vld [vmem:[%s1801 + $0xf0] sm:$0xff]
      %v1833 = vld [vmem:[%s1801 + $0xf8] sm:$0xff]
      %v1834 = vld [vmem:[%s1801 + $0x100] sm:$0xff]
      %v1835 = vld [vmem:[%s1801 + $0x108] sm:$0xff]
      %v1836 = vld [vmem:[%s1801 + $0x110] sm:$0xff]
      %v1837 = vld [vmem:[%s1801 + $0x118] sm:$0xff]
      %v1838 = vld [vmem:[%s1801 + $0x120] sm:$0xff]
      %v1839 = vld [vmem:[%s1801 + $0x128] sm:$0xff]
      %v1840 = vld [vmem:[%s1801 + $0x130] sm:$0xff]
      %v1841 = vld [vmem:[%s1801 + $0x138] sm:$0xff]
      %v1842 = vld [vmem:[%s1801 + $0x140] sm:$0xff]
      %v1843 = vld [vmem:[%s1801 + $0x148] sm:$0xff]
      %v1844 = vld [vmem:[%s1801 + $0x150] sm:$0xff]
      %v1845 = vld [vmem:[%s1801 + $0x158] sm:$0xff]
      %v1846 = vld [vmem:[%s1801 + $0x160] sm:$0xff]
      %v1847 = vld [vmem:[%s1801 + $0x168] sm:$0xff]
      %v1848 = vld [vmem:[%s1801 + $0x170] sm:$0xff]
      %v1849 = vld [vmem:[%s1801 + $0x178] sm:$0xff]
      %1850 = vmatprep.subr.mxu0 0.0
      %1851 = vmatpush1.msra.mxu0 %v1817
      %1852 = vmatprep.subr.mxu0 0.0
      %1853 = vmatpush1.msra.mxu0 %v1816
      %1854 = vmatprep.subr.mxu0 0.0
      %1855 = vmatpush1.msra.mxu0 %v1815
      %1856 = vmatprep.subr.mxu0 0.0
      %1857 = vmatpush1.msra.mxu0 %v1814
      %1858 = vmatprep.subr.mxu0 0.0
      %1859 = vmatpush1.msra.mxu0 %v1813
      %1860 = vmatprep.subr.mxu0 0.0
      %1861 = vmatpush1.msra.mxu0 %v1812
      %1862 = vmatprep.subr.mxu0 0.0
      %1863 = vmatpush1.msra.mxu0 %v1811
      %1864 = vmatprep.subr.mxu0 0.0
      %1865 = vmatpush1.msra.mxu0 %v1810
      %1866 = vmatprep.subr.mxu0 0.0
      %1867 = vmatpush1.msra.mxu0 %v1809
      %1868 = vmatprep.subr.mxu0 0.0
      %1869 = vmatpush1.msra.mxu0 %v1808
      %1870 = vmatprep.subr.mxu0 0.0
      %1871 = vmatpush1.msra.mxu0 %v1807
      %1872 = vmatprep.subr.mxu0 0.0
      %1873 = vmatpush1.msra.mxu0 %v1806
      %1874 = vmatprep.subr.mxu0 0.0
      %1875 = vmatpush1.msra.mxu0 %v1805
      %1876 = vmatprep.subr.mxu0 0.0
      %1877 = vmatpush1.msra.mxu0 %v1804
      %1878 = vmatprep.subr.mxu0 0.0
      %1879 = vmatpush1.msra.mxu0 %v1803
      %1880 = vmatprep.subr.mxu0 0.0
      %1881 = vmatpush1.msra.mxu0 %v1802
      %1882 = vmatprep.subr.mxu0 0.0
      %1883 = vmatpush2.msra.mxu0 %v1833
      %1884 = vmatprep.subr.mxu0 0.0
      %1885 = vmatpush2.msra.mxu0 %v1832
      %1886 = vmatprep.subr.mxu0 0.0
      %1887 = vmatpush2.msra.mxu0 %v1831
      %1888 = vmatprep.subr.mxu0 0.0
      %1889 = vmatpush2.msra.mxu0 %v1830
      %1890 = vmatprep.subr.mxu0 0.0
      %1891 = vmatpush2.msra.mxu0 %v1829
      %1892 = vmatprep.subr.mxu0 0.0
      %1893 = vmatpush2.msra.mxu0 %v1828
      %1894 = vmatprep.subr.mxu0 0.0
      %1895 = vmatpush2.msra.mxu0 %v1827
      %1896 = vmatprep.subr.mxu0 0.0
      %1897 = vmatpush2.msra.mxu0 %v1826
      %1898 = vmatprep.subr.mxu0 0.0
      %1899 = vmatpush2.msra.mxu0 %v1825
      %1900 = vmatprep.subr.mxu0 0.0
      %1901 = vmatpush2.msra.mxu0 %v1824
      %1902 = vmatprep.subr.mxu0 0.0
      %1903 = vmatpush2.msra.mxu0 %v1823
      %1904 = vmatprep.subr.mxu0 0.0
      %1905 = vmatpush2.msra.mxu0 %v1822
      %1906 = vmatprep.subr.mxu0 0.0
      %1907 = vmatpush2.msra.mxu0 %v1821
      %1908 = vmatprep.subr.mxu0 0.0
      %1909 = vmatpush2.msra.mxu0 %v1820
      %1910 = vmatprep.subr.mxu0 0.0
      %1911 = vmatpush2.msra.mxu0 %v1819
      %1912 = vmatprep.subr.mxu0 0.0
      %1913 = vmatpush2.msra.mxu0 %v1818
      %1914 = vmatprep.mubr.f32.mxu0 %v580
      %1915 = vmatmul.mubr.f32.gmra.mxu0 %v508
      %v1916 = vpop.f32.mrf.mxu0
      %v1917 = vadd.f32 0.0, %v1916
      %v1918 = vpop.f32.mrf.mxu0
      %1919 = vmatprep.mubr.f32.mxu0 %v582
      %1920 = vmatmul.mubr.f32.gmra.mxu0 %v416
      %v1921 = vpop.f32.mrf.mxu0
      %v1922 = vadd.f32 0.0, %v1921
      %v1923 = vpop.f32.mrf.mxu0
      %1924 = vmatprep.mubr.f32.mxu0 %v585
      %1925 = vmatmul.mubr.f32.gmra.mxu0 %v509
      %v1926 = vpop.f32.mrf.mxu0
      %v1927 = vadd.f32 0.0, %v1926
      %v1928 = vpop.f32.mrf.mxu0
      %1929 = vmatprep.mubr.f32.mxu0 %v587
      %1930 = vmatmul.mubr.f32.gmra.mxu0 %v419
      %v1931 = vpop.f32.mrf.mxu0
      %v1932 = vadd.f32 0.0, %v1931
      %v1933 = vpop.f32.mrf.mxu0
      %1934 = vmatprep.mubr.f32.mxu0 %v590
      %1935 = vmatmul.mubr.f32.gmra.mxu0 %v510
      %v1936 = vpop.f32.mrf.mxu0
      %v1937 = vadd.f32 0.0, %v1936
      %v1938 = vpop.f32.mrf.mxu0
      %1939 = vmatprep.mubr.f32.mxu0 %v592
      %1940 = vmatmul.mubr.f32.gmra.mxu0 %v422
      %v1941 = vpop.f32.mrf.mxu0
      %v1942 = vadd.f32 0.0, %v1941
      %v1943 = vpop.f32.mrf.mxu0
      %1944 = vmatprep.mubr.f32.mxu0 %v595
      %1945 = vmatmul.mubr.f32.gmra.mxu0 %v511
      %v1946 = vpop.f32.mrf.mxu0
      %v1947 = vadd.f32 0.0, %v1946
      %v1948 = vpop.f32.mrf.mxu0
      %1949 = vmatprep.mubr.f32.mxu0 %v597
      %1950 = vmatmul.mubr.f32.gmra.mxu0 %v425
      %v1951 = vpop.f32.mrf.mxu0
      %v1952 = vadd.f32 0.0, %v1951
      %v1953 = vpop.f32.mrf.mxu0
      %1954 = vmatprep.mubr.f32.mxu0 %v600
      %1955 = vmatmul.mubr.f32.gmra.mxu0 %v512
      %v1956 = vpop.f32.mrf.mxu0
      %v1957 = vadd.f32 0.0, %v1956
      %v1958 = vpop.f32.mrf.mxu0
      %1959 = vmatprep.mubr.f32.mxu0 %v602
      %1960 = vmatmul.mubr.f32.gmra.mxu0 %v428
      %v1961 = vpop.f32.mrf.mxu0
      %v1962 = vadd.f32 0.0, %v1961
      %v1963 = vpop.f32.mrf.mxu0
      %1964 = vmatprep.mubr.f32.mxu0 %v605
      %1965 = vmatmul.mubr.f32.gmra.mxu0 %v513
      %v1966 = vpop.f32.mrf.mxu0
      %v1967 = vadd.f32 0.0, %v1966
      %v1968 = vpop.f32.mrf.mxu0
      %1969 = vmatprep.mubr.f32.mxu0 %v607
      %1970 = vmatmul.mubr.f32.gmra.mxu0 %v431
      %v1971 = vpop.f32.mrf.mxu0
      %v1972 = vadd.f32 0.0, %v1971
      %v1973 = vpop.f32.mrf.mxu0
      %1974 = vmatprep.mubr.f32.mxu0 %v610
      %1975 = vmatmul.mubr.f32.gmra.mxu0 %v514
      %v1976 = vpop.f32.mrf.mxu0
      %v1977 = vadd.f32 0.0, %v1976
      %v1978 = vpop.f32.mrf.mxu0
      %1979 = vmatprep.mubr.f32.mxu0 %v612
      %1980 = vmatmul.mubr.f32.gmra.mxu0 %v434
      %v1981 = vpop.f32.mrf.mxu0
      %v1982 = vadd.f32 0.0, %v1981
      %v1983 = vpop.f32.mrf.mxu0
      %1984 = vmatprep.mubr.f32.mxu0 %v615
      %1985 = vmatmul.mubr.f32.gmra.mxu0 %v515
      %v1986 = vpop.f32.mrf.mxu0
      %v1987 = vadd.f32 0.0, %v1986
      %v1988 = vpop.f32.mrf.mxu0
      %1989 = vmatprep.mubr.f32.mxu0 %v617
      %1990 = vmatmul.mubr.f32.gmra.mxu0 %v437
      %v1991 = vpop.f32.mrf.mxu0
      %v1992 = vadd.f32 0.0, %v1991
      %v1993 = vpop.f32.mrf.mxu0
      %1994 = vmatprep.mubr.f32.mxu0 %v620
      %1995 = vmatmul.mubr.f32.gmra.mxu0 %v516
      %v1996 = vpop.f32.mrf.mxu0
      %v1997 = vadd.f32 0.0, %v1996
      %v1998 = vpop.f32.mrf.mxu0
      %1999 = vmatprep.mubr.f32.mxu0 %v622
      %2000 = vmatmul.mubr.f32.gmra.mxu0 %v440
      %v2001 = vpop.f32.mrf.mxu0
      %v2002 = vadd.f32 0.0, %v2001
      %v2003 = vpop.f32.mrf.mxu0
      %2004 = vmatprep.mubr.f32.mxu0 %v625
      %2005 = vmatmul.mubr.f32.gmra.mxu0 %v517
      %v2006 = vpop.f32.mrf.mxu0
      %v2007 = vadd.f32 0.0, %v2006
      %v2008 = vpop.f32.mrf.mxu0
      %2009 = vmatprep.mubr.f32.mxu0 %v627
      %2010 = vmatmul.mubr.f32.gmra.mxu0 %v443
      %v2011 = vpop.f32.mrf.mxu0
      %v2012 = vadd.f32 0.0, %v2011
      %v2013 = vpop.f32.mrf.mxu0
      %2014 = vmatprep.mubr.f32.mxu0 %v630
      %2015 = vmatmul.mubr.f32.gmra.mxu0 %v518
      %v2016 = vpop.f32.mrf.mxu0
      %v2017 = vadd.f32 0.0, %v2016
      %v2018 = vpop.f32.mrf.mxu0
      %2019 = vmatprep.mubr.f32.mxu0 %v632
      %2020 = vmatmul.mubr.f32.gmra.mxu0 %v446
      %v2021 = vpop.f32.mrf.mxu0
      %v2022 = vadd.f32 0.0, %v2021
      %v2023 = vpop.f32.mrf.mxu0
      %2024 = vmatprep.mubr.f32.mxu0 %v635
      %2025 = vmatmul.mubr.f32.gmra.mxu0 %v519
      %v2026 = vpop.f32.mrf.mxu0
      %v2027 = vadd.f32 0.0, %v2026
      %v2028 = vpop.f32.mrf.mxu0
      %2029 = vmatprep.mubr.f32.mxu0 %v637
      %2030 = vmatmul.mubr.f32.gmra.mxu0 %v449
      %v2031 = vpop.f32.mrf.mxu0
      %v2032 = vadd.f32 0.0, %v2031
      %v2033 = vpop.f32.mrf.mxu0
      %2034 = vmatprep.mubr.f32.mxu0 %v640
      %2035 = vmatmul.mubr.f32.gmra.mxu0 %v520
      %v2036 = vpop.f32.mrf.mxu0
      %v2037 = vadd.f32 0.0, %v2036
      %v2038 = vpop.f32.mrf.mxu0
      %2039 = vmatprep.mubr.f32.mxu0 %v642
      %2040 = vmatmul.mubr.f32.gmra.mxu0 %v452
      %v2041 = vpop.f32.mrf.mxu0
      %v2042 = vadd.f32 0.0, %v2041
      %v2043 = vpop.f32.mrf.mxu0
      %2044 = vmatprep.mubr.f32.mxu0 %v645
      %2045 = vmatmul.mubr.f32.gmra.mxu0 %v521
      %v2046 = vpop.f32.mrf.mxu0
      %v2047 = vadd.f32 0.0, %v2046
      %v2048 = vpop.f32.mrf.mxu0
      %2049 = vmatprep.mubr.f32.mxu0 %v647
      %2050 = vmatmul.mubr.f32.gmra.mxu0 %v455
      %v2051 = vpop.f32.mrf.mxu0
      %v2052 = vadd.f32 0.0, %v2051
      %v2053 = vpop.f32.mrf.mxu0
      %2054 = vmatprep.mubr.f32.mxu0 %v840
      %2055 = vmatmul.mubr.f32.gmra.mxu0 %v522
      %v2056 = vpop.f32.mrf.mxu0
      %v2057 = vadd.f32 0.0, %v2056
      %v2058 = vpop.f32.mrf.mxu0
      %2059 = vmatprep.mubr.f32.mxu0 %v842
      %2060 = vmatmul.mubr.f32.gmra.mxu0 %v458
      %v2061 = vpop.f32.mrf.mxu0
      %v2062 = vadd.f32 0.0, %v2061
      %v2063 = vpop.f32.mrf.mxu0
      %2064 = vmatprep.mubr.f32.mxu0 %v572
      %2065 = vmatmul.mubr.f32.gmra.mxu0 0.0
      %v2066 = vpop.f32.mrf.mxu0
      %v2067 = vadd.f32 0.0, %v2066
      %v2068 = vpop.f32.mrf.mxu0
      %2069 = vmatprep.mubr.f32.mxu0 %v572
      %2070 = vmatmul.mubr.f32.gmra.mxu0 0.0
      %v2071 = vpop.f32.mrf.mxu0
      %v2072 = vadd.f32 0.0, %v2071
      %v2073 = vpop.f32.mrf.mxu0
      %2074 = vdwg.mxu0
      %2075 = vmatprep.subr.mxu0 0.0
      %2076 = vmatpush1.msra.mxu0 %v1849
      %2077 = vmatprep.subr.mxu0 0.0
      %2078 = vmatpush1.msra.mxu0 %v1848
      %2079 = vmatprep.subr.mxu0 0.0
      %2080 = vmatpush1.msra.mxu0 %v1847
      %2081 = vmatprep.subr.mxu0 0.0
      %2082 = vmatpush1.msra.mxu0 %v1846
      %2083 = vmatprep.subr.mxu0 0.0
      %2084 = vmatpush1.msra.mxu0 %v1845
      %2085 = vmatprep.subr.mxu0 0.0
      %2086 = vmatpush1.msra.mxu0 %v1844
      %2087 = vmatprep.subr.mxu0 0.0
      %2088 = vmatpush1.msra.mxu0 %v1843
      %2089 = vmatprep.subr.mxu0 0.0
      %2090 = vmatpush1.msra.mxu0 %v1842
      %2091 = vmatprep.subr.mxu0 0.0
      %2092 = vmatpush1.msra.mxu0 %v1841
      %2093 = vmatprep.subr.mxu0 0.0
      %2094 = vmatpush1.msra.mxu0 %v1840
      %2095 = vmatprep.subr.mxu0 0.0
      %2096 = vmatpush1.msra.mxu0 %v1839
      %2097 = vmatprep.subr.mxu0 0.0
      %2098 = vmatpush1.msra.mxu0 %v1838
      %2099 = vmatprep.subr.mxu0 0.0
      %2100 = vmatpush1.msra.mxu0 %v1837
      %2101 = vmatprep.subr.mxu0 0.0
      %2102 = vmatpush1.msra.mxu0 %v1836
      %2103 = vmatprep.subr.mxu0 0.0
      %2104 = vmatpush1.msra.mxu0 %v1835
      %2105 = vmatprep.subr.mxu0 0.0
      %2106 = vmatpush1.msra.mxu0 %v1834
      %2107 = vmatprep.subr.mxu0 0.0
      %2108 = vmatpush2.msra.mxu0 0.0
      %2109 = vmatprep.subr.mxu0 0.0
      %2110 = vmatpush2.msra.mxu0 0.0
      %2111 = vmatprep.subr.mxu0 0.0
      %2112 = vmatpush2.msra.mxu0 0.0
      %2113 = vmatprep.subr.mxu0 0.0
      %2114 = vmatpush2.msra.mxu0 0.0
      %2115 = vmatprep.subr.mxu0 0.0
      %2116 = vmatpush2.msra.mxu0 0.0
      %2117 = vmatprep.subr.mxu0 0.0
      %2118 = vmatpush2.msra.mxu0 0.0
      %2119 = vmatprep.subr.mxu0 0.0
      %2120 = vmatpush2.msra.mxu0 0.0
      %2121 = vmatprep.subr.mxu0 0.0
      %2122 = vmatpush2.msra.mxu0 0.0
      %2123 = vmatprep.subr.mxu0 0.0
      %2124 = vmatpush2.msra.mxu0 0.0
      %2125 = vmatprep.subr.mxu0 0.0
      %2126 = vmatpush2.msra.mxu0 0.0
      %2127 = vmatprep.subr.mxu0 0.0
      %2128 = vmatpush2.msra.mxu0 0.0
      %2129 = vmatprep.subr.mxu0 0.0
      %2130 = vmatpush2.msra.mxu0 0.0
      %2131 = vmatprep.subr.mxu0 0.0
      %2132 = vmatpush2.msra.mxu0 0.0
      %2133 = vmatprep.subr.mxu0 0.0
      %2134 = vmatpush2.msra.mxu0 0.0
      %2135 = vmatprep.subr.mxu0 0.0
      %2136 = vmatpush2.msra.mxu0 0.0
      %2137 = vmatprep.subr.mxu0 0.0
      %2138 = vmatpush2.msra.mxu0 0.0
      %2139 = vmatprep.mubr.f32.mxu0 0.0
      %2140 = vmatmul.mubr.f32.gmra.mxu0 %v689
      %v2141 = vpop.f32.mrf.mxu0
      %v2142 = vadd.f32 %v1917, %v2141
      %v2143 = vpop.f32.mrf.mxu0
      %2144 = vmatprep.mubr.f32.mxu0 0.0
      %2145 = vmatmul.mubr.f32.gmra.mxu0 %v691
      %v2146 = vpop.f32.mrf.mxu0
      %v2147 = vadd.f32 %v1922, %v2146
      %v2148 = vpop.f32.mrf.mxu0
      %2149 = vmatprep.mubr.f32.mxu0 0.0
      %2150 = vmatmul.mubr.f32.gmra.mxu0 %v694
      %v2151 = vpop.f32.mrf.mxu0
      %v2152 = vadd.f32 %v1927, %v2151
      %v2153 = vpop.f32.mrf.mxu0
      %2154 = vmatprep.mubr.f32.mxu0 0.0
      %2155 = vmatmul.mubr.f32.gmra.mxu0 %v696
      %v2156 = vpop.f32.mrf.mxu0
      %v2157 = vadd.f32 %v1932, %v2156
      %v2158 = vpop.f32.mrf.mxu0
      %2159 = vmatprep.mubr.f32.mxu0 0.0
      %2160 = vmatmul.mubr.f32.gmra.mxu0 %v699
      %v2161 = vpop.f32.mrf.mxu0
      %v2162 = vadd.f32 %v1937, %v2161
      %v2163 = vpop.f32.mrf.mxu0
      %2164 = vmatprep.mubr.f32.mxu0 0.0
      %2165 = vmatmul.mubr.f32.gmra.mxu0 %v701
      %v2166 = vpop.f32.mrf.mxu0
      %v2167 = vadd.f32 %v1942, %v2166
      %v2168 = vpop.f32.mrf.mxu0
      %2169 = vmatprep.mubr.f32.mxu0 0.0
      %2170 = vmatmul.mubr.f32.gmra.mxu0 %v704
      %v2171 = vpop.f32.mrf.mxu0
      %v2172 = vadd.f32 %v1947, %v2171
      %v2173 = vpop.f32.mrf.mxu0
      %2174 = vmatprep.mubr.f32.mxu0 0.0
      %2175 = vmatmul.mubr.f32.gmra.mxu0 %v706
      %v2176 = vpop.f32.mrf.mxu0
      %v2177 = vadd.f32 %v1952, %v2176
      %v2178 = vpop.f32.mrf.mxu0
      %2179 = vmatprep.mubr.f32.mxu0 0.0
      %2180 = vmatmul.mubr.f32.gmra.mxu0 %v709
      %v2181 = vpop.f32.mrf.mxu0
      %v2182 = vadd.f32 %v1957, %v2181
      %v2183 = vpop.f32.mrf.mxu0
      %2184 = vmatprep.mubr.f32.mxu0 0.0
      %2185 = vmatmul.mubr.f32.gmra.mxu0 %v711
      %v2186 = vpop.f32.mrf.mxu0
      %v2187 = vadd.f32 %v1962, %v2186
      %v2188 = vpop.f32.mrf.mxu0
      %2189 = vmatprep.mubr.f32.mxu0 0.0
      %2190 = vmatmul.mubr.f32.gmra.mxu0 %v714
      %v2191 = vpop.f32.mrf.mxu0
      %v2192 = vadd.f32 %v1967, %v2191
      %v2193 = vpop.f32.mrf.mxu0
      %2194 = vmatprep.mubr.f32.mxu0 0.0
      %2195 = vmatmul.mubr.f32.gmra.mxu0 %v716
      %v2196 = vpop.f32.mrf.mxu0
      %v2197 = vadd.f32 %v1972, %v2196
      %v2198 = vpop.f32.mrf.mxu0
      %2199 = vmatprep.mubr.f32.mxu0 0.0
      %2200 = vmatmul.mubr.f32.gmra.mxu0 %v719
      %v2201 = vpop.f32.mrf.mxu0
      %v2202 = vadd.f32 %v1977, %v2201
      %v2203 = vpop.f32.mrf.mxu0
      %2204 = vmatprep.mubr.f32.mxu0 0.0
      %2205 = vmatmul.mubr.f32.gmra.mxu0 %v721
      %v2206 = vpop.f32.mrf.mxu0
      %v2207 = vadd.f32 %v1982, %v2206
      %v2208 = vpop.f32.mrf.mxu0
      %2209 = vmatprep.mubr.f32.mxu0 0.0
      %2210 = vmatmul.mubr.f32.gmra.mxu0 %v724
      %v2211 = vpop.f32.mrf.mxu0
      %v2212 = vadd.f32 %v1987, %v2211
      %v2213 = vpop.f32.mrf.mxu0
      %2214 = vmatprep.mubr.f32.mxu0 0.0
      %2215 = vmatmul.mubr.f32.gmra.mxu0 %v726
      %v2216 = vpop.f32.mrf.mxu0
      %v2217 = vadd.f32 %v1992, %v2216
      %v2218 = vpop.f32.mrf.mxu0
      %2219 = vmatprep.mubr.f32.mxu0 0.0
      %2220 = vmatmul.mubr.f32.gmra.mxu0 %v729
      %v2221 = vpop.f32.mrf.mxu0
      %v2222 = vadd.f32 %v1997, %v2221
      %v2223 = vpop.f32.mrf.mxu0
      %2224 = vmatprep.mubr.f32.mxu0 0.0
      %2225 = vmatmul.mubr.f32.gmra.mxu0 %v731
      %v2226 = vpop.f32.mrf.mxu0
      %v2227 = vadd.f32 %v2002, %v2226
      %v2228 = vpop.f32.mrf.mxu0
      %2229 = vmatprep.mubr.f32.mxu0 0.0
      %2230 = vmatmul.mubr.f32.gmra.mxu0 %v734
      %v2231 = vpop.f32.mrf.mxu0
      %v2232 = vadd.f32 %v2007, %v2231
      %v2233 = vpop.f32.mrf.mxu0
      %2234 = vmatprep.mubr.f32.mxu0 0.0
      %2235 = vmatmul.mubr.f32.gmra.mxu0 %v736
      %v2236 = vpop.f32.mrf.mxu0
      %v2237 = vadd.f32 %v2012, %v2236
      %v2238 = vpop.f32.mrf.mxu0
      %2239 = vmatprep.mubr.f32.mxu0 0.0
      %2240 = vmatmul.mubr.f32.gmra.mxu0 %v739
      %v2241 = vpop.f32.mrf.mxu0
      %v2242 = vadd.f32 %v2017, %v2241
      %v2243 = vpop.f32.mrf.mxu0
      %2244 = vmatprep.mubr.f32.mxu0 0.0
      %2245 = vmatmul.mubr.f32.gmra.mxu0 %v741
      %v2246 = vpop.f32.mrf.mxu0
      %v2247 = vadd.f32 %v2022, %v2246
      %v2248 = vpop.f32.mrf.mxu0
      %2249 = vmatprep.mubr.f32.mxu0 0.0
      %2250 = vmatmul.mubr.f32.gmra.mxu0 %v744
      %v2251 = vpop.f32.mrf.mxu0
      %v2252 = vadd.f32 %v2027, %v2251
      %v2253 = vpop.f32.mrf.mxu0
      %2254 = vmatprep.mubr.f32.mxu0 0.0
      %2255 = vmatmul.mubr.f32.gmra.mxu0 %v746
      %v2256 = vpop.f32.mrf.mxu0
      %v2257 = vadd.f32 %v2032, %v2256
      %v2258 = vpop.f32.mrf.mxu0
      %2259 = vmatprep.mubr.f32.mxu0 0.0
      %2260 = vmatmul.mubr.f32.gmra.mxu0 %v749
      %v2261 = vpop.f32.mrf.mxu0
      %v2262 = vadd.f32 %v2037, %v2261
      %v2263 = vpop.f32.mrf.mxu0
      %2264 = vmatprep.mubr.f32.mxu0 0.0
      %2265 = vmatmul.mubr.f32.gmra.mxu0 %v751
      %v2266 = vpop.f32.mrf.mxu0
      %v2267 = vadd.f32 %v2042, %v2266
      %v2268 = vpop.f32.mrf.mxu0
      %2269 = vmatprep.mubr.f32.mxu0 0.0
      %2270 = vmatmul.mubr.f32.gmra.mxu0 %v754
      %v2271 = vpop.f32.mrf.mxu0
      %v2272 = vadd.f32 %v2047, %v2271
      %v2273 = vpop.f32.mrf.mxu0
      %2274 = vmatprep.mubr.f32.mxu0 0.0
      %2275 = vmatmul.mubr.f32.gmra.mxu0 %v756
      %v2276 = vpop.f32.mrf.mxu0
      %v2277 = vadd.f32 %v2052, %v2276
      %v2278 = vpop.f32.mrf.mxu0
      %2279 = vmatprep.mubr.f32.mxu0 0.0
      %2280 = vmatmul.mubr.f32.gmra.mxu0 %v847
      %v2281 = vpop.f32.mrf.mxu0
      %v2282 = vadd.f32 %v2057, %v2281
      %v2283 = vpop.f32.mrf.mxu0
      %2284 = vmatprep.mubr.f32.mxu0 0.0
      %2285 = vmatmul.mubr.f32.gmra.mxu0 %v849
      %v2286 = vpop.f32.mrf.mxu0
      %v2287 = vadd.f32 %v2062, %v2286
      %v2288 = vpop.f32.mrf.mxu0
      %2289 = vmatprep.mubr.f32.mxu0 0.0
      %2290 = vmatmul.mubr.f32.gmra.mxu0 %v681
      %v2291 = vpop.f32.mrf.mxu0
      %v2292 = vadd.f32 %v2067, %v2291
      %v2293 = vpop.f32.mrf.mxu0
      %2294 = vmatprep.mubr.f32.mxu0 0.0
      %2295 = vmatmul.mubr.f32.gmra.mxu0 %v681
      %v2296 = vpop.f32.mrf.mxu0
      %v2297 = vadd.f32 %v2072, %v2296
      %v2298 = vpop.f32.mrf.mxu0
      %2299 = vdwg.mxu0
      %v2300 = vadd.f32 %v1643, %v2142
      %v2301 = vadd.f32 %v1648, %v2147
      %v2302 = vadd.f32 %v1653, %v2152
      %v2303 = vadd.f32 %v1658, %v2157
      %v2304 = vadd.f32 %v1663, %v2162
      %v2305 = vadd.f32 %v1668, %v2167
      %v2306 = vadd.f32 %v1673, %v2172
      %v2307 = vadd.f32 %v1678, %v2177
      %v2308 = vadd.f32 %v1683, %v2182
      %v2309 = vadd.f32 %v1688, %v2187
      %v2310 = vadd.f32 %v1693, %v2192
      %v2311 = vadd.f32 %v1698, %v2197
      %v2312 = vadd.f32 %v1703, %v2202
      %v2313 = vadd.f32 %v1708, %v2207
      %v2314 = vadd.f32 %v1713, %v2212
      %v2315 = vadd.f32 %v1718, %v2217
      %v2316 = vadd.f32 %v1723, %v2222
      %v2317 = vadd.f32 %v1728, %v2227
      %v2318 = vadd.f32 %v1733, %v2232
      %v2319 = vadd.f32 %v1738, %v2237
      %v2320 = vadd.f32 %v1743, %v2242
      %v2321 = vadd.f32 %v1748, %v2247
      %v2322 = vadd.f32 %v1753, %v2252
      %v2323 = vadd.f32 %v1758, %v2257
      %v2324 = vadd.f32 %v1763, %v2262
      %v2325 = vadd.f32 %v1768, %v2267
      %v2326 = vadd.f32 %v1773, %v2272
      %v2327 = vadd.f32 %v1778, %v2277
      %v2328 = vadd.f32 %v1783, %v2282
      %v2329 = vadd.f32 %v1788, %v2287
      %v2330 = vadd.f32 %v1793, %v2292
      %v2331 = vadd.f32 %v1798, %v2297
      %2332 = vst [vmem:[%s231] sm:$0xff] %v2300
      %2333 = vst [vmem:[%s231 + $0x8] sm:$0xff] %v2301
      %2334 = vst [vmem:[%s231 + $0x10] sm:$0xff] %v2302
      %2335 = vst [vmem:[%s231 + $0x18] sm:$0xff] %v2303
      %2336 = vst [vmem:[%s231 + $0x20] sm:$0xff] %v2304
      %2337 = vst [vmem:[%s231 + $0x28] sm:$0xff] %v2305
      %2338 = vst [vmem:[%s231 + $0x30] sm:$0xff] %v2306
      %2339 = vst [vmem:[%s231 + $0x38] sm:$0xff] %v2307
      %2340 = vst [vmem:[%s231 + $0x40] sm:$0xff] %v2308
      %2341 = vst [vmem:[%s231 + $0x48] sm:$0xff] %v2309
      %2342 = vst [vmem:[%s231 + $0x50] sm:$0xff] %v2310
      %2343 = vst [vmem:[%s231 + $0x58] sm:$0xff] %v2311
      %2344 = vst [vmem:[%s231 + $0x60] sm:$0xff] %v2312
      %2345 = vst [vmem:[%s231 + $0x68] sm:$0xff] %v2313
      %2346 = vst [vmem:[%s231 + $0x70] sm:$0xff] %v2314
      %2347 = vst [vmem:[%s231 + $0x78] sm:$0xff] %v2315
      %2348 = vst [vmem:[%s231 + $0x80] sm:$0xff] %v2316
      %2349 = vst [vmem:[%s231 + $0x88] sm:$0xff] %v2317
      %2350 = vst [vmem:[%s231 + $0x90] sm:$0xff] %v2318
      %2351 = vst [vmem:[%s231 + $0x98] sm:$0xff] %v2319
      %2352 = vst [vmem:[%s231 + $0xa0] sm:$0xff] %v2320
      %2353 = vst [vmem:[%s231 + $0xa8] sm:$0xff] %v2321
      %2354 = vst [vmem:[%s231 + $0xb0] sm:$0xff] %v2322
      %2355 = vst [vmem:[%s231 + $0xb8] sm:$0xff] %v2323
      %2356 = vst [vmem:[%s231 + $0xc0] sm:$0xff] %v2324
      %2357 = vst [vmem:[%s231 + $0xc8] sm:$0xff] %v2325
      %2358 = vst [vmem:[%s231 + $0xd0] sm:$0xff] %v2326
      %2359 = vst [vmem:[%s231 + $0xd8] sm:$0xff] %v2327
      %2360 = vst [vmem:[%s231 + $0xe0] sm:$0xff] %v2328
      %2361 = vst [vmem:[%s231 + $0xe8] sm:$0xff] %v2329
      %2362 = vst [vmem:[%s231 + $0xf0] sm:$0xff] %v2330
      %2363 = vst [vmem:[%s231 + $0xf8] sm:$0xff] %v2331
      %v2364 = vadd.f32 %v2300, %v2301
      %v2365 = vadd.f32 %v2364, %v2302
      %v2366 = vadd.f32 %v2365, %v2303
      %v2367 = vadd.f32 %v2366, %v2304
      %v2368 = vadd.f32 %v2367, %v2305
      %v2369 = vadd.f32 %v2368, %v2306
      %v2370 = vadd.f32 %v2369, %v2307
      %v2371 = vadd.f32 %v2370, %v2308
      %v2372 = vadd.f32 %v2371, %v2309
      %v2373 = vadd.f32 %v2372, %v2310
      %v2374 = vadd.f32 %v2373, %v2311
      %v2375 = vadd.f32 %v2374, %v2312
      %v2376 = vadd.f32 %v2375, %v2313
      %v2377 = vadd.f32 %v2376, %v2314
      %v2378 = vadd.f32 %v2377, %v2315
      %v2379 = vadd.f32 %v2378, %v2316
      %v2380 = vadd.f32 %v2379, %v2317
      %v2381 = vadd.f32 %v2380, %v2318
      %v2382 = vadd.f32 %v2381, %v2319
      %v2383 = vadd.f32 %v2382, %v2320
      %v2384 = vadd.f32 %v2383, %v2321
      %v2385 = vadd.f32 %v2384, %v2322
      %v2386 = vadd.f32 %v2385, %v2323
      %v2387 = vadd.f32 %v2386, %v2324
      %v2388 = vadd.f32 %v2387, %v2325
      %v2389 = vadd.f32 %v2388, %v2326
      %v2390 = vadd.f32 %v2389, %v2327
      %v2391 = vadd.f32 %v2390, %v2328
      %v2392 = vadd.f32 %v2391, %v2329
      %v2393 = vadd.f32 %v2392, %v2330
      %v2394 = vadd.f32 %v2393, %v2331
      %v2395 = vrot.slane %v2394, 4
      %v2396 = vadd.f32 %v2394, %v2395
      %v2397 = vrot.slane %v2396, 2
      %v2398 = vadd.f32 %v2396, %v2397
      %v2399 = vrot.slane %v2398, 1
      %v2400 = vadd.f32 %v2398, %v2399
      %v2401 = vmul.f32 %v2300, %v2300
      %v2402 = vmul.f32 %v2301, %v2301
      %v2403 = vmul.f32 %v2302, %v2302
      %v2404 = vmul.f32 %v2303, %v2303
      %v2405 = vmul.f32 %v2304, %v2304
      %v2406 = vmul.f32 %v2305, %v2305
      %v2407 = vmul.f32 %v2306, %v2306
      %v2408 = vmul.f32 %v2307, %v2307
      %v2409 = vmul.f32 %v2308, %v2308
      %v2410 = vmul.f32 %v2309, %v2309
      %v2411 = vmul.f32 %v2310, %v2310
      %v2412 = vmul.f32 %v2311, %v2311
      %v2413 = vmul.f32 %v2312, %v2312
      %v2414 = vmul.f32 %v2313, %v2313
      %v2415 = vmul.f32 %v2314, %v2314
      %v2416 = vmul.f32 %v2315, %v2315
      %v2417 = vmul.f32 %v2316, %v2316
      %v2418 = vmul.f32 %v2317, %v2317
      %v2419 = vmul.f32 %v2318, %v2318
      %v2420 = vmul.f32 %v2319, %v2319
      %v2421 = vmul.f32 %v2320, %v2320
      %v2422 = vmul.f32 %v2321, %v2321
      %v2423 = vmul.f32 %v2322, %v2322
      %v2424 = vmul.f32 %v2323, %v2323
      %v2425 = vmul.f32 %v2324, %v2324
      %v2426 = vmul.f32 %v2325, %v2325
      %v2427 = vmul.f32 %v2326, %v2326
      %v2428 = vmul.f32 %v2327, %v2327
      %v2429 = vmul.f32 %v2328, %v2328
      %v2430 = vmul.f32 %v2329, %v2329
      %v2431 = vmul.f32 %v2330, %v2330
      %v2432 = vmul.f32 %v2331, %v2331
      %v2433 = vadd.f32 %v2401, %v2402
      %v2434 = vadd.f32 %v2433, %v2403
      %v2435 = vadd.f32 %v2434, %v2404
      %v2436 = vadd.f32 %v2435, %v2405
      %v2437 = vadd.f32 %v2436, %v2406
      %v2438 = vadd.f32 %v2437, %v2407
      %v2439 = vadd.f32 %v2438, %v2408
      %v2440 = vadd.f32 %v2439, %v2409
      %v2441 = vadd.f32 %v2440, %v2410
      %v2442 = vadd.f32 %v2441, %v2411
      %v2443 = vadd.f32 %v2442, %v2412
      %v2444 = vadd.f32 %v2443, %v2413
      %v2445 = vadd.f32 %v2444, %v2414
      %v2446 = vadd.f32 %v2445, %v2415
      %v2447 = vadd.f32 %v2446, %v2416
      %v2448 = vadd.f32 %v2447, %v2417
      %v2449 = vadd.f32 %v2448, %v2418
      %v2450 = vadd.f32 %v2449, %v2419
      %v2451 = vadd.f32 %v2450, %v2420
      %v2452 = vadd.f32 %v2451, %v2421
      %v2453 = vadd.f32 %v2452, %v2422
      %v2454 = vadd.f32 %v2453, %v2423
      %v2455 = vadd.f32 %v2454, %v2424
      %v2456 = vadd.f32 %v2455, %v2425
      %v2457 = vadd.f32 %v2456, %v2426
      %v2458 = vadd.f32 %v2457, %v2427
      %v2459 = vadd.f32 %v2458, %v2428
      %v2460 = vadd.f32 %v2459, %v2429
      %v2461 = vadd.f32 %v2460, %v2430
      %v2462 = vadd.f32 %v2461, %v2431
      %v2463 = vadd.f32 %v2462, %v2432
      %v2464 = vrot.slane %v2463, 4
      %v2465 = vadd.f32 %v2463, %v2464
      %v2466 = vrot.slane %v2465, 2
      %v2467 = vadd.f32 %v2465, %v2466
      %v2468 = vrot.slane %v2467, 1
      %v2469 = vadd.f32 %v2467, %v2468
      %v2470 = vsel %vm410, %v2400, %v2469
      %2471 = vst [vmem:[%s235] sm:$0x3] %v2470
      %p2472 = scmp.lt.s32.totalorder %s17, 1
      %s2473 = scalar_select %p2472, %s17, 1
      %s2474 = smul.addr %s2473, 32
      %s2475 = smul.addr %s2474, 8
      %s2476 = scalar_lea.vmem %s4, %s2475
      %p2477 = scmp.lt.s32.totalorder %s17, 1
      %s2478 = scalar_select %p2477, %s17, 1
      %s2479 = smul.addr %s2478, 2
      %s2480 = scalar_lea.vmem %s5, %s2479
      // Predicated region
      $region37: #{bottleneck_resblock.5} parent=35 // pred_check
        %p2481 = pneg %p124
      $region38: #{bottleneck_resblock.5} parent=35 // pred_check_branch
        %2483 = sbr.rel (%p2481) target = $region40
      $region39: #{bottleneck_resblock.5} parent=35 // pred_region
        _
      $region40: #{bottleneck_resblock.5} parent=35 // pred_fallthru
        _
      // Predicated region
      $region41: #{bottleneck_resblock.5} parent=35 // pred_check
        %p2484 = pneg %p150
      $region42: #{bottleneck_resblock.5} parent=35 // pred_check_branch
        %2486 = sbr.rel (%p2484) target = $region44
      $region43: #{bottleneck_resblock.5} parent=35 // pred_region
        _
      $region44: #{bottleneck_resblock.5} parent=35 // pred_fallthru
        _
    $region36: #{bottleneck_resblock.5} parent=5 // pred_fallthru
      _
    %p2487 = scmp.le.s32.totalorder 2, %s12
    // Predicated region
    $region45: #{bottleneck_resblock.5} parent=5 // pred_check
      %p2488 = pneg %p2487
    $region46: #{bottleneck_resblock.5} parent=5 // pred_check_branch
      %2490 = sbr.rel (%p2488) target = $region48
    $region47: #{bottleneck_resblock.5} parent=5 // pred_region
      %s2491 = ssub.s32 %s12, 2
      // Predicated region
      $region49: #{bottleneck_resblock.5} parent=47 // pred_check
        %p2492 = pneg %p130
      $region50: #{bottleneck_resblock.5} parent=47 // pred_check_branch
        %2494 = sbr.rel (%p2492) target = $region52
      $region51: #{bottleneck_resblock.5} parent=47 // pred_region
        %p2495 = scmp.lt.s32.totalorder %s18, 1
        %s2496 = scalar_select %p2495, %s18, 1
        %s2497 = smul.addr %s2496, 32
        %s2498 = smul.addr %s2497, 8
        %s2499 = scalar_lea.vmem %s4, %s2498
      $region52: #{bottleneck_resblock.5} parent=47 // pred_fallthru
        _
      // Predicated region
      $region53: #{bottleneck_resblock.5} parent=47 // pred_check
        %p2500 = pneg %p156
      $region54: #{bottleneck_resblock.5} parent=47 // pred_check_branch
        %2502 = sbr.rel (%p2500) target = $region56
      $region55: #{bottleneck_resblock.5} parent=47 // pred_region
        %p2503 = scmp.lt.s32.totalorder %s18, 1
        %s2504 = scalar_select %p2503, %s18, 1
        %s2505 = smul.addr %s2504, 2
        %s2506 = scalar_lea.vmem %s5, %s2505
      $region56: #{bottleneck_resblock.5} parent=47 // pred_fallthru
        _
    $region48: #{bottleneck_resblock.5} parent=5 // pred_fallthru
      _
  $region6: #{bottleneck_resblock.5} parent=0 // loop_footer
    %s16 = sadd.s32 1, %s12
  $region7: #{bottleneck_resblock.5} parent=0 // loop_footer_branch
    %11 = sbr.rel target = $region3
  $region8: #{bottleneck_resblock.5} parent=0 // loop_exit
    _

</llo_original>
